<compile_context>
chip_gen: v7x
topology: tpu7x:2x2x1
jax: 0.10.0
libtpu: 0.0.40
codegen_flags: <defaults>
</compile_context>

<pallas_src>
import functools

import jax
import jax.numpy as jnp
from jax.experimental import pallas as pl
from jax.experimental.pallas import tpu as pltpu


# ---------------------------------------------------------------------------
# Fused whole-network kernel (no grid; everything VMEM resident).
#
# Lane layouts used throughout:
#   * "dir-cat"  (2H lanes): [ fwd (0:H) | bwd (H:2H) ]        -- h, c, hseq
#   * "gate-cat" (8H lanes): [ i_f i_b f_f f_b g_f g_b o_f o_b ] (H each)
# ---------------------------------------------------------------------------
def _lstm_net_kernel(ids_ref, len_ref, emb_ref, proj_ref, whh_ref, out_ref,
                     gx_ref, hseq_ref, *, T, B, E, H, V):
    H2, H8 = 2 * H, 8 * H
    TB = T * B
    unroll = True if T <= 16 else 4          # partial unroll if T ever grows

    lengths = len_ref[...]                                     # (B, 1) int32

    # ---- Hoisted loop-invariant lane masks (iota/compare emitted once, not
    # ---- re-materialized inside the unrolled steps). -----------------------
    lane2h = jax.lax.broadcasted_iota(jnp.int32, (B, H2), 1)
    is_fwd_half = lane2h < H                                   # (B,2H) [fwd|bwd]
    # (B,8H) mask matching the gate-cat layout (fwd = first H of each 2H pair).
    is_fwd_gate = jnp.concatenate([lane2h] * 4, axis=1) < H    # (B,8H)

    # ---- Static slices of the packed parameter arrays (free). --------------
    w0 = proj_ref[0:E, :]                                      # (E, 8H)
    w1 = proj_ref[E:E + H2, :]                                 # (2H, 8H)
    tail = proj_ref[E + H2:E + H2 + 8, :]                      # (8, 8H)
    b0 = tail[0:1, :]                                          # (1, 8H)
    b1 = tail[1:2, :]                                          # (1, 8H)
    fc_w = tail[2:3, 0:H2]                                     # (1, 2H)
    fc_b = tail[2:3, H2:H2 + 1]                                # (1, 1)

    # ---- Embedding lookup inside the kernel (one-hot matmul; V*E ~ 3 KB). --
    vocab_iota = jax.lax.broadcasted_iota(jnp.int32, (TB, V), 1)
    onehot = jnp.where(vocab_iota == ids_ref[...], 1.0, 0.0)   # (TB, V) f32
    x_flat = jnp.dot(onehot, emb_ref[...],
                     preferred_element_type=jnp.float32)       # (TB, E)

    # ---- Layer 0: input projection for BOTH directions in one matmul. ------
    gx_ref[...] = jnp.dot(x_flat, w0, preferred_element_type=jnp.float32) + b0

    zeros2 = jnp.zeros((B, H2), jnp.float32)

    def make_step(whh_row0, write_hseq):
        # One interleaved step: forward direction at t = i, backward at T-1-i.
        def step(i, carry):
            h_cat, c_cat = carry                               # (B, 2H) each
            t_f = i
            t_b = T - 1 - i
            off_f = pl.multiple_of(t_f * B, B)
            off_b = pl.multiple_of(t_b * B, B)
            gx_f = gx_ref[pl.ds(off_f, B), :]                  # (B, 8H)
            gx_b = gx_ref[pl.ds(off_b, B), :]                  # (B, 8H)
            gx_t = jnp.where(is_fwd_gate, gx_f, gx_b)          # (B, 8H)
            # Single fused recurrent matmul for both directions (block-diag rhs);
            # keep the gx + dot accumulation form (MRB-friendly on v7x).
            whh = whh_ref[whh_row0:whh_row0 + H2, :]           # (2H, 8H)
            gates = gx_t + jnp.dot(h_cat, whh,
                                   preferred_element_type=jnp.float32)
            sig = jax.nn.sigmoid(gates)                        # one full-width EUP pass
            i_g = sig[:, 0:H2]
            f_g = sig[:, H2:2 * H2]
            g_g = jnp.tanh(gates[:, 2 * H2:3 * H2])            # tanh on g slice only
            o_g = sig[:, 3 * H2:4 * H2]
            c_new = f_g * c_cat + i_g * g_g
            h_new = o_g * jnp.tanh(c_new)
            # Packed-sequence masks: fwd freezes once t_f >= len[b]; bwd stays
            # at its zero initial state until t_b < len[b].
            t_sel = jnp.where(is_fwd_half, t_f, t_b)           # (B, 2H) int32
            mask = t_sel < lengths                             # (B, 2H) bool
            h_cat = jnp.where(mask, h_new, h_cat)
            c_cat = jnp.where(mask, c_new, c_cat)
            if write_hseq:
                hseq_ref[pl.ds(off_f, B), 0:H] = h_cat[:, 0:H]
                hseq_ref[pl.ds(off_b, B), H:H2] = h_cat[:, H:H2]
            return h_cat, c_cat
        return step

    jax.lax.fori_loop(0, T, make_step(0, True), (zeros2, zeros2), unroll=unroll)

    # ---- Layer 1: input projection from the [fwd|bwd] hidden sequence ------
    # (one (T*B, 2H) x (2H, 8H) matmul covers both directions).
    gx_ref[...] = jnp.dot(hseq_ref[...], w1,
                          preferred_element_type=jnp.float32) + b1

    h1, _ = jax.lax.fori_loop(0, T, make_step(H2, False), (zeros2, zeros2),
                              unroll=unroll)

    # ---- Fused fc1∘fc2 head (VPU mul + lane reduce). ------------------------
    out_ref[...] = jnp.sum(h1 * fc_w, axis=1, keepdims=True) + fc_b


def make_lstm_net_call(T, B, E, H, V):
    kernel = functools.partial(_lstm_net_kernel, T=T, B=B, E=E, H=H, V=V)
    vmem = pl.BlockSpec(memory_space=pltpu.MemorySpace.VMEM)
    return pl.pallas_call(
        kernel,
        out_shape=jax.ShapeDtypeStruct((B, 1), jnp.float32),
        in_specs=[vmem] * 5,
        out_specs=vmem,
        scratch_shapes=[
            pltpu.VMEM((T * B, 8 * H), jnp.float32),   # gate pre-acts, both dirs
            pltpu.VMEM((T * B, 2 * H), jnp.float32),   # layer-0 h seq [fwd|bwd]
        ],
    )


# ---------------------------------------------------------------------------
# One-time parameter packing: 17 tensors -> 2 contiguous arrays (+ embedding).
# ---------------------------------------------------------------------------
def pack_params(params, *, hidden_dim, n_layers):
    assert n_layers == 2, "fused kernel is specialized to 2 bidirectional layers"
    H = hidden_dim
    H2, H8 = 2 * H, 8 * H
    E = params["embedding"].shape[1]
    assert E % 8 == 0 and H2 % 8 == 0, "feature dims must be sublane-aligned"

    def interleave(wf, wb):
        # (rows, 4H) x 2 -> (rows, 8H) in [i_f i_b f_f f_b g_f g_b o_f o_b] order
        # (PyTorch gate order i|f|g|o preserved per direction).
        cols = []
        for g in range(4):
            cols.append(wf[:, g * H:(g + 1) * H])
            cols.append(wb[:, g * H:(g + 1) * H])
        return jnp.concatenate(cols, axis=1)

    p0f, p0b = params["lstm"][0]["fwd"], params["lstm"][0]["bwd"]
    p1f, p1b = params["lstm"][1]["fwd"], params["lstm"][1]["bwd"]

    w0_cat = interleave(p0f["wih_t"], p0b["wih_t"])            # (E, 8H)
    w1_cat = interleave(p1f["wih_t"], p1b["wih_t"])            # (2H, 8H)
    b0_cat = interleave(p0f["b"], p0b["b"])                    # (1, 8H)
    b1_cat = interleave(p1f["b"], p1b["b"])                    # (1, 8H)

    # Block-diagonal recurrent weights: rows 0:H act on fwd h, rows H:2H on bwd.
    zH = jnp.zeros((H, 4 * H), jnp.float32)
    whh0 = jnp.concatenate([interleave(p0f["whh_t"], zH),
                            interleave(zH, p0b["whh_t"])], axis=0)   # (2H, 8H)
    whh1 = jnp.concatenate([interleave(p1f["whh_t"], zH),
                            interleave(zH, p1b["whh_t"])], axis=0)   # (2H, 8H)
    whh_pack = jnp.concatenate([whh0, whh1], axis=0)           # (4H, 8H)

    # fc1 and fc2 fused algebraically (no nonlinearity between them in the
    # reference nn.Module; dropout == identity at eval):
    #   out = hidden @ (W1^T W2^T) + (b1 @ W2^T + b2)
    fc_w = params["fc1_w_t"] @ params["fc2_w_t"]               # (2H, 1)
    fc_b = params["fc1_b"] @ params["fc2_w_t"] + params["fc2_b"]   # (1, 1)
    head = jnp.zeros((1, H8), jnp.float32)
    head = head.at[0, :H2].set(fc_w[:, 0])
    head = head.at[0, H2].set(fc_b[0, 0])

    tail = jnp.concatenate([b0_cat, b1_cat, head,
                            jnp.zeros((5, H8), jnp.float32)], axis=0)  # (8, 8H)
    proj_pack = jnp.concatenate([w0_cat, w1_cat, tail], axis=0)  # (E+2H+8, 8H)

    return {"embedding": params["embedding"].astype(jnp.float32),
            "proj_pack": proj_pack, "whh_pack": whh_pack, "E": E, "H": H}


def lstm_net_forward(text, text_lengths, packed):
    T, B = text.shape
    call = make_lstm_net_call(T, B, packed["E"], packed["H"],
                              packed["embedding"].shape[0])
    ids = text.reshape(T * B, 1).astype(jnp.int32)
    lengths = text_lengths.astype(jnp.int32).reshape(B, 1)
    return call(ids, lengths, packed["embedding"],
                packed["proj_pack"], packed["whh_pack"])


# ---------------------------------------------------------------------------
# Deterministic parameter init (synthetic; matches nn.Module shapes).
# ---------------------------------------------------------------------------
def init_params(key, vocab_size, embedding_dim, hidden_dim, n_layers, pad_idx):
    H = hidden_dim
    n_keys = 1 + n_layers * 2 * 4 + 4
    keys = iter(jax.random.split(key, n_keys))

    def rnd(shape, scale=0.1):
        return (scale * jax.random.normal(next(keys), shape)).astype(jnp.float32)

    emb = rnd((vocab_size, embedding_dim))
    emb = emb.at[pad_idx].set(0.0)                             # padding_idx row = 0

    lstm_params = []
    for layer in range(n_layers):
        in_dim = embedding_dim if layer == 0 else 2 * H
        layer_p = {}
        for direction in ("fwd", "bwd"):
            w_ih = rnd((4 * H, in_dim))     # PyTorch weight_ih_l{k}[_reverse]
            w_hh = rnd((4 * H, H))          # PyTorch weight_hh_l{k}[_reverse]
            b_ih = rnd((4 * H,))
            b_hh = rnd((4 * H,))
            layer_p[direction] = {
                "wih_t": jnp.transpose(w_ih),                  # (in_dim, 4H)
                "whh_t": jnp.transpose(w_hh),                  # (H, 4H)
                "b": (b_ih + b_hh).reshape(1, 4 * H),
            }
        lstm_params.append(layer_p)

    fc1_w = rnd((H, 2 * H))                 # nn.Linear(2H, H)
    fc1_b = rnd((H,))
    fc2_w = rnd((1, H))                     # nn.Linear(H, 1)
    fc2_b = rnd((1,))

    return {
        "embedding": emb,
        "lstm": lstm_params,
        "fc1_w_t": jnp.transpose(fc1_w),    # (2H, H)
        "fc1_b": fc1_b.reshape(1, H),
        "fc2_w_t": jnp.transpose(fc2_w),    # (H, 1)
        "fc2_b": fc2_b.reshape(1, 1),
    }


# ---------------------------------------------------------------------------
# Pure-JAX reference (same packed-sequence semantics) for correctness check.
# ---------------------------------------------------------------------------
def lstm_net_reference(text, text_lengths, params, *, hidden_dim):
    T, B = text.shape
    H = hidden_dim
    x = jnp.take(params["embedding"], text, axis=0)            # (T, B, E)
    lengths = text_lengths.astype(jnp.int32)

    def run_dir(x_seq, p, reverse):
        h = jnp.zeros((B, H), jnp.float32)
        c = jnp.zeros((B, H), jnp.float32)
        hs = [None] * T
        order = range(T - 1, -1, -1) if reverse else range(T)
        for t in order:
            gates = x_seq[t] @ p["wih_t"] + h @ p["whh_t"] + p["b"]
            i_g = jax.nn.sigmoid(gates[:, 0:H])
            f_g = jax.nn.sigmoid(gates[:, H:2 * H])
            g_g = jnp.tanh(gates[:, 2 * H:3 * H])
            o_g = jax.nn.sigmoid(gates[:, 3 * H:4 * H])
            c_new = f_g * c + i_g * g_g
            h_new = o_g * jnp.tanh(c_new)
            m = (t < lengths)[:, None]
            h = jnp.where(m, h_new, h)
            c = jnp.where(m, c_new, c)
            hs[t] = h
        return jnp.stack(hs, axis=0), h

    h0f_seq, _ = run_dir(x, params["lstm"][0]["fwd"], reverse=False)
    h0b_seq, _ = run_dir(x, params["lstm"][0]["bwd"], reverse=True)
    x1 = jnp.concatenate([h0f_seq, h0b_seq], axis=-1)          # (T, B, 2H)
    _, h1f = run_dir(x1, params["lstm"][1]["fwd"], reverse=False)
    _, h1b = run_dir(x1, params["lstm"][1]["bwd"], reverse=True)
    hidden = jnp.concatenate([h1f, h1b], axis=1)               # (B, 2H)
    out = hidden @ params["fc1_w_t"] + params["fc1_b"]
    return out @ params["fc2_w_t"] + params["fc2_b"]


if __name__ == "__main__":
    vocab_size = 50
    embedding_dim = 16
    hidden_dim = 32
    n_layers = 2
    pad_idx = 0
    T, B = 8, 8

    key = jax.random.PRNGKey(0)
    pkey, tkey = jax.random.split(key)
    params = init_params(pkey, vocab_size, embedding_dim, hidden_dim,
                         n_layers, pad_idx)
    packed = pack_params(params, hidden_dim=hidden_dim, n_layers=n_layers)

    # Padded token batch (seq-first) with descending lengths (pack_padded_sequence
    # default enforce_sorted=True).
    text_lengths = jnp.array([8, 7, 6, 5, 4, 4, 3, 2], dtype=jnp.int32)     # (B,)
    tokens = jax.random.randint(tkey, (T, B), 1, vocab_size, dtype=jnp.int32)
    time_idx = jnp.arange(T, dtype=jnp.int32)[:, None]                      # (T, 1)
    text = jnp.where(time_idx < text_lengths[None, :], tokens, pad_idx)     # (T, B)

    out = lstm_net_forward(text, text_lengths, packed)
    out = jax.block_until_ready(out)
    assert out.shape == (B, 1) and out.dtype == jnp.float32
    assert bool(jnp.all(jnp.isfinite(out)))

    ref = lstm_net_reference(text, text_lengths, params, hidden_dim=hidden_dim)
    max_err = float(jnp.max(jnp.abs(out - ref)))
    assert bool(jnp.allclose(out, ref, rtol=5e-2, atol=5e-3)), (
        f"kernel/reference mismatch: max abs err {max_err}")
    print("KERNEL_OK")
</pallas_src>

<mosaic_0001>
module attributes {stable_mosaic.version = 11 : i64} {
  func.func @_lstm_net_kernel(%arg0: memref<64x1xi32, #tpu.memory_space<vmem>>, %arg1: memref<8x1xi32, #tpu.memory_space<vmem>>, %arg2: memref<50x16xf32, #tpu.memory_space<vmem>>, %arg3: memref<88x256xf32, #tpu.memory_space<vmem>>, %arg4: memref<128x256xf32, #tpu.memory_space<vmem>>, %arg5: memref<8x1xf32, #tpu.memory_space<vmem>>, %arg6: memref<64x256xf32, #tpu.memory_space<vmem>>, %arg7: memref<64x64xf32, #tpu.memory_space<vmem>>) attributes {dimension_semantics = [], scalar_prefetch = 0 : i64, scratch_operands = 2 : i64, tpu.core_type = #tpu.core_type<tc>} {
    %c0 = arith.constant 0 : index
    %c0_0 = arith.constant 0 : index
    %0 = vector.load %arg1[%c0, %c0_0] : memref<8x1xi32, #tpu.memory_space<vmem>>, vector<8x1xi32>
    %1 = tpu.iota {dimensions = array<i32: 1>} : vector<8x64xi32>
    %c32_i32 = arith.constant 32 : i32
    %2 = vector.broadcast %c32_i32 : i32 to vector<8x64xi32>
    %3 = arith.cmpi slt, %1, %2 : vector<8x64xi32>
    %4 = tpu.concatenate %1, %1, %1, %1 in 1 : vector<8x64xi32>, vector<8x64xi32>, vector<8x64xi32>, vector<8x64xi32> -> vector<8x256xi32>
    %c32_i32_1 = arith.constant 32 : i32
    %5 = vector.broadcast %c32_i32_1 : i32 to vector<8x256xi32>
    %6 = arith.cmpi slt, %4, %5 : vector<8x256xi32>
    %c0_2 = arith.constant 0 : index
    %c0_3 = arith.constant 0 : index
    %7 = vector.load %arg3[%c0_2, %c0_3] : memref<88x256xf32, #tpu.memory_space<vmem>>, vector<16x256xf32>
    %c16 = arith.constant 16 : index
    %c0_4 = arith.constant 0 : index
    %8 = vector.load %arg3[%c16, %c0_4] : memref<88x256xf32, #tpu.memory_space<vmem>>, vector<64x256xf32>
    %c80 = arith.constant 80 : index
    %c0_5 = arith.constant 0 : index
    %9 = vector.load %arg3[%c80, %c0_5] : memref<88x256xf32, #tpu.memory_space<vmem>>, vector<8x256xf32>
    %10 = vector.extract_strided_slice %9 {offsets = [0, 0], sizes = [1, 256], strides = [1, 1]} : vector<8x256xf32> to vector<1x256xf32>
    %11 = vector.extract_strided_slice %9 {offsets = [1, 0], sizes = [1, 256], strides = [1, 1]} : vector<8x256xf32> to vector<1x256xf32>
    %12 = vector.extract_strided_slice %9 {offsets = [2, 0], sizes = [1, 64], strides = [1, 1]} : vector<8x256xf32> to vector<1x64xf32>
    %13 = vector.extract_strided_slice %9 {offsets = [2, 64], sizes = [1, 1], strides = [1, 1]} : vector<8x256xf32> to vector<1x1xf32>
    %14 = tpu.iota {dimensions = array<i32: 1>} : vector<64x50xi32>
    %c0_6 = arith.constant 0 : index
    %c0_7 = arith.constant 0 : index
    %15 = vector.load %arg0[%c0_6, %c0_7] : memref<64x1xi32, #tpu.memory_space<vmem>>, vector<64x1xi32>
    %16 = vector.broadcast %15 : vector<64x1xi32> to vector<64x50xi32>
    %17 = arith.cmpi eq, %14, %16 : vector<64x50xi32>
    %cst = arith.constant 1.000000e+00 : f32
    %cst_8 = arith.constant 0.000000e+00 : f32
    %18 = vector.broadcast %cst : f32 to vector<64x50xf32>
    %19 = vector.broadcast %cst_8 : f32 to vector<64x50xf32>
    %20 = arith.select %17, %18, %19 : vector<64x50xi1>, vector<64x50xf32>
    %c0_9 = arith.constant 0 : index
    %c0_10 = arith.constant 0 : index
    %21 = vector.load %arg2[%c0_9, %c0_10] : memref<50x16xf32, #tpu.memory_space<vmem>>, vector<50x16xf32>
    %cst_11 = arith.constant dense<0.000000e+00> : vector<64x16xf32>
    %22 = tpu.matmul %20, %21, %cst_11 {dimension_numbers = #tpu.dot_dimension_numbers<[1], [0], [0], [1], [0, 0, 1, 1], [], []>} : vector<64x50xf32>, vector<50x16xf32>, vector<64x16xf32> -> vector<64x16xf32>
    %cst_12 = arith.constant dense<0.000000e+00> : vector<64x256xf32>
    %23 = tpu.matmul %22, %7, %cst_12 {dimension_numbers = #tpu.dot_dimension_numbers<[1], [0], [0], [1], [0, 0, 1, 1], [], []>} : vector<64x16xf32>, vector<16x256xf32>, vector<64x256xf32> -> vector<64x256xf32>
    %24 = vector.broadcast %10 : vector<1x256xf32> to vector<64x256xf32>
    %25 = arith.addf %23, %24 : vector<64x256xf32>
    %c0_13 = arith.constant 0 : index
    %c0_14 = arith.constant 0 : index
    %26 = vector.load %arg6[%c0_13, %c0_14] : memref<64x256xf32, #tpu.memory_space<vmem>>, vector<64x256xf32>
    tpu.vector_store %arg6[%c0_13, %c0_14], %25 {strides = array<i32>} : memref<64x256xf32, #tpu.memory_space<vmem>>, vector<64x256xf32>,
    %cst_15 = arith.constant 0.000000e+00 : f32
    %27 = vector.broadcast %cst_15 : f32 to vector<8x64xf32>
    %c0_i32 = arith.constant 0 : i32
    %c7_i32 = arith.constant 7 : i32
    %28 = arith.subi %c7_i32, %c0_i32 : i32
    %c8_i32 = arith.constant 8 : i32
    %29 = arith.muli %c0_i32, %c8_i32 : i32
    %30 = tpu.assume_multiple %29, 8 : i32
    %c8_i32_16 = arith.constant 8 : i32
    %31 = arith.muli %28, %c8_i32_16 : i32
    %32 = tpu.assume_multiple %31, 8 : i32
    %33 = arith.index_cast %30 : i32 to index
    %c0_17 = arith.constant 0 : index
    %34 = vector.load %arg6[%33, %c0_17] : memref<64x256xf32, #tpu.memory_space<vmem>>, vector<8x256xf32>
    %35 = arith.index_cast %32 : i32 to index
    %c0_18 = arith.constant 0 : index
    %36 = vector.load %arg6[%35, %c0_18] : memref<64x256xf32, #tpu.memory_space<vmem>>, vector<8x256xf32>
    %37 = arith.select %6, %34, %36 : vector<8x256xi1>, vector<8x256xf32>
    %c0_19 = arith.constant 0 : index
    %c0_20 = arith.constant 0 : index
    %38 = vector.load %arg4[%c0_19, %c0_20] : memref<128x256xf32, #tpu.memory_space<vmem>>, vector<64x256xf32>
    %cst_21 = arith.constant dense<0.000000e+00> : vector<8x256xf32>
    %39 = tpu.matmul %27, %38, %cst_21 {dimension_numbers = #tpu.dot_dimension_numbers<[1], [0], [0], [1], [0, 0, 1, 1], [], []>} : vector<8x64xf32>, vector<64x256xf32>, vector<8x256xf32> -> vector<8x256xf32>
    %40 = arith.addf %37, %39 : vector<8x256xf32>
    %41 = arith.negf %40 : vector<8x256xf32>
    %42 = math.exp %41 : vector<8x256xf32>
    %cst_22 = arith.constant 1.000000e+00 : f32
    %43 = vector.broadcast %cst_22 : f32 to vector<8x256xf32>
    %44 = arith.addf %43, %42 : vector<8x256xf32>
    %45 = arith.divf %43, %44 : vector<8x256xf32>
    %46 = vector.extract_strided_slice %45 {offsets = [0, 0], sizes = [8, 64], strides = [1, 1]} : vector<8x256xf32> to vector<8x64xf32>
    %47 = vector.extract_strided_slice %45 {offsets = [0, 64], sizes = [8, 64], strides = [1, 1]} : vector<8x256xf32> to vector<8x64xf32>
    %48 = vector.extract_strided_slice %40 {offsets = [0, 128], sizes = [8, 64], strides = [1, 1]} : vector<8x256xf32> to vector<8x64xf32>
    %49 = math.tanh %48 : vector<8x64xf32>
    %50 = vector.extract_strided_slice %45 {offsets = [0, 192], sizes = [8, 64], strides = [1, 1]} : vector<8x256xf32> to vector<8x64xf32>
    %51 = arith.mulf %47, %27 : vector<8x64xf32>
    %52 = arith.mulf %46, %49 : vector<8x64xf32>
    %53 = arith.addf %51, %52 : vector<8x64xf32>
    %54 = math.tanh %53 : vector<8x64xf32>
    %55 = arith.mulf %50, %54 : vector<8x64xf32>
    %56 = vector.broadcast %c0_i32 : i32 to vector<8x64xi32>
    %57 = vector.broadcast %28 : i32 to vector<8x64xi32>
    %58 = arith.select %3, %56, %57 : vector<8x64xi1>, vector<8x64xi32>
    %59 = vector.broadcast %0 : vector<8x1xi32> to vector<8x64xi32>
    %60 = arith.cmpi slt, %58, %59 : vector<8x64xi32>
    %61 = arith.select %60, %55, %27 : vector<8x64xi1>, vector<8x64xf32>
    %62 = arith.select %60, %53, %27 : vector<8x64xi1>, vector<8x64xf32>
    %63 = vector.extract_strided_slice %61 {offsets = [0, 0], sizes = [8, 32], strides = [1, 1]} : vector<8x64xf32> to vector<8x32xf32>
    %64 = arith.index_cast %30 : i32 to index
    %c0_23 = arith.constant 0 : index
    %65 = vector.load %arg7[%64, %c0_23] : memref<64x64xf32, #tpu.memory_space<vmem>>, vector<8x32xf32>
    tpu.vector_store %arg7[%64, %c0_23], %63 {strides = array<i32>} : memref<64x64xf32, #tpu.memory_space<vmem>>, vector<8x32xf32>,
    %66 = vector.extract_strided_slice %61 {offsets = [0, 32], sizes = [8, 32], strides = [1, 1]} : vector<8x64xf32> to vector<8x32xf32>
    %67 = arith.index_cast %32 : i32 to index
    %c32 = arith.constant 32 : index
    %68 = vector.load %arg7[%67, %c32] : memref<64x64xf32, #tpu.memory_space<vmem>>, vector<8x32xf32>
    tpu.vector_store %arg7[%67, %c32], %66 {strides = array<i32>} : memref<64x64xf32, #tpu.memory_space<vmem>>, vector<8x32xf32>,
    %c1_i32 = arith.constant 1 : i32
    %c7_i32_24 = arith.constant 7 : i32
    %69 = arith.subi %c7_i32_24, %c1_i32 : i32
    %c8_i32_25 = arith.constant 8 : i32
    %70 = arith.muli %c1_i32, %c8_i32_25 : i32
    %71 = tpu.assume_multiple %70, 8 : i32
    %c8_i32_26 = arith.constant 8 : i32
    %72 = arith.muli %69, %c8_i32_26 : i32
    %73 = tpu.assume_multiple %72, 8 : i32
    %74 = arith.index_cast %71 : i32 to index
    %c0_27 = arith.constant 0 : index
    %75 = vector.load %arg6[%74, %c0_27] : memref<64x256xf32, #tpu.memory_space<vmem>>, vector<8x256xf32>
    %76 = arith.index_cast %73 : i32 to index
    %c0_28 = arith.constant 0 : index
    %77 = vector.load %arg6[%76, %c0_28] : memref<64x256xf32, #tpu.memory_space<vmem>>, vector<8x256xf32>
    %78 = arith.select %6, %75, %77 : vector<8x256xi1>, vector<8x256xf32>
    %c0_29 = arith.constant 0 : index
    %c0_30 = arith.constant 0 : index
    %79 = vector.load %arg4[%c0_29, %c0_30] : memref<128x256xf32, #tpu.memory_space<vmem>>, vector<64x256xf32>
    %cst_31 = arith.constant dense<0.000000e+00> : vector<8x256xf32>
    %80 = tpu.matmul %61, %79, %cst_31 {dimension_numbers = #tpu.dot_dimension_numbers<[1], [0], [0], [1], [0, 0, 1, 1], [], []>} : vector<8x64xf32>, vector<64x256xf32>, vector<8x256xf32> -> vector<8x256xf32>
    %81 = arith.addf %78, %80 : vector<8x256xf32>
    %82 = arith.negf %81 : vector<8x256xf32>
    %83 = math.exp %82 : vector<8x256xf32>
    %cst_32 = arith.constant 1.000000e+00 : f32
    %84 = vector.broadcast %cst_32 : f32 to vector<8x256xf32>
    %85 = arith.addf %84, %83 : vector<8x256xf32>
    %86 = arith.divf %84, %85 : vector<8x256xf32>
    %87 = vector.extract_strided_slice %86 {offsets = [0, 0], sizes = [8, 64], strides = [1, 1]} : vector<8x256xf32> to vector<8x64xf32>
    %88 = vector.extract_strided_slice %86 {offsets = [0, 64], sizes = [8, 64], strides = [1, 1]} : vector<8x256xf32> to vector<8x64xf32>
    %89 = vector.extract_strided_slice %81 {offsets = [0, 128], sizes = [8, 64], strides = [1, 1]} : vector<8x256xf32> to vector<8x64xf32>
    %90 = math.tanh %89 : vector<8x64xf32>
    %91 = vector.extract_strided_slice %86 {offsets = [0, 192], sizes = [8, 64], strides = [1, 1]} : vector<8x256xf32> to vector<8x64xf32>
    %92 = arith.mulf %88, %62 : vector<8x64xf32>
    %93 = arith.mulf %87, %90 : vector<8x64xf32>
    %94 = arith.addf %92, %93 : vector<8x64xf32>
    %95 = math.tanh %94 : vector<8x64xf32>
    %96 = arith.mulf %91, %95 : vector<8x64xf32>
    %97 = vector.broadcast %c1_i32 : i32 to vector<8x64xi32>
    %98 = vector.broadcast %69 : i32 to vector<8x64xi32>
    %99 = arith.select %3, %97, %98 : vector<8x64xi1>, vector<8x64xi32>
    %100 = vector.broadcast %0 : vector<8x1xi32> to vector<8x64xi32>
    %101 = arith.cmpi slt, %99, %100 : vector<8x64xi32>
    %102 = arith.select %101, %96, %61 : vector<8x64xi1>, vector<8x64xf32>
    %103 = arith.select %101, %94, %62 : vector<8x64xi1>, vector<8x64xf32>
    %104 = vector.extract_strided_slice %102 {offsets = [0, 0], sizes = [8, 32], strides = [1, 1]} : vector<8x64xf32> to vector<8x32xf32>
    %105 = arith.index_cast %71 : i32 to index
    %c0_33 = arith.constant 0 : index
    %106 = vector.load %arg7[%105, %c0_33] : memref<64x64xf32, #tpu.memory_space<vmem>>, vector<8x32xf32>
    tpu.vector_store %arg7[%105, %c0_33], %104 {strides = array<i32>} : memref<64x64xf32, #tpu.memory_space<vmem>>, vector<8x32xf32>,
    %107 = vector.extract_strided_slice %102 {offsets = [0, 32], sizes = [8, 32], strides = [1, 1]} : vector<8x64xf32> to vector<8x32xf32>
    %108 = arith.index_cast %73 : i32 to index
    %c32_34 = arith.constant 32 : index
    %109 = vector.load %arg7[%108, %c32_34] : memref<64x64xf32, #tpu.memory_space<vmem>>, vector<8x32xf32>
    tpu.vector_store %arg7[%108, %c32_34], %107 {strides = array<i32>} : memref<64x64xf32, #tpu.memory_space<vmem>>, vector<8x32xf32>,
    %c2_i32 = arith.constant 2 : i32
    %c7_i32_35 = arith.constant 7 : i32
    %110 = arith.subi %c7_i32_35, %c2_i32 : i32
    %c8_i32_36 = arith.constant 8 : i32
    %111 = arith.muli %c2_i32, %c8_i32_36 : i32
    %112 = tpu.assume_multiple %111, 8 : i32
    %c8_i32_37 = arith.constant 8 : i32
    %113 = arith.muli %110, %c8_i32_37 : i32
    %114 = tpu.assume_multiple %113, 8 : i32
    %115 = arith.index_cast %112 : i32 to index
    %c0_38 = arith.constant 0 : index
    %116 = vector.load %arg6[%115, %c0_38] : memref<64x256xf32, #tpu.memory_space<vmem>>, vector<8x256xf32>
    %117 = arith.index_cast %114 : i32 to index
    %c0_39 = arith.constant 0 : index
    %118 = vector.load %arg6[%117, %c0_39] : memref<64x256xf32, #tpu.memory_space<vmem>>, vector<8x256xf32>
    %119 = arith.select %6, %116, %118 : vector<8x256xi1>, vector<8x256xf32>
    %c0_40 = arith.constant 0 : index
    %c0_41 = arith.constant 0 : index
    %120 = vector.load %arg4[%c0_40, %c0_41] : memref<128x256xf32, #tpu.memory_space<vmem>>, vector<64x256xf32>
    %cst_42 = arith.constant dense<0.000000e+00> : vector<8x256xf32>
    %121 = tpu.matmul %102, %120, %cst_42 {dimension_numbers = #tpu.dot_dimension_numbers<[1], [0], [0], [1], [0, 0, 1, 1], [], []>} : vector<8x64xf32>, vector<64x256xf32>, vector<8x256xf32> -> vector<8x256xf32>
    %122 = arith.addf %119, %121 : vector<8x256xf32>
    %123 = arith.negf %122 : vector<8x256xf32>
    %124 = math.exp %123 : vector<8x256xf32>
    %cst_43 = arith.constant 1.000000e+00 : f32
    %125 = vector.broadcast %cst_43 : f32 to vector<8x256xf32>
    %126 = arith.addf %125, %124 : vector<8x256xf32>
    %127 = arith.divf %125, %126 : vector<8x256xf32>
    %128 = vector.extract_strided_slice %127 {offsets = [0, 0], sizes = [8, 64], strides = [1, 1]} : vector<8x256xf32> to vector<8x64xf32>
    %129 = vector.extract_strided_slice %127 {offsets = [0, 64], sizes = [8, 64], strides = [1, 1]} : vector<8x256xf32> to vector<8x64xf32>
    %130 = vector.extract_strided_slice %122 {offsets = [0, 128], sizes = [8, 64], strides = [1, 1]} : vector<8x256xf32> to vector<8x64xf32>
    %131 = math.tanh %130 : vector<8x64xf32>
    %132 = vector.extract_strided_slice %127 {offsets = [0, 192], sizes = [8, 64], strides = [1, 1]} : vector<8x256xf32> to vector<8x64xf32>
    %133 = arith.mulf %129, %103 : vector<8x64xf32>
    %134 = arith.mulf %128, %131 : vector<8x64xf32>
    %135 = arith.addf %133, %134 : vector<8x64xf32>
    %136 = math.tanh %135 : vector<8x64xf32>
    %137 = arith.mulf %132, %136 : vector<8x64xf32>
    %138 = vector.broadcast %c2_i32 : i32 to vector<8x64xi32>
    %139 = vector.broadcast %110 : i32 to vector<8x64xi32>
    %140 = arith.select %3, %138, %139 : vector<8x64xi1>, vector<8x64xi32>
    %141 = vector.broadcast %0 : vector<8x1xi32> to vector<8x64xi32>
    %142 = arith.cmpi slt, %140, %141 : vector<8x64xi32>
    %143 = arith.select %142, %137, %102 : vector<8x64xi1>, vector<8x64xf32>
    %144 = arith.select %142, %135, %103 : vector<8x64xi1>, vector<8x64xf32>
    %145 = vector.extract_strided_slice %143 {offsets = [0, 0], sizes = [8, 32], strides = [1, 1]} : vector<8x64xf32> to vector<8x32xf32>
    %146 = arith.index_cast %112 : i32 to index
    %c0_44 = arith.constant 0 : index
    %147 = vector.load %arg7[%146, %c0_44] : memref<64x64xf32, #tpu.memory_space<vmem>>, vector<8x32xf32>
    tpu.vector_store %arg7[%146, %c0_44], %145 {strides = array<i32>} : memref<64x64xf32, #tpu.memory_space<vmem>>, vector<8x32xf32>,
    %148 = vector.extract_strided_slice %143 {offsets = [0, 32], sizes = [8, 32], strides = [1, 1]} : vector<8x64xf32> to vector<8x32xf32>
    %149 = arith.index_cast %114 : i32 to index
    %c32_45 = arith.constant 32 : index
    %150 = vector.load %arg7[%149, %c32_45] : memref<64x64xf32, #tpu.memory_space<vmem>>, vector<8x32xf32>
    tpu.vector_store %arg7[%149, %c32_45], %148 {strides = array<i32>} : memref<64x64xf32, #tpu.memory_space<vmem>>, vector<8x32xf32>,
    %c3_i32 = arith.constant 3 : i32
    %c7_i32_46 = arith.constant 7 : i32
    %151 = arith.subi %c7_i32_46, %c3_i32 : i32
    %c8_i32_47 = arith.constant 8 : i32
    %152 = arith.muli %c3_i32, %c8_i32_47 : i32
    %153 = tpu.assume_multiple %152, 8 : i32
    %c8_i32_48 = arith.constant 8 : i32
    %154 = arith.muli %151, %c8_i32_48 : i32
    %155 = tpu.assume_multiple %154, 8 : i32
    %156 = arith.index_cast %153 : i32 to index
    %c0_49 = arith.constant 0 : index
    %157 = vector.load %arg6[%156, %c0_49] : memref<64x256xf32, #tpu.memory_space<vmem>>, vector<8x256xf32>
    %158 = arith.index_cast %155 : i32 to index
    %c0_50 = arith.constant 0 : index
    %159 = vector.load %arg6[%158, %c0_50] : memref<64x256xf32, #tpu.memory_space<vmem>>, vector<8x256xf32>
    %160 = arith.select %6, %157, %159 : vector<8x256xi1>, vector<8x256xf32>
    %c0_51 = arith.constant 0 : index
    %c0_52 = arith.constant 0 : index
    %161 = vector.load %arg4[%c0_51, %c0_52] : memref<128x256xf32, #tpu.memory_space<vmem>>, vector<64x256xf32>
    %cst_53 = arith.constant dense<0.000000e+00> : vector<8x256xf32>
    %162 = tpu.matmul %143, %161, %cst_53 {dimension_numbers = #tpu.dot_dimension_numbers<[1], [0], [0], [1], [0, 0, 1, 1], [], []>} : vector<8x64xf32>, vector<64x256xf32>, vector<8x256xf32> -> vector<8x256xf32>
    %163 = arith.addf %160, %162 : vector<8x256xf32>
    %164 = arith.negf %163 : vector<8x256xf32>
    %165 = math.exp %164 : vector<8x256xf32>
    %cst_54 = arith.constant 1.000000e+00 : f32
    %166 = vector.broadcast %cst_54 : f32 to vector<8x256xf32>
    %167 = arith.addf %166, %165 : vector<8x256xf32>
    %168 = arith.divf %166, %167 : vector<8x256xf32>
    %169 = vector.extract_strided_slice %168 {offsets = [0, 0], sizes = [8, 64], strides = [1, 1]} : vector<8x256xf32> to vector<8x64xf32>
    %170 = vector.extract_strided_slice %168 {offsets = [0, 64], sizes = [8, 64], strides = [1, 1]} : vector<8x256xf32> to vector<8x64xf32>
    %171 = vector.extract_strided_slice %163 {offsets = [0, 128], sizes = [8, 64], strides = [1, 1]} : vector<8x256xf32> to vector<8x64xf32>
    %172 = math.tanh %171 : vector<8x64xf32>
    %173 = vector.extract_strided_slice %168 {offsets = [0, 192], sizes = [8, 64], strides = [1, 1]} : vector<8x256xf32> to vector<8x64xf32>
    %174 = arith.mulf %170, %144 : vector<8x64xf32>
    %175 = arith.mulf %169, %172 : vector<8x64xf32>
    %176 = arith.addf %174, %175 : vector<8x64xf32>
    %177 = math.tanh %176 : vector<8x64xf32>
    %178 = arith.mulf %173, %177 : vector<8x64xf32>
    %179 = vector.broadcast %c3_i32 : i32 to vector<8x64xi32>
    %180 = vector.broadcast %151 : i32 to vector<8x64xi32>
    %181 = arith.select %3, %179, %180 : vector<8x64xi1>, vector<8x64xi32>
    %182 = vector.broadcast %0 : vector<8x1xi32> to vector<8x64xi32>
    %183 = arith.cmpi slt, %181, %182 : vector<8x64xi32>
    %184 = arith.select %183, %178, %143 : vector<8x64xi1>, vector<8x64xf32>
    %185 = arith.select %183, %176, %144 : vector<8x64xi1>, vector<8x64xf32>
    %186 = vector.extract_strided_slice %184 {offsets = [0, 0], sizes = [8, 32], strides = [1, 1]} : vector<8x64xf32> to vector<8x32xf32>
    %187 = arith.index_cast %153 : i32 to index
    %c0_55 = arith.constant 0 : index
    %188 = vector.load %arg7[%187, %c0_55] : memref<64x64xf32, #tpu.memory_space<vmem>>, vector<8x32xf32>
    tpu.vector_store %arg7[%187, %c0_55], %186 {strides = array<i32>} : memref<64x64xf32, #tpu.memory_space<vmem>>, vector<8x32xf32>,
    %189 = vector.extract_strided_slice %184 {offsets = [0, 32], sizes = [8, 32], strides = [1, 1]} : vector<8x64xf32> to vector<8x32xf32>
    %190 = arith.index_cast %155 : i32 to index
    %c32_56 = arith.constant 32 : index
    %191 = vector.load %arg7[%190, %c32_56] : memref<64x64xf32, #tpu.memory_space<vmem>>, vector<8x32xf32>
    tpu.vector_store %arg7[%190, %c32_56], %189 {strides = array<i32>} : memref<64x64xf32, #tpu.memory_space<vmem>>, vector<8x32xf32>,
    %c4_i32 = arith.constant 4 : i32
    %c7_i32_57 = arith.constant 7 : i32
    %192 = arith.subi %c7_i32_57, %c4_i32 : i32
    %c8_i32_58 = arith.constant 8 : i32
    %193 = arith.muli %c4_i32, %c8_i32_58 : i32
    %194 = tpu.assume_multiple %193, 8 : i32
    %c8_i32_59 = arith.constant 8 : i32
    %195 = arith.muli %192, %c8_i32_59 : i32
    %196 = tpu.assume_multiple %195, 8 : i32
    %197 = arith.index_cast %194 : i32 to index
    %c0_60 = arith.constant 0 : index
    %198 = vector.load %arg6[%197, %c0_60] : memref<64x256xf32, #tpu.memory_space<vmem>>, vector<8x256xf32>
    %199 = arith.index_cast %196 : i32 to index
    %c0_61 = arith.constant 0 : index
    %200 = vector.load %arg6[%199, %c0_61] : memref<64x256xf32, #tpu.memory_space<vmem>>, vector<8x256xf32>
    %201 = arith.select %6, %198, %200 : vector<8x256xi1>, vector<8x256xf32>
    %c0_62 = arith.constant 0 : index
    %c0_63 = arith.constant 0 : index
    %202 = vector.load %arg4[%c0_62, %c0_63] : memref<128x256xf32, #tpu.memory_space<vmem>>, vector<64x256xf32>
    %cst_64 = arith.constant dense<0.000000e+00> : vector<8x256xf32>
    %203 = tpu.matmul %184, %202, %cst_64 {dimension_numbers = #tpu.dot_dimension_numbers<[1], [0], [0], [1], [0, 0, 1, 1], [], []>} : vector<8x64xf32>, vector<64x256xf32>, vector<8x256xf32> -> vector<8x256xf32>
    %204 = arith.addf %201, %203 : vector<8x256xf32>
    %205 = arith.negf %204 : vector<8x256xf32>
    %206 = math.exp %205 : vector<8x256xf32>
    %cst_65 = arith.constant 1.000000e+00 : f32
    %207 = vector.broadcast %cst_65 : f32 to vector<8x256xf32>
    %208 = arith.addf %207, %206 : vector<8x256xf32>
    %209 = arith.divf %207, %208 : vector<8x256xf32>
    %210 = vector.extract_strided_slice %209 {offsets = [0, 0], sizes = [8, 64], strides = [1, 1]} : vector<8x256xf32> to vector<8x64xf32>
    %211 = vector.extract_strided_slice %209 {offsets = [0, 64], sizes = [8, 64], strides = [1, 1]} : vector<8x256xf32> to vector<8x64xf32>
    %212 = vector.extract_strided_slice %204 {offsets = [0, 128], sizes = [8, 64], strides = [1, 1]} : vector<8x256xf32> to vector<8x64xf32>
    %213 = math.tanh %212 : vector<8x64xf32>
    %214 = vector.extract_strided_slice %209 {offsets = [0, 192], sizes = [8, 64], strides = [1, 1]} : vector<8x256xf32> to vector<8x64xf32>
    %215 = arith.mulf %211, %185 : vector<8x64xf32>
    %216 = arith.mulf %210, %213 : vector<8x64xf32>
    %217 = arith.addf %215, %216 : vector<8x64xf32>
    %218 = math.tanh %217 : vector<8x64xf32>
    %219 = arith.mulf %214, %218 : vector<8x64xf32>
    %220 = vector.broadcast %c4_i32 : i32 to vector<8x64xi32>
    %221 = vector.broadcast %192 : i32 to vector<8x64xi32>
    %222 = arith.select %3, %220, %221 : vector<8x64xi1>, vector<8x64xi32>
    %223 = vector.broadcast %0 : vector<8x1xi32> to vector<8x64xi32>
    %224 = arith.cmpi slt, %222, %223 : vector<8x64xi32>
    %225 = arith.select %224, %219, %184 : vector<8x64xi1>, vector<8x64xf32>
    %226 = arith.select %224, %217, %185 : vector<8x64xi1>, vector<8x64xf32>
    %227 = vector.extract_strided_slice %225 {offsets = [0, 0], sizes = [8, 32], strides = [1, 1]} : vector<8x64xf32> to vector<8x32xf32>
    %228 = arith.index_cast %194 : i32 to index
    %c0_66 = arith.constant 0 : index
    %229 = vector.load %arg7[%228, %c0_66] : memref<64x64xf32, #tpu.memory_space<vmem>>, vector<8x32xf32>
    tpu.vector_store %arg7[%228, %c0_66], %227 {strides = array<i32>} : memref<64x64xf32, #tpu.memory_space<vmem>>, vector<8x32xf32>,
    %230 = vector.extract_strided_slice %225 {offsets = [0, 32], sizes = [8, 32], strides = [1, 1]} : vector<8x64xf32> to vector<8x32xf32>
    %231 = arith.index_cast %196 : i32 to index
    %c32_67 = arith.constant 32 : index
    %232 = vector.load %arg7[%231, %c32_67] : memref<64x64xf32, #tpu.memory_space<vmem>>, vector<8x32xf32>
    tpu.vector_store %arg7[%231, %c32_67], %230 {strides = array<i32>} : memref<64x64xf32, #tpu.memory_space<vmem>>, vector<8x32xf32>,
    %c5_i32 = arith.constant 5 : i32
    %c7_i32_68 = arith.constant 7 : i32
    %233 = arith.subi %c7_i32_68, %c5_i32 : i32
    %c8_i32_69 = arith.constant 8 : i32
    %234 = arith.muli %c5_i32, %c8_i32_69 : i32
    %235 = tpu.assume_multiple %234, 8 : i32
    %c8_i32_70 = arith.constant 8 : i32
    %236 = arith.muli %233, %c8_i32_70 : i32
    %237 = tpu.assume_multiple %236, 8 : i32
    %238 = arith.index_cast %235 : i32 to index
    %c0_71 = arith.constant 0 : index
    %239 = vector.load %arg6[%238, %c0_71] : memref<64x256xf32, #tpu.memory_space<vmem>>, vector<8x256xf32>
    %240 = arith.index_cast %237 : i32 to index
    %c0_72 = arith.constant 0 : index
    %241 = vector.load %arg6[%240, %c0_72] : memref<64x256xf32, #tpu.memory_space<vmem>>, vector<8x256xf32>
    %242 = arith.select %6, %239, %241 : vector<8x256xi1>, vector<8x256xf32>
    %c0_73 = arith.constant 0 : index
    %c0_74 = arith.constant 0 : index
    %243 = vector.load %arg4[%c0_73, %c0_74] : memref<128x256xf32, #tpu.memory_space<vmem>>, vector<64x256xf32>
    %cst_75 = arith.constant dense<0.000000e+00> : vector<8x256xf32>
    %244 = tpu.matmul %225, %243, %cst_75 {dimension_numbers = #tpu.dot_dimension_numbers<[1], [0], [0], [1], [0, 0, 1, 1], [], []>} : vector<8x64xf32>, vector<64x256xf32>, vector<8x256xf32> -> vector<8x256xf32>
    %245 = arith.addf %242, %244 : vector<8x256xf32>
    %246 = arith.negf %245 : vector<8x256xf32>
    %247 = math.exp %246 : vector<8x256xf32>
    %cst_76 = arith.constant 1.000000e+00 : f32
    %248 = vector.broadcast %cst_76 : f32 to vector<8x256xf32>
    %249 = arith.addf %248, %247 : vector<8x256xf32>
    %250 = arith.divf %248, %249 : vector<8x256xf32>
    %251 = vector.extract_strided_slice %250 {offsets = [0, 0], sizes = [8, 64], strides = [1, 1]} : vector<8x256xf32> to vector<8x64xf32>
    %252 = vector.extract_strided_slice %250 {offsets = [0, 64], sizes = [8, 64], strides = [1, 1]} : vector<8x256xf32> to vector<8x64xf32>
    %253 = vector.extract_strided_slice %245 {offsets = [0, 128], sizes = [8, 64], strides = [1, 1]} : vector<8x256xf32> to vector<8x64xf32>
    %254 = math.tanh %253 : vector<8x64xf32>
    %255 = vector.extract_strided_slice %250 {offsets = [0, 192], sizes = [8, 64], strides = [1, 1]} : vector<8x256xf32> to vector<8x64xf32>
    %256 = arith.mulf %252, %226 : vector<8x64xf32>
    %257 = arith.mulf %251, %254 : vector<8x64xf32>
    %258 = arith.addf %256, %257 : vector<8x64xf32>
    %259 = math.tanh %258 : vector<8x64xf32>
    %260 = arith.mulf %255, %259 : vector<8x64xf32>
    %261 = vector.broadcast %c5_i32 : i32 to vector<8x64xi32>
    %262 = vector.broadcast %233 : i32 to vector<8x64xi32>
    %263 = arith.select %3, %261, %262 : vector<8x64xi1>, vector<8x64xi32>
    %264 = vector.broadcast %0 : vector<8x1xi32> to vector<8x64xi32>
    %265 = arith.cmpi slt, %263, %264 : vector<8x64xi32>
    %266 = arith.select %265, %260, %225 : vector<8x64xi1>, vector<8x64xf32>
    %267 = arith.select %265, %258, %226 : vector<8x64xi1>, vector<8x64xf32>
    %268 = vector.extract_strided_slice %266 {offsets = [0, 0], sizes = [8, 32], strides = [1, 1]} : vector<8x64xf32> to vector<8x32xf32>
    %269 = arith.index_cast %235 : i32 to index
    %c0_77 = arith.constant 0 : index
    %270 = vector.load %arg7[%269, %c0_77] : memref<64x64xf32, #tpu.memory_space<vmem>>, vector<8x32xf32>
    tpu.vector_store %arg7[%269, %c0_77], %268 {strides = array<i32>} : memref<64x64xf32, #tpu.memory_space<vmem>>, vector<8x32xf32>,
    %271 = vector.extract_strided_slice %266 {offsets = [0, 32], sizes = [8, 32], strides = [1, 1]} : vector<8x64xf32> to vector<8x32xf32>
    %272 = arith.index_cast %237 : i32 to index
    %c32_78 = arith.constant 32 : index
    %273 = vector.load %arg7[%272, %c32_78] : memref<64x64xf32, #tpu.memory_space<vmem>>, vector<8x32xf32>
    tpu.vector_store %arg7[%272, %c32_78], %271 {strides = array<i32>} : memref<64x64xf32, #tpu.memory_space<vmem>>, vector<8x32xf32>,
    %c6_i32 = arith.constant 6 : i32
    %c7_i32_79 = arith.constant 7 : i32
    %274 = arith.subi %c7_i32_79, %c6_i32 : i32
    %c8_i32_80 = arith.constant 8 : i32
    %275 = arith.muli %c6_i32, %c8_i32_80 : i32
    %276 = tpu.assume_multiple %275, 8 : i32
    %c8_i32_81 = arith.constant 8 : i32
    %277 = arith.muli %274, %c8_i32_81 : i32
    %278 = tpu.assume_multiple %277, 8 : i32
    %279 = arith.index_cast %276 : i32 to index
    %c0_82 = arith.constant 0 : index
    %280 = vector.load %arg6[%279, %c0_82] : memref<64x256xf32, #tpu.memory_space<vmem>>, vector<8x256xf32>
    %281 = arith.index_cast %278 : i32 to index
    %c0_83 = arith.constant 0 : index
    %282 = vector.load %arg6[%281, %c0_83] : memref<64x256xf32, #tpu.memory_space<vmem>>, vector<8x256xf32>
    %283 = arith.select %6, %280, %282 : vector<8x256xi1>, vector<8x256xf32>
    %c0_84 = arith.constant 0 : index
    %c0_85 = arith.constant 0 : index
    %284 = vector.load %arg4[%c0_84, %c0_85] : memref<128x256xf32, #tpu.memory_space<vmem>>, vector<64x256xf32>
    %cst_86 = arith.constant dense<0.000000e+00> : vector<8x256xf32>
    %285 = tpu.matmul %266, %284, %cst_86 {dimension_numbers = #tpu.dot_dimension_numbers<[1], [0], [0], [1], [0, 0, 1, 1], [], []>} : vector<8x64xf32>, vector<64x256xf32>, vector<8x256xf32> -> vector<8x256xf32>
    %286 = arith.addf %283, %285 : vector<8x256xf32>
    %287 = arith.negf %286 : vector<8x256xf32>
    %288 = math.exp %287 : vector<8x256xf32>
    %cst_87 = arith.constant 1.000000e+00 : f32
    %289 = vector.broadcast %cst_87 : f32 to vector<8x256xf32>
    %290 = arith.addf %289, %288 : vector<8x256xf32>
    %291 = arith.divf %289, %290 : vector<8x256xf32>
    %292 = vector.extract_strided_slice %291 {offsets = [0, 0], sizes = [8, 64], strides = [1, 1]} : vector<8x256xf32> to vector<8x64xf32>
    %293 = vector.extract_strided_slice %291 {offsets = [0, 64], sizes = [8, 64], strides = [1, 1]} : vector<8x256xf32> to vector<8x64xf32>
    %294 = vector.extract_strided_slice %286 {offsets = [0, 128], sizes = [8, 64], strides = [1, 1]} : vector<8x256xf32> to vector<8x64xf32>
    %295 = math.tanh %294 : vector<8x64xf32>
    %296 = vector.extract_strided_slice %291 {offsets = [0, 192], sizes = [8, 64], strides = [1, 1]} : vector<8x256xf32> to vector<8x64xf32>
    %297 = arith.mulf %293, %267 : vector<8x64xf32>
    %298 = arith.mulf %292, %295 : vector<8x64xf32>
    %299 = arith.addf %297, %298 : vector<8x64xf32>
    %300 = math.tanh %299 : vector<8x64xf32>
    %301 = arith.mulf %296, %300 : vector<8x64xf32>
    %302 = vector.broadcast %c6_i32 : i32 to vector<8x64xi32>
    %303 = vector.broadcast %274 : i32 to vector<8x64xi32>
    %304 = arith.select %3, %302, %303 : vector<8x64xi1>, vector<8x64xi32>
    %305 = vector.broadcast %0 : vector<8x1xi32> to vector<8x64xi32>
    %306 = arith.cmpi slt, %304, %305 : vector<8x64xi32>
    %307 = arith.select %306, %301, %266 : vector<8x64xi1>, vector<8x64xf32>
    %308 = arith.select %306, %299, %267 : vector<8x64xi1>, vector<8x64xf32>
    %309 = vector.extract_strided_slice %307 {offsets = [0, 0], sizes = [8, 32], strides = [1, 1]} : vector<8x64xf32> to vector<8x32xf32>
    %310 = arith.index_cast %276 : i32 to index
    %c0_88 = arith.constant 0 : index
    %311 = vector.load %arg7[%310, %c0_88] : memref<64x64xf32, #tpu.memory_space<vmem>>, vector<8x32xf32>
    tpu.vector_store %arg7[%310, %c0_88], %309 {strides = array<i32>} : memref<64x64xf32, #tpu.memory_space<vmem>>, vector<8x32xf32>,
    %312 = vector.extract_strided_slice %307 {offsets = [0, 32], sizes = [8, 32], strides = [1, 1]} : vector<8x64xf32> to vector<8x32xf32>
    %313 = arith.index_cast %278 : i32 to index
    %c32_89 = arith.constant 32 : index
    %314 = vector.load %arg7[%313, %c32_89] : memref<64x64xf32, #tpu.memory_space<vmem>>, vector<8x32xf32>
    tpu.vector_store %arg7[%313, %c32_89], %312 {strides = array<i32>} : memref<64x64xf32, #tpu.memory_space<vmem>>, vector<8x32xf32>,
    %c7_i32_90 = arith.constant 7 : i32
    %c7_i32_91 = arith.constant 7 : i32
    %315 = arith.subi %c7_i32_91, %c7_i32_90 : i32
    %c8_i32_92 = arith.constant 8 : i32
    %316 = arith.muli %c7_i32_90, %c8_i32_92 : i32
    %317 = tpu.assume_multiple %316, 8 : i32
    %c8_i32_93 = arith.constant 8 : i32
    %318 = arith.muli %315, %c8_i32_93 : i32
    %319 = tpu.assume_multiple %318, 8 : i32
    %320 = arith.index_cast %317 : i32 to index
    %c0_94 = arith.constant 0 : index
    %321 = vector.load %arg6[%320, %c0_94] : memref<64x256xf32, #tpu.memory_space<vmem>>, vector<8x256xf32>
    %322 = arith.index_cast %319 : i32 to index
    %c0_95 = arith.constant 0 : index
    %323 = vector.load %arg6[%322, %c0_95] : memref<64x256xf32, #tpu.memory_space<vmem>>, vector<8x256xf32>
    %324 = arith.select %6, %321, %323 : vector<8x256xi1>, vector<8x256xf32>
    %c0_96 = arith.constant 0 : index
    %c0_97 = arith.constant 0 : index
    %325 = vector.load %arg4[%c0_96, %c0_97] : memref<128x256xf32, #tpu.memory_space<vmem>>, vector<64x256xf32>
    %cst_98 = arith.constant dense<0.000000e+00> : vector<8x256xf32>
    %326 = tpu.matmul %307, %325, %cst_98 {dimension_numbers = #tpu.dot_dimension_numbers<[1], [0], [0], [1], [0, 0, 1, 1], [], []>} : vector<8x64xf32>, vector<64x256xf32>, vector<8x256xf32> -> vector<8x256xf32>
    %327 = arith.addf %324, %326 : vector<8x256xf32>
    %328 = arith.negf %327 : vector<8x256xf32>
    %329 = math.exp %328 : vector<8x256xf32>
    %cst_99 = arith.constant 1.000000e+00 : f32
    %330 = vector.broadcast %cst_99 : f32 to vector<8x256xf32>
    %331 = arith.addf %330, %329 : vector<8x256xf32>
    %332 = arith.divf %330, %331 : vector<8x256xf32>
    %333 = vector.extract_strided_slice %332 {offsets = [0, 0], sizes = [8, 64], strides = [1, 1]} : vector<8x256xf32> to vector<8x64xf32>
    %334 = vector.extract_strided_slice %332 {offsets = [0, 64], sizes = [8, 64], strides = [1, 1]} : vector<8x256xf32> to vector<8x64xf32>
    %335 = vector.extract_strided_slice %327 {offsets = [0, 128], sizes = [8, 64], strides = [1, 1]} : vector<8x256xf32> to vector<8x64xf32>
    %336 = math.tanh %335 : vector<8x64xf32>
    %337 = vector.extract_strided_slice %332 {offsets = [0, 192], sizes = [8, 64], strides = [1, 1]} : vector<8x256xf32> to vector<8x64xf32>
    %338 = arith.mulf %334, %308 : vector<8x64xf32>
    %339 = arith.mulf %333, %336 : vector<8x64xf32>
    %340 = arith.addf %338, %339 : vector<8x64xf32>
    %341 = math.tanh %340 : vector<8x64xf32>
    %342 = arith.mulf %337, %341 : vector<8x64xf32>
    %343 = vector.broadcast %c7_i32_90 : i32 to vector<8x64xi32>
    %344 = vector.broadcast %315 : i32 to vector<8x64xi32>
    %345 = arith.select %3, %343, %344 : vector<8x64xi1>, vector<8x64xi32>
    %346 = vector.broadcast %0 : vector<8x1xi32> to vector<8x64xi32>
    %347 = arith.cmpi slt, %345, %346 : vector<8x64xi32>
    %348 = arith.select %347, %342, %307 : vector<8x64xi1>, vector<8x64xf32>
    %349 = arith.select %347, %340, %308 : vector<8x64xi1>, vector<8x64xf32>
    %350 = vector.extract_strided_slice %348 {offsets = [0, 0], sizes = [8, 32], strides = [1, 1]} : vector<8x64xf32> to vector<8x32xf32>
    %351 = arith.index_cast %317 : i32 to index
    %c0_100 = arith.constant 0 : index
    %352 = vector.load %arg7[%351, %c0_100] : memref<64x64xf32, #tpu.memory_space<vmem>>, vector<8x32xf32>
    tpu.vector_store %arg7[%351, %c0_100], %350 {strides = array<i32>} : memref<64x64xf32, #tpu.memory_space<vmem>>, vector<8x32xf32>,
    %353 = vector.extract_strided_slice %348 {offsets = [0, 32], sizes = [8, 32], strides = [1, 1]} : vector<8x64xf32> to vector<8x32xf32>
    %354 = arith.index_cast %319 : i32 to index
    %c32_101 = arith.constant 32 : index
    %355 = vector.load %arg7[%354, %c32_101] : memref<64x64xf32, #tpu.memory_space<vmem>>, vector<8x32xf32>
    tpu.vector_store %arg7[%354, %c32_101], %353 {strides = array<i32>} : memref<64x64xf32, #tpu.memory_space<vmem>>, vector<8x32xf32>,
    %c8_i32_102 = arith.constant 8 : i32
    %c0_103 = arith.constant 0 : index
    %c0_104 = arith.constant 0 : index
    %356 = vector.load %arg7[%c0_103, %c0_104] : memref<64x64xf32, #tpu.memory_space<vmem>>, vector<64x64xf32>
    %cst_105 = arith.constant dense<0.000000e+00> : vector<64x256xf32>
    %357 = tpu.matmul %356, %8, %cst_105 {dimension_numbers = #tpu.dot_dimension_numbers<[1], [0], [0], [1], [0, 0, 1, 1], [], []>} : vector<64x64xf32>, vector<64x256xf32>, vector<64x256xf32> -> vector<64x256xf32>
    %358 = vector.broadcast %11 : vector<1x256xf32> to vector<64x256xf32>
    %359 = arith.addf %357, %358 : vector<64x256xf32>
    %c0_106 = arith.constant 0 : index
    %c0_107 = arith.constant 0 : index
    %360 = vector.load %arg6[%c0_106, %c0_107] : memref<64x256xf32, #tpu.memory_space<vmem>>, vector<64x256xf32>
    tpu.vector_store %arg6[%c0_106, %c0_107], %359 {strides = array<i32>} : memref<64x256xf32, #tpu.memory_space<vmem>>, vector<64x256xf32>,
    %c0_i32_108 = arith.constant 0 : i32
    %c7_i32_109 = arith.constant 7 : i32
    %361 = arith.subi %c7_i32_109, %c0_i32_108 : i32
    %c8_i32_110 = arith.constant 8 : i32
    %362 = arith.muli %c0_i32_108, %c8_i32_110 : i32
    %363 = tpu.assume_multiple %362, 8 : i32
    %c8_i32_111 = arith.constant 8 : i32
    %364 = arith.muli %361, %c8_i32_111 : i32
    %365 = tpu.assume_multiple %364, 8 : i32
    %366 = arith.index_cast %363 : i32 to index
    %c0_112 = arith.constant 0 : index
    %367 = vector.load %arg6[%366, %c0_112] : memref<64x256xf32, #tpu.memory_space<vmem>>, vector<8x256xf32>
    %368 = arith.index_cast %365 : i32 to index
    %c0_113 = arith.constant 0 : index
    %369 = vector.load %arg6[%368, %c0_113] : memref<64x256xf32, #tpu.memory_space<vmem>>, vector<8x256xf32>
    %370 = arith.select %6, %367, %369 : vector<8x256xi1>, vector<8x256xf32>
    %c64 = arith.constant 64 : index
    %c0_114 = arith.constant 0 : index
    %371 = vector.load %arg4[%c64, %c0_114] : memref<128x256xf32, #tpu.memory_space<vmem>>, vector<64x256xf32>
    %cst_115 = arith.constant dense<0.000000e+00> : vector<8x256xf32>
    %372 = tpu.matmul %27, %371, %cst_115 {dimension_numbers = #tpu.dot_dimension_numbers<[1], [0], [0], [1], [0, 0, 1, 1], [], []>} : vector<8x64xf32>, vector<64x256xf32>, vector<8x256xf32> -> vector<8x256xf32>
    %373 = arith.addf %370, %372 : vector<8x256xf32>
    %374 = arith.negf %373 : vector<8x256xf32>
    %375 = math.exp %374 : vector<8x256xf32>
    %cst_116 = arith.constant 1.000000e+00 : f32
    %376 = vector.broadcast %cst_116 : f32 to vector<8x256xf32>
    %377 = arith.addf %376, %375 : vector<8x256xf32>
    %378 = arith.divf %376, %377 : vector<8x256xf32>
    %379 = vector.extract_strided_slice %378 {offsets = [0, 0], sizes = [8, 64], strides = [1, 1]} : vector<8x256xf32> to vector<8x64xf32>
    %380 = vector.extract_strided_slice %378 {offsets = [0, 64], sizes = [8, 64], strides = [1, 1]} : vector<8x256xf32> to vector<8x64xf32>
    %381 = vector.extract_strided_slice %373 {offsets = [0, 128], sizes = [8, 64], strides = [1, 1]} : vector<8x256xf32> to vector<8x64xf32>
    %382 = math.tanh %381 : vector<8x64xf32>
    %383 = vector.extract_strided_slice %378 {offsets = [0, 192], sizes = [8, 64], strides = [1, 1]} : vector<8x256xf32> to vector<8x64xf32>
    %384 = arith.mulf %380, %27 : vector<8x64xf32>
    %385 = arith.mulf %379, %382 : vector<8x64xf32>
    %386 = arith.addf %384, %385 : vector<8x64xf32>
    %387 = math.tanh %386 : vector<8x64xf32>
    %388 = arith.mulf %383, %387 : vector<8x64xf32>
    %389 = vector.broadcast %c0_i32_108 : i32 to vector<8x64xi32>
    %390 = vector.broadcast %361 : i32 to vector<8x64xi32>
    %391 = arith.select %3, %389, %390 : vector<8x64xi1>, vector<8x64xi32>
    %392 = vector.broadcast %0 : vector<8x1xi32> to vector<8x64xi32>
    %393 = arith.cmpi slt, %391, %392 : vector<8x64xi32>
    %394 = arith.select %393, %388, %27 : vector<8x64xi1>, vector<8x64xf32>
    %395 = arith.select %393, %386, %27 : vector<8x64xi1>, vector<8x64xf32>
    %c1_i32_117 = arith.constant 1 : i32
    %c7_i32_118 = arith.constant 7 : i32
    %396 = arith.subi %c7_i32_118, %c1_i32_117 : i32
    %c8_i32_119 = arith.constant 8 : i32
    %397 = arith.muli %c1_i32_117, %c8_i32_119 : i32
    %398 = tpu.assume_multiple %397, 8 : i32
    %c8_i32_120 = arith.constant 8 : i32
    %399 = arith.muli %396, %c8_i32_120 : i32
    %400 = tpu.assume_multiple %399, 8 : i32
    %401 = arith.index_cast %398 : i32 to index
    %c0_121 = arith.constant 0 : index
    %402 = vector.load %arg6[%401, %c0_121] : memref<64x256xf32, #tpu.memory_space<vmem>>, vector<8x256xf32>
    %403 = arith.index_cast %400 : i32 to index
    %c0_122 = arith.constant 0 : index
    %404 = vector.load %arg6[%403, %c0_122] : memref<64x256xf32, #tpu.memory_space<vmem>>, vector<8x256xf32>
    %405 = arith.select %6, %402, %404 : vector<8x256xi1>, vector<8x256xf32>
    %c64_123 = arith.constant 64 : index
    %c0_124 = arith.constant 0 : index
    %406 = vector.load %arg4[%c64_123, %c0_124] : memref<128x256xf32, #tpu.memory_space<vmem>>, vector<64x256xf32>
    %cst_125 = arith.constant dense<0.000000e+00> : vector<8x256xf32>
    %407 = tpu.matmul %394, %406, %cst_125 {dimension_numbers = #tpu.dot_dimension_numbers<[1], [0], [0], [1], [0, 0, 1, 1], [], []>} : vector<8x64xf32>, vector<64x256xf32>, vector<8x256xf32> -> vector<8x256xf32>
    %408 = arith.addf %405, %407 : vector<8x256xf32>
    %409 = arith.negf %408 : vector<8x256xf32>
    %410 = math.exp %409 : vector<8x256xf32>
    %cst_126 = arith.constant 1.000000e+00 : f32
    %411 = vector.broadcast %cst_126 : f32 to vector<8x256xf32>
    %412 = arith.addf %411, %410 : vector<8x256xf32>
    %413 = arith.divf %411, %412 : vector<8x256xf32>
    %414 = vector.extract_strided_slice %413 {offsets = [0, 0], sizes = [8, 64], strides = [1, 1]} : vector<8x256xf32> to vector<8x64xf32>
    %415 = vector.extract_strided_slice %413 {offsets = [0, 64], sizes = [8, 64], strides = [1, 1]} : vector<8x256xf32> to vector<8x64xf32>
    %416 = vector.extract_strided_slice %408 {offsets = [0, 128], sizes = [8, 64], strides = [1, 1]} : vector<8x256xf32> to vector<8x64xf32>
    %417 = math.tanh %416 : vector<8x64xf32>
    %418 = vector.extract_strided_slice %413 {offsets = [0, 192], sizes = [8, 64], strides = [1, 1]} : vector<8x256xf32> to vector<8x64xf32>
    %419 = arith.mulf %415, %395 : vector<8x64xf32>
    %420 = arith.mulf %414, %417 : vector<8x64xf32>
    %421 = arith.addf %419, %420 : vector<8x64xf32>
    %422 = math.tanh %421 : vector<8x64xf32>
    %423 = arith.mulf %418, %422 : vector<8x64xf32>
    %424 = vector.broadcast %c1_i32_117 : i32 to vector<8x64xi32>
    %425 = vector.broadcast %396 : i32 to vector<8x64xi32>
    %426 = arith.select %3, %424, %425 : vector<8x64xi1>, vector<8x64xi32>
    %427 = vector.broadcast %0 : vector<8x1xi32> to vector<8x64xi32>
    %428 = arith.cmpi slt, %426, %427 : vector<8x64xi32>
    %429 = arith.select %428, %423, %394 : vector<8x64xi1>, vector<8x64xf32>
    %430 = arith.select %428, %421, %395 : vector<8x64xi1>, vector<8x64xf32>
    %c2_i32_127 = arith.constant 2 : i32
    %c7_i32_128 = arith.constant 7 : i32
    %431 = arith.subi %c7_i32_128, %c2_i32_127 : i32
    %c8_i32_129 = arith.constant 8 : i32
    %432 = arith.muli %c2_i32_127, %c8_i32_129 : i32
    %433 = tpu.assume_multiple %432, 8 : i32
    %c8_i32_130 = arith.constant 8 : i32
    %434 = arith.muli %431, %c8_i32_130 : i32
    %435 = tpu.assume_multiple %434, 8 : i32
    %436 = arith.index_cast %433 : i32 to index
    %c0_131 = arith.constant 0 : index
    %437 = vector.load %arg6[%436, %c0_131] : memref<64x256xf32, #tpu.memory_space<vmem>>, vector<8x256xf32>
    %438 = arith.index_cast %435 : i32 to index
    %c0_132 = arith.constant 0 : index
    %439 = vector.load %arg6[%438, %c0_132] : memref<64x256xf32, #tpu.memory_space<vmem>>, vector<8x256xf32>
    %440 = arith.select %6, %437, %439 : vector<8x256xi1>, vector<8x256xf32>
    %c64_133 = arith.constant 64 : index
    %c0_134 = arith.constant 0 : index
    %441 = vector.load %arg4[%c64_133, %c0_134] : memref<128x256xf32, #tpu.memory_space<vmem>>, vector<64x256xf32>
    %cst_135 = arith.constant dense<0.000000e+00> : vector<8x256xf32>
    %442 = tpu.matmul %429, %441, %cst_135 {dimension_numbers = #tpu.dot_dimension_numbers<[1], [0], [0], [1], [0, 0, 1, 1], [], []>} : vector<8x64xf32>, vector<64x256xf32>, vector<8x256xf32> -> vector<8x256xf32>
    %443 = arith.addf %440, %442 : vector<8x256xf32>
    %444 = arith.negf %443 : vector<8x256xf32>
    %445 = math.exp %444 : vector<8x256xf32>
    %cst_136 = arith.constant 1.000000e+00 : f32
    %446 = vector.broadcast %cst_136 : f32 to vector<8x256xf32>
    %447 = arith.addf %446, %445 : vector<8x256xf32>
    %448 = arith.divf %446, %447 : vector<8x256xf32>
    %449 = vector.extract_strided_slice %448 {offsets = [0, 0], sizes = [8, 64], strides = [1, 1]} : vector<8x256xf32> to vector<8x64xf32>
    %450 = vector.extract_strided_slice %448 {offsets = [0, 64], sizes = [8, 64], strides = [1, 1]} : vector<8x256xf32> to vector<8x64xf32>
    %451 = vector.extract_strided_slice %443 {offsets = [0, 128], sizes = [8, 64], strides = [1, 1]} : vector<8x256xf32> to vector<8x64xf32>
    %452 = math.tanh %451 : vector<8x64xf32>
    %453 = vector.extract_strided_slice %448 {offsets = [0, 192], sizes = [8, 64], strides = [1, 1]} : vector<8x256xf32> to vector<8x64xf32>
    %454 = arith.mulf %450, %430 : vector<8x64xf32>
    %455 = arith.mulf %449, %452 : vector<8x64xf32>
    %456 = arith.addf %454, %455 : vector<8x64xf32>
    %457 = math.tanh %456 : vector<8x64xf32>
    %458 = arith.mulf %453, %457 : vector<8x64xf32>
    %459 = vector.broadcast %c2_i32_127 : i32 to vector<8x64xi32>
    %460 = vector.broadcast %431 : i32 to vector<8x64xi32>
    %461 = arith.select %3, %459, %460 : vector<8x64xi1>, vector<8x64xi32>
    %462 = vector.broadcast %0 : vector<8x1xi32> to vector<8x64xi32>
    %463 = arith.cmpi slt, %461, %462 : vector<8x64xi32>
    %464 = arith.select %463, %458, %429 : vector<8x64xi1>, vector<8x64xf32>
    %465 = arith.select %463, %456, %430 : vector<8x64xi1>, vector<8x64xf32>
    %c3_i32_137 = arith.constant 3 : i32
    %c7_i32_138 = arith.constant 7 : i32
    %466 = arith.subi %c7_i32_138, %c3_i32_137 : i32
    %c8_i32_139 = arith.constant 8 : i32
    %467 = arith.muli %c3_i32_137, %c8_i32_139 : i32
    %468 = tpu.assume_multiple %467, 8 : i32
    %c8_i32_140 = arith.constant 8 : i32
    %469 = arith.muli %466, %c8_i32_140 : i32
    %470 = tpu.assume_multiple %469, 8 : i32
    %471 = arith.index_cast %468 : i32 to index
    %c0_141 = arith.constant 0 : index
    %472 = vector.load %arg6[%471, %c0_141] : memref<64x256xf32, #tpu.memory_space<vmem>>, vector<8x256xf32>
    %473 = arith.index_cast %470 : i32 to index
    %c0_142 = arith.constant 0 : index
    %474 = vector.load %arg6[%473, %c0_142] : memref<64x256xf32, #tpu.memory_space<vmem>>, vector<8x256xf32>
    %475 = arith.select %6, %472, %474 : vector<8x256xi1>, vector<8x256xf32>
    %c64_143 = arith.constant 64 : index
    %c0_144 = arith.constant 0 : index
    %476 = vector.load %arg4[%c64_143, %c0_144] : memref<128x256xf32, #tpu.memory_space<vmem>>, vector<64x256xf32>
    %cst_145 = arith.constant dense<0.000000e+00> : vector<8x256xf32>
    %477 = tpu.matmul %464, %476, %cst_145 {dimension_numbers = #tpu.dot_dimension_numbers<[1], [0], [0], [1], [0, 0, 1, 1], [], []>} : vector<8x64xf32>, vector<64x256xf32>, vector<8x256xf32> -> vector<8x256xf32>
    %478 = arith.addf %475, %477 : vector<8x256xf32>
    %479 = arith.negf %478 : vector<8x256xf32>
    %480 = math.exp %479 : vector<8x256xf32>
    %cst_146 = arith.constant 1.000000e+00 : f32
    %481 = vector.broadcast %cst_146 : f32 to vector<8x256xf32>
    %482 = arith.addf %481, %480 : vector<8x256xf32>
    %483 = arith.divf %481, %482 : vector<8x256xf32>
    %484 = vector.extract_strided_slice %483 {offsets = [0, 0], sizes = [8, 64], strides = [1, 1]} : vector<8x256xf32> to vector<8x64xf32>
    %485 = vector.extract_strided_slice %483 {offsets = [0, 64], sizes = [8, 64], strides = [1, 1]} : vector<8x256xf32> to vector<8x64xf32>
    %486 = vector.extract_strided_slice %478 {offsets = [0, 128], sizes = [8, 64], strides = [1, 1]} : vector<8x256xf32> to vector<8x64xf32>
    %487 = math.tanh %486 : vector<8x64xf32>
    %488 = vector.extract_strided_slice %483 {offsets = [0, 192], sizes = [8, 64], strides = [1, 1]} : vector<8x256xf32> to vector<8x64xf32>
    %489 = arith.mulf %485, %465 : vector<8x64xf32>
    %490 = arith.mulf %484, %487 : vector<8x64xf32>
    %491 = arith.addf %489, %490 : vector<8x64xf32>
    %492 = math.tanh %491 : vector<8x64xf32>
    %493 = arith.mulf %488, %492 : vector<8x64xf32>
    %494 = vector.broadcast %c3_i32_137 : i32 to vector<8x64xi32>
    %495 = vector.broadcast %466 : i32 to vector<8x64xi32>
    %496 = arith.select %3, %494, %495 : vector<8x64xi1>, vector<8x64xi32>
    %497 = vector.broadcast %0 : vector<8x1xi32> to vector<8x64xi32>
    %498 = arith.cmpi slt, %496, %497 : vector<8x64xi32>
    %499 = arith.select %498, %493, %464 : vector<8x64xi1>, vector<8x64xf32>
    %500 = arith.select %498, %491, %465 : vector<8x64xi1>, vector<8x64xf32>
    %c4_i32_147 = arith.constant 4 : i32
    %c7_i32_148 = arith.constant 7 : i32
    %501 = arith.subi %c7_i32_148, %c4_i32_147 : i32
    %c8_i32_149 = arith.constant 8 : i32
    %502 = arith.muli %c4_i32_147, %c8_i32_149 : i32
    %503 = tpu.assume_multiple %502, 8 : i32
    %c8_i32_150 = arith.constant 8 : i32
    %504 = arith.muli %501, %c8_i32_150 : i32
    %505 = tpu.assume_multiple %504, 8 : i32
    %506 = arith.index_cast %503 : i32 to index
    %c0_151 = arith.constant 0 : index
    %507 = vector.load %arg6[%506, %c0_151] : memref<64x256xf32, #tpu.memory_space<vmem>>, vector<8x256xf32>
    %508 = arith.index_cast %505 : i32 to index
    %c0_152 = arith.constant 0 : index
    %509 = vector.load %arg6[%508, %c0_152] : memref<64x256xf32, #tpu.memory_space<vmem>>, vector<8x256xf32>
    %510 = arith.select %6, %507, %509 : vector<8x256xi1>, vector<8x256xf32>
    %c64_153 = arith.constant 64 : index
    %c0_154 = arith.constant 0 : index
    %511 = vector.load %arg4[%c64_153, %c0_154] : memref<128x256xf32, #tpu.memory_space<vmem>>, vector<64x256xf32>
    %cst_155 = arith.constant dense<0.000000e+00> : vector<8x256xf32>
    %512 = tpu.matmul %499, %511, %cst_155 {dimension_numbers = #tpu.dot_dimension_numbers<[1], [0], [0], [1], [0, 0, 1, 1], [], []>} : vector<8x64xf32>, vector<64x256xf32>, vector<8x256xf32> -> vector<8x256xf32>
    %513 = arith.addf %510, %512 : vector<8x256xf32>
    %514 = arith.negf %513 : vector<8x256xf32>
    %515 = math.exp %514 : vector<8x256xf32>
    %cst_156 = arith.constant 1.000000e+00 : f32
    %516 = vector.broadcast %cst_156 : f32 to vector<8x256xf32>
    %517 = arith.addf %516, %515 : vector<8x256xf32>
    %518 = arith.divf %516, %517 : vector<8x256xf32>
    %519 = vector.extract_strided_slice %518 {offsets = [0, 0], sizes = [8, 64], strides = [1, 1]} : vector<8x256xf32> to vector<8x64xf32>
    %520 = vector.extract_strided_slice %518 {offsets = [0, 64], sizes = [8, 64], strides = [1, 1]} : vector<8x256xf32> to vector<8x64xf32>
    %521 = vector.extract_strided_slice %513 {offsets = [0, 128], sizes = [8, 64], strides = [1, 1]} : vector<8x256xf32> to vector<8x64xf32>
    %522 = math.tanh %521 : vector<8x64xf32>
    %523 = vector.extract_strided_slice %518 {offsets = [0, 192], sizes = [8, 64], strides = [1, 1]} : vector<8x256xf32> to vector<8x64xf32>
    %524 = arith.mulf %520, %500 : vector<8x64xf32>
    %525 = arith.mulf %519, %522 : vector<8x64xf32>
    %526 = arith.addf %524, %525 : vector<8x64xf32>
    %527 = math.tanh %526 : vector<8x64xf32>
    %528 = arith.mulf %523, %527 : vector<8x64xf32>
    %529 = vector.broadcast %c4_i32_147 : i32 to vector<8x64xi32>
    %530 = vector.broadcast %501 : i32 to vector<8x64xi32>
    %531 = arith.select %3, %529, %530 : vector<8x64xi1>, vector<8x64xi32>
    %532 = vector.broadcast %0 : vector<8x1xi32> to vector<8x64xi32>
    %533 = arith.cmpi slt, %531, %532 : vector<8x64xi32>
    %534 = arith.select %533, %528, %499 : vector<8x64xi1>, vector<8x64xf32>
    %535 = arith.select %533, %526, %500 : vector<8x64xi1>, vector<8x64xf32>
    %c5_i32_157 = arith.constant 5 : i32
    %c7_i32_158 = arith.constant 7 : i32
    %536 = arith.subi %c7_i32_158, %c5_i32_157 : i32
    %c8_i32_159 = arith.constant 8 : i32
    %537 = arith.muli %c5_i32_157, %c8_i32_159 : i32
    %538 = tpu.assume_multiple %537, 8 : i32
    %c8_i32_160 = arith.constant 8 : i32
    %539 = arith.muli %536, %c8_i32_160 : i32
    %540 = tpu.assume_multiple %539, 8 : i32
    %541 = arith.index_cast %538 : i32 to index
    %c0_161 = arith.constant 0 : index
    %542 = vector.load %arg6[%541, %c0_161] : memref<64x256xf32, #tpu.memory_space<vmem>>, vector<8x256xf32>
    %543 = arith.index_cast %540 : i32 to index
    %c0_162 = arith.constant 0 : index
    %544 = vector.load %arg6[%543, %c0_162] : memref<64x256xf32, #tpu.memory_space<vmem>>, vector<8x256xf32>
    %545 = arith.select %6, %542, %544 : vector<8x256xi1>, vector<8x256xf32>
    %c64_163 = arith.constant 64 : index
    %c0_164 = arith.constant 0 : index
    %546 = vector.load %arg4[%c64_163, %c0_164] : memref<128x256xf32, #tpu.memory_space<vmem>>, vector<64x256xf32>
    %cst_165 = arith.constant dense<0.000000e+00> : vector<8x256xf32>
    %547 = tpu.matmul %534, %546, %cst_165 {dimension_numbers = #tpu.dot_dimension_numbers<[1], [0], [0], [1], [0, 0, 1, 1], [], []>} : vector<8x64xf32>, vector<64x256xf32>, vector<8x256xf32> -> vector<8x256xf32>
    %548 = arith.addf %545, %547 : vector<8x256xf32>
    %549 = arith.negf %548 : vector<8x256xf32>
    %550 = math.exp %549 : vector<8x256xf32>
    %cst_166 = arith.constant 1.000000e+00 : f32
    %551 = vector.broadcast %cst_166 : f32 to vector<8x256xf32>
    %552 = arith.addf %551, %550 : vector<8x256xf32>
    %553 = arith.divf %551, %552 : vector<8x256xf32>
    %554 = vector.extract_strided_slice %553 {offsets = [0, 0], sizes = [8, 64], strides = [1, 1]} : vector<8x256xf32> to vector<8x64xf32>
    %555 = vector.extract_strided_slice %553 {offsets = [0, 64], sizes = [8, 64], strides = [1, 1]} : vector<8x256xf32> to vector<8x64xf32>
    %556 = vector.extract_strided_slice %548 {offsets = [0, 128], sizes = [8, 64], strides = [1, 1]} : vector<8x256xf32> to vector<8x64xf32>
    %557 = math.tanh %556 : vector<8x64xf32>
    %558 = vector.extract_strided_slice %553 {offsets = [0, 192], sizes = [8, 64], strides = [1, 1]} : vector<8x256xf32> to vector<8x64xf32>
    %559 = arith.mulf %555, %535 : vector<8x64xf32>
    %560 = arith.mulf %554, %557 : vector<8x64xf32>
    %561 = arith.addf %559, %560 : vector<8x64xf32>
    %562 = math.tanh %561 : vector<8x64xf32>
    %563 = arith.mulf %558, %562 : vector<8x64xf32>
    %564 = vector.broadcast %c5_i32_157 : i32 to vector<8x64xi32>
    %565 = vector.broadcast %536 : i32 to vector<8x64xi32>
    %566 = arith.select %3, %564, %565 : vector<8x64xi1>, vector<8x64xi32>
    %567 = vector.broadcast %0 : vector<8x1xi32> to vector<8x64xi32>
    %568 = arith.cmpi slt, %566, %567 : vector<8x64xi32>
    %569 = arith.select %568, %563, %534 : vector<8x64xi1>, vector<8x64xf32>
    %570 = arith.select %568, %561, %535 : vector<8x64xi1>, vector<8x64xf32>
    %c6_i32_167 = arith.constant 6 : i32
    %c7_i32_168 = arith.constant 7 : i32
    %571 = arith.subi %c7_i32_168, %c6_i32_167 : i32
    %c8_i32_169 = arith.constant 8 : i32
    %572 = arith.muli %c6_i32_167, %c8_i32_169 : i32
    %573 = tpu.assume_multiple %572, 8 : i32
    %c8_i32_170 = arith.constant 8 : i32
    %574 = arith.muli %571, %c8_i32_170 : i32
    %575 = tpu.assume_multiple %574, 8 : i32
    %576 = arith.index_cast %573 : i32 to index
    %c0_171 = arith.constant 0 : index
    %577 = vector.load %arg6[%576, %c0_171] : memref<64x256xf32, #tpu.memory_space<vmem>>, vector<8x256xf32>
    %578 = arith.index_cast %575 : i32 to index
    %c0_172 = arith.constant 0 : index
    %579 = vector.load %arg6[%578, %c0_172] : memref<64x256xf32, #tpu.memory_space<vmem>>, vector<8x256xf32>
    %580 = arith.select %6, %577, %579 : vector<8x256xi1>, vector<8x256xf32>
    %c64_173 = arith.constant 64 : index
    %c0_174 = arith.constant 0 : index
    %581 = vector.load %arg4[%c64_173, %c0_174] : memref<128x256xf32, #tpu.memory_space<vmem>>, vector<64x256xf32>
    %cst_175 = arith.constant dense<0.000000e+00> : vector<8x256xf32>
    %582 = tpu.matmul %569, %581, %cst_175 {dimension_numbers = #tpu.dot_dimension_numbers<[1], [0], [0], [1], [0, 0, 1, 1], [], []>} : vector<8x64xf32>, vector<64x256xf32>, vector<8x256xf32> -> vector<8x256xf32>
    %583 = arith.addf %580, %582 : vector<8x256xf32>
    %584 = arith.negf %583 : vector<8x256xf32>
    %585 = math.exp %584 : vector<8x256xf32>
    %cst_176 = arith.constant 1.000000e+00 : f32
    %586 = vector.broadcast %cst_176 : f32 to vector<8x256xf32>
    %587 = arith.addf %586, %585 : vector<8x256xf32>
    %588 = arith.divf %586, %587 : vector<8x256xf32>
    %589 = vector.extract_strided_slice %588 {offsets = [0, 0], sizes = [8, 64], strides = [1, 1]} : vector<8x256xf32> to vector<8x64xf32>
    %590 = vector.extract_strided_slice %588 {offsets = [0, 64], sizes = [8, 64], strides = [1, 1]} : vector<8x256xf32> to vector<8x64xf32>
    %591 = vector.extract_strided_slice %583 {offsets = [0, 128], sizes = [8, 64], strides = [1, 1]} : vector<8x256xf32> to vector<8x64xf32>
    %592 = math.tanh %591 : vector<8x64xf32>
    %593 = vector.extract_strided_slice %588 {offsets = [0, 192], sizes = [8, 64], strides = [1, 1]} : vector<8x256xf32> to vector<8x64xf32>
    %594 = arith.mulf %590, %570 : vector<8x64xf32>
    %595 = arith.mulf %589, %592 : vector<8x64xf32>
    %596 = arith.addf %594, %595 : vector<8x64xf32>
    %597 = math.tanh %596 : vector<8x64xf32>
    %598 = arith.mulf %593, %597 : vector<8x64xf32>
    %599 = vector.broadcast %c6_i32_167 : i32 to vector<8x64xi32>
    %600 = vector.broadcast %571 : i32 to vector<8x64xi32>
    %601 = arith.select %3, %599, %600 : vector<8x64xi1>, vector<8x64xi32>
    %602 = vector.broadcast %0 : vector<8x1xi32> to vector<8x64xi32>
    %603 = arith.cmpi slt, %601, %602 : vector<8x64xi32>
    %604 = arith.select %603, %598, %569 : vector<8x64xi1>, vector<8x64xf32>
    %605 = arith.select %603, %596, %570 : vector<8x64xi1>, vector<8x64xf32>
    %c7_i32_177 = arith.constant 7 : i32
    %c7_i32_178 = arith.constant 7 : i32
    %606 = arith.subi %c7_i32_178, %c7_i32_177 : i32
    %c8_i32_179 = arith.constant 8 : i32
    %607 = arith.muli %c7_i32_177, %c8_i32_179 : i32
    %608 = tpu.assume_multiple %607, 8 : i32
    %c8_i32_180 = arith.constant 8 : i32
    %609 = arith.muli %606, %c8_i32_180 : i32
    %610 = tpu.assume_multiple %609, 8 : i32
    %611 = arith.index_cast %608 : i32 to index
    %c0_181 = arith.constant 0 : index
    %612 = vector.load %arg6[%611, %c0_181] : memref<64x256xf32, #tpu.memory_space<vmem>>, vector<8x256xf32>
    %613 = arith.index_cast %610 : i32 to index
    %c0_182 = arith.constant 0 : index
    %614 = vector.load %arg6[%613, %c0_182] : memref<64x256xf32, #tpu.memory_space<vmem>>, vector<8x256xf32>
    %615 = arith.select %6, %612, %614 : vector<8x256xi1>, vector<8x256xf32>
    %c64_183 = arith.constant 64 : index
    %c0_184 = arith.constant 0 : index
    %616 = vector.load %arg4[%c64_183, %c0_184] : memref<128x256xf32, #tpu.memory_space<vmem>>, vector<64x256xf32>
    %cst_185 = arith.constant dense<0.000000e+00> : vector<8x256xf32>
    %617 = tpu.matmul %604, %616, %cst_185 {dimension_numbers = #tpu.dot_dimension_numbers<[1], [0], [0], [1], [0, 0, 1, 1], [], []>} : vector<8x64xf32>, vector<64x256xf32>, vector<8x256xf32> -> vector<8x256xf32>
    %618 = arith.addf %615, %617 : vector<8x256xf32>
    %619 = arith.negf %618 : vector<8x256xf32>
    %620 = math.exp %619 : vector<8x256xf32>
    %cst_186 = arith.constant 1.000000e+00 : f32
    %621 = vector.broadcast %cst_186 : f32 to vector<8x256xf32>
    %622 = arith.addf %621, %620 : vector<8x256xf32>
    %623 = arith.divf %621, %622 : vector<8x256xf32>
    %624 = vector.extract_strided_slice %623 {offsets = [0, 0], sizes = [8, 64], strides = [1, 1]} : vector<8x256xf32> to vector<8x64xf32>
    %625 = vector.extract_strided_slice %623 {offsets = [0, 64], sizes = [8, 64], strides = [1, 1]} : vector<8x256xf32> to vector<8x64xf32>
    %626 = vector.extract_strided_slice %618 {offsets = [0, 128], sizes = [8, 64], strides = [1, 1]} : vector<8x256xf32> to vector<8x64xf32>
    %627 = math.tanh %626 : vector<8x64xf32>
    %628 = vector.extract_strided_slice %623 {offsets = [0, 192], sizes = [8, 64], strides = [1, 1]} : vector<8x256xf32> to vector<8x64xf32>
    %629 = arith.mulf %625, %605 : vector<8x64xf32>
    %630 = arith.mulf %624, %627 : vector<8x64xf32>
    %631 = arith.addf %629, %630 : vector<8x64xf32>
    %632 = math.tanh %631 : vector<8x64xf32>
    %633 = arith.mulf %628, %632 : vector<8x64xf32>
    %634 = vector.broadcast %c7_i32_177 : i32 to vector<8x64xi32>
    %635 = vector.broadcast %606 : i32 to vector<8x64xi32>
    %636 = arith.select %3, %634, %635 : vector<8x64xi1>, vector<8x64xi32>
    %637 = vector.broadcast %0 : vector<8x1xi32> to vector<8x64xi32>
    %638 = arith.cmpi slt, %636, %637 : vector<8x64xi32>
    %639 = arith.select %638, %633, %604 : vector<8x64xi1>, vector<8x64xf32>
    %640 = arith.select %638, %631, %605 : vector<8x64xi1>, vector<8x64xf32>
    %c8_i32_187 = arith.constant 8 : i32
    %641 = vector.broadcast %12 : vector<1x64xf32> to vector<8x64xf32>
    %642 = arith.mulf %639, %641 : vector<8x64xf32>
    %cst_188 = arith.constant dense<0.000000e+00> : vector<8xf32>
    %643 = vector.multi_reduction <add>, %642, %cst_188 [1] : vector<8x64xf32> to vector<8xf32>
    %644 = vector.shape_cast %643 : vector<8xf32> to vector<8x1xf32>
    %645 = vector.broadcast %13 : vector<1x1xf32> to vector<8x1xf32>
    %646 = arith.addf %644, %645 : vector<8x1xf32>
    %c0_189 = arith.constant 0 : index
    %c0_190 = arith.constant 0 : index
    %647 = vector.load %arg5[%c0_189, %c0_190] : memref<8x1xf32, #tpu.memory_space<vmem>>, vector<8x1xf32>
    tpu.vector_store %arg5[%c0_189, %c0_190], %646 {strides = array<i32>} : memref<8x1xf32, #tpu.memory_space<vmem>>, vector<8x1xf32>,
    return
  }
}

</mosaic_0001>

<llo_original>
// kernel: tpu_custom_call.1
$region0: #{tpu_custom_call.1}
  #allocation0 [shape = 'u32[]', space=smem, size = 0x4, offset = 0x4, fixed_abs, tag = 'smem constant byte address 0x4 - core index']
  #allocation1 [shape = 'u32[144,128]{1,0:T(1,128)}', space=vmem, size = 0x12000, scoped, tag = 'internal scratch']
  #allocation2 [shape = 'f32[64,256]{1,0:T(8,128)}', space=vmem, size = 0x10000, scoped, tag = 'scratch operand']
  #allocation3 [shape = 'f32[64,64]{1,0:T(8,128)}', space=vmem, size = 0x8000, scoped, tag = 'scratch operand']
  %s0 = inlined_call_operand.vmem [shape: s32[64,1], index: 0, kind: input, shape index: {}]
  %s1 = inlined_call_operand.vmem [shape: s32[8,1], index: 1, kind: input, shape index: {}]
  %s2 = inlined_call_operand.vmem [shape: f32[50,16], index: 2, kind: input, shape index: {}]
  %s3 = inlined_call_operand.hbm [shape: f32[88,256], index: 3, kind: input, shape index: {}]
  %s4 = inlined_call_operand.hbm [shape: f32[128,256], index: 4, kind: input, shape index: {}]
  %s5 = inlined_call_operand.vmem [shape: f32[8,1], index: 5, kind: output, shape index: {}]
  %s6 = sld [smem:[#allocation0]]
  $region38: #{tpu_custom_call.1} parent=0
    _
  %s8 = ssub.s32 1, %s6
  %s9 = scalar_select 0, %s8, %s6
  $region1: #{tpu_custom_call.1} parent=0
    #allocation4 [shape = 'u8[90112]{0}', space=vmem, size = 0x16000, scoped, tag = 'input window, operand 3, single buffered']
    #allocation5 [shape = 's32[1]{0}', space=sflag, size = 0x4, scoped, tag = 'scoped memory for tpu_custom_call.1']
    #allocation6 [shape = 'u8[131072]{0}', space=vmem, size = 0x20000, scoped, tag = 'input window, operand 4, single buffered']
    #allocation7 [shape = 's32[1]{0}', space=sflag, size = 0x4, scoped, tag = 'scoped memory for tpu_custom_call.1']
    %10 = vsyncpa [#allocation5], 0
    %11 = vsyncpa [#allocation7], 0
    // Predicated region
    $region2: #{tpu_custom_call.1} parent=1 // pred_check
      _
    $region3: #{tpu_custom_call.1} parent=1 // pred_check_branch
      %13 = sbr.rel (0) target = $region5
    $region4: #{tpu_custom_call.1} parent=1 // pred_region
      _
    $region5: #{tpu_custom_call.1} parent=1 // pred_fallthru
      _
    // Predicated region
    $region6: #{tpu_custom_call.1} parent=1 // pred_check
      _
    $region7: #{tpu_custom_call.1} parent=1 // pred_check_branch
      %15 = sbr.rel (0) target = $region9
    $region8: #{tpu_custom_call.1} parent=1 // pred_region
      _
    $region9: #{tpu_custom_call.1} parent=1 // pred_fallthru
      _
    // Predicated region
    $region10: #{tpu_custom_call.1} parent=1 // pred_check
      _
    $region11: #{tpu_custom_call.1} parent=1 // pred_check_branch
      %17 = sbr.rel (0) target = $region13
    $region12: #{tpu_custom_call.1} parent=1 // pred_region
      _
    $region13: #{tpu_custom_call.1} parent=1 // pred_fallthru
      _
    // Predicated region
    $region14: #{tpu_custom_call.1} parent=1 // pred_check
      _
    $region15: #{tpu_custom_call.1} parent=1 // pred_check_branch
      %19 = sbr.rel (0) target = $region17
    $region16: #{tpu_custom_call.1} parent=1 // pred_region
      %s21 = ssub.s32 2816, 2816
      %22 = vsyncadd [#allocation5], %s21
      %s23 = sshll.u32 [#allocation4], 4
      %s24 = int_to_ptr.vmem [resolvable:$true] %s23
      %29 = dma.hbm_to_vmem [thread:$0]  %s3, 2816, %s24, [#allocation5], 256, 256, 16
    $region17: #{tpu_custom_call.1} parent=1 // pred_fallthru
      _
    // Predicated region
    $region18: #{tpu_custom_call.1} parent=1 // pred_check
      _
    $region19: #{tpu_custom_call.1} parent=1 // pred_check_branch
      %31 = sbr.rel (0) target = $region21
    $region20: #{tpu_custom_call.1} parent=1 // pred_region
      %s33 = ssub.s32 4096, 4096
      %34 = vsyncadd [#allocation7], %s33
      %s35 = sshll.u32 [#allocation6], 4
      %s36 = int_to_ptr.vmem [resolvable:$true] %s35
      %41 = dma.hbm_to_vmem [thread:$0]  %s4, 4096, %s36, [#allocation7], 256, 256, 16
    $region21: #{tpu_custom_call.1} parent=1 // pred_fallthru
      _
    // Predicated region
    $region22: #{tpu_custom_call.1} parent=1 // pred_check
      _
    $region23: #{tpu_custom_call.1} parent=1 // pred_check_branch
      %43 = sbr.rel (0) target = $region25
    $region24: #{tpu_custom_call.1} parent=1 // pred_region
      %44 = dma.done [#allocation5], 2816
    $region25: #{tpu_custom_call.1} parent=1 // pred_fallthru
      _
    // Predicated region
    $region26: #{tpu_custom_call.1} parent=1 // pred_check
      _
    $region27: #{tpu_custom_call.1} parent=1 // pred_check_branch
      %46 = sbr.rel (0) target = $region29
    $region28: #{tpu_custom_call.1} parent=1 // pred_region
      %47 = dma.done [#allocation7], 4096
    $region29: #{tpu_custom_call.1} parent=1 // pred_fallthru
      _
    %v48 = vld [vmem:[%s1] sm:$0xff]
    %v49 = vlaneseq
    %v50 = vand.u32 %v49, 127
    %vm51 = vcmp.lt.s32.totalorder %v50, 32
    %52 = vrot.lane.b32.xlu0 %v50, 64
    %v53 = vpop.permute.xlu0 %52
    %vm54 = vcmask 523264
    %v55 = vsel %vm54, %v50, %v53
    %vm56 = vcmp.lt.s32.totalorder %v55, 32
    %v57 = vld [vmem:[#allocation4] sm:$0xff]
    %v58 = vld [vmem:[#allocation4 + $0x8] sm:$0xff]
    %v59 = vld [vmem:[#allocation4 + $0x10] sm:$0xff]
    %v60 = vld [vmem:[#allocation4 + $0x18] sm:$0xff]
    %v61 = vld [vmem:[#allocation4 + $0x20] sm:$0xff]
    %v62 = vld [vmem:[#allocation4 + $0x28] sm:$0xff]
    %v63 = vld [vmem:[#allocation4 + $0x30] sm:$0xff]
    %v64 = vld [vmem:[#allocation4 + $0x38] sm:$0xff]
    %v65 = vld [vmem:[#allocation4 + $0x40] sm:$0xff]
    %v66 = vld [vmem:[#allocation4 + $0x48] sm:$0xff]
    %v67 = vld [vmem:[#allocation4 + $0x50] sm:$0xff]
    %v68 = vld [vmem:[#allocation4 + $0x58] sm:$0xff]
    %v69 = vld [vmem:[#allocation4 + $0x60] sm:$0xff]
    %v70 = vld [vmem:[#allocation4 + $0x68] sm:$0xff]
    %v71 = vld [vmem:[#allocation4 + $0x70] sm:$0xff]
    %v72 = vld [vmem:[#allocation4 + $0x78] sm:$0xff]
    %v73 = vld [vmem:[#allocation4 + $0x80] sm:$0xff]
    %v74 = vld [vmem:[#allocation4 + $0x88] sm:$0xff]
    %v75 = vld [vmem:[#allocation4 + $0x90] sm:$0xff]
    %v76 = vld [vmem:[#allocation4 + $0x98] sm:$0xff]
    %v77 = vld [vmem:[#allocation4 + $0xa0] sm:$0xff]
    %v78 = vld [vmem:[#allocation4 + $0xa8] sm:$0xff]
    %v79 = vld [vmem:[%s0] sm:$0xff]
    %v80 = vld [vmem:[%s0 + $0x8] sm:$0xff]
    %v81 = vld [vmem:[%s0 + $0x10] sm:$0xff]
    %v82 = vld [vmem:[%s0 + $0x18] sm:$0xff]
    %v83 = vld [vmem:[%s0 + $0x20] sm:$0xff]
    %v84 = vld [vmem:[%s0 + $0x28] sm:$0xff]
    %v85 = vld [vmem:[%s0 + $0x30] sm:$0xff]
    %v86 = vld [vmem:[%s0 + $0x38] sm:$0xff]
    %87 = vset.pattern.permute.xlu0 0
    %88 = vperm.xlu0 %87, %v79
    %v89 = vpop.permute.xlu0 %88
    %90 = vset.pattern.permute.xlu0 0
    %91 = vperm.xlu0 %90, %v80
    %v92 = vpop.permute.xlu0 %91
    %93 = vset.pattern.permute.xlu0 0
    %94 = vperm.xlu0 %93, %v81
    %v95 = vpop.permute.xlu0 %94
    %96 = vset.pattern.permute.xlu0 0
    %97 = vperm.xlu0 %96, %v82
    %v98 = vpop.permute.xlu0 %97
    %99 = vset.pattern.permute.xlu0 0
    %100 = vperm.xlu0 %99, %v83
    %v101 = vpop.permute.xlu0 %100
    %102 = vset.pattern.permute.xlu0 0
    %103 = vperm.xlu0 %102, %v84
    %v104 = vpop.permute.xlu0 %103
    %105 = vset.pattern.permute.xlu0 0
    %106 = vperm.xlu0 %105, %v85
    %v107 = vpop.permute.xlu0 %106
    %108 = vset.pattern.permute.xlu0 0
    %109 = vperm.xlu0 %108, %v86
    %v110 = vpop.permute.xlu0 %109
    %vm111 = vcmp.eq.s32.totalorder %v50, %v89
    %vm112 = vcmp.eq.s32.totalorder %v50, %v92
    %vm113 = vcmp.eq.s32.totalorder %v50, %v95
    %vm114 = vcmp.eq.s32.totalorder %v50, %v98
    %vm115 = vcmp.eq.s32.totalorder %v50, %v101
    %vm116 = vcmp.eq.s32.totalorder %v50, %v104
    %vm117 = vcmp.eq.s32.totalorder %v50, %v107
    %vm118 = vcmp.eq.s32.totalorder %v50, %v110
    %v119 = vsel %vm111, 1.0, 0.0
    %v120 = vsel %vm112, 1.0, 0.0
    %v121 = vsel %vm113, 1.0, 0.0
    %v122 = vsel %vm114, 1.0, 0.0
    %v123 = vsel %vm115, 1.0, 0.0
    %v124 = vsel %vm116, 1.0, 0.0
    %v125 = vsel %vm117, 1.0, 0.0
    %v126 = vsel %vm118, 1.0, 0.0
    %v127 = vld [vmem:[%s2] sm:$0xff]
    %v128 = vld [vmem:[%s2 + $0x8] sm:$0xff]
    %v129 = vld [vmem:[%s2 + $0x10] sm:$0xff]
    %v130 = vld [vmem:[%s2 + $0x18] sm:$0xff]
    %v131 = vld [vmem:[%s2 + $0x20] sm:$0xff]
    %v132 = vld [vmem:[%s2 + $0x28] sm:$0xff]
    %v133 = vld [vmem:[%s2 + $0x30] sm:$0x3]
    %vm134 = vcmask 408576
    %v136 = vsel %vm134, %v119, 0
    %v139 = vsel %vm134, %v120, 0
    %v142 = vsel %vm134, %v121, 0
    %v145 = vsel %vm134, %v122, 0
    %v148 = vsel %vm134, %v123, 0
    %v151 = vsel %vm134, %v124, 0
    %v154 = vsel %vm134, %v125, 0
    %v157 = vsel %vm134, %v126, 0
    %vm159 = vcmask 1041408
    %v161 = vsel %vm159, %v133, 0
    %163 = vmatprep.subr.mxu0 0.0
    %164 = vmatpush1.msra.mxu0 %v127
    %165 = vmatprep.subr.mxu0 0.0
    %166 = vmatpush1.msra.mxu0 %v128
    %167 = vmatprep.subr.mxu0 0.0
    %168 = vmatpush1.msra.mxu0 %v129
    %169 = vmatprep.subr.mxu0 0.0
    %170 = vmatpush1.msra.mxu0 %v130
    %171 = vmatprep.subr.mxu0 0.0
    %172 = vmatpush1.msra.mxu0 %v131
    %173 = vmatprep.subr.mxu0 0.0
    %174 = vmatpush1.msra.mxu0 %v132
    %175 = vmatprep.subr.mxu0 0.0
    %176 = vmatpush1.msra.mxu0 %v161
    %177 = vmatprep.subr.mxu0 0.0
    %178 = vmatpush1.msra.mxu0 0.0
    %179 = vmatprep.subr.mxu0 0.0
    %180 = vmatpush1.msra.mxu0 0.0
    %181 = vmatprep.subr.mxu0 0.0
    %182 = vmatpush1.msra.mxu0 0.0
    %183 = vmatprep.subr.mxu0 0.0
    %184 = vmatpush1.msra.mxu0 0.0
    %185 = vmatprep.subr.mxu0 0.0
    %186 = vmatpush1.msra.mxu0 0.0
    %187 = vmatprep.subr.mxu0 0.0
    %188 = vmatpush1.msra.mxu0 0.0
    %189 = vmatprep.subr.mxu0 0.0
    %190 = vmatpush1.msra.mxu0 0.0
    %191 = vmatprep.subr.mxu0 0.0
    %192 = vmatpush1.msra.mxu0 0.0
    %193 = vmatprep.subr.mxu0 0.0
    %194 = vmatpush1.msra.mxu0 0.0
    %195 = vmatprep.subr.mxu0 0.0
    %196 = vmatpush1.msra.mxu0 0.0
    %197 = vmatprep.subr.mxu0 0.0
    %198 = vmatpush1.msra.mxu0 0.0
    %199 = vmatprep.subr.mxu0 0.0
    %200 = vmatpush1.msra.mxu0 0.0
    %201 = vmatprep.subr.mxu0 0.0
    %202 = vmatpush1.msra.mxu0 0.0
    %203 = vmatprep.subr.mxu0 0.0
    %204 = vmatpush1.msra.mxu0 0.0
    %205 = vmatprep.subr.mxu0 0.0
    %206 = vmatpush1.msra.mxu0 0.0
    %207 = vmatprep.subr.mxu0 0.0
    %208 = vmatpush1.msra.mxu0 0.0
    %209 = vmatprep.subr.mxu0 0.0
    %210 = vmatpush1.msra.mxu0 0.0
    %211 = vmatprep.subr.mxu0 0.0
    %212 = vmatpush1.msra.mxu0 0.0
    %213 = vmatprep.subr.mxu0 0.0
    %214 = vmatpush1.msra.mxu0 0.0
    %215 = vmatprep.subr.mxu0 0.0
    %216 = vmatpush1.msra.mxu0 0.0
    %217 = vmatprep.subr.mxu0 0.0
    %218 = vmatpush1.msra.mxu0 0.0
    %219 = vmatprep.subr.mxu0 0.0
    %220 = vmatpush1.msra.mxu0 0.0
    %221 = vmatprep.subr.mxu0 0.0
    %222 = vmatpush1.msra.mxu0 0.0
    %223 = vmatprep.subr.mxu0 0.0
    %224 = vmatpush1.msra.mxu0 0.0
    %225 = vmatprep.subr.mxu0 0.0
    %226 = vmatpush1.msra.mxu0 0.0
    %227 = vmatprep.mubr.f32.mxu0 0.0
    %228 = vmatmul.mubr.f32.gmra.mrb[0].mxu0 %v136
    %v229 = vpop.f32.mrb[0].mxu0
    %v230 = vadd.f32 0.0, %v229
    %v231 = vpop.f32.mrb[0].mxu0
    %232 = vmatprep.mubr.f32.mxu0 0.0
    %233 = vmatmul.mubr.f32.gmra.mrb[0].mxu0 %v139
    %v234 = vpop.f32.mrb[0].mxu0
    %v235 = vadd.f32 0.0, %v234
    %v236 = vpop.f32.mrb[0].mxu0
    %237 = vmatprep.mubr.f32.mxu0 0.0
    %238 = vmatmul.mubr.f32.gmra.mrb[0].mxu0 %v142
    %v239 = vpop.f32.mrb[0].mxu0
    %v240 = vadd.f32 0.0, %v239
    %v241 = vpop.f32.mrb[0].mxu0
    %242 = vmatprep.mubr.f32.mxu0 0.0
    %243 = vmatmul.mubr.f32.gmra.mrb[0].mxu0 %v145
    %v244 = vpop.f32.mrb[0].mxu0
    %v245 = vadd.f32 0.0, %v244
    %v246 = vpop.f32.mrb[0].mxu0
    %247 = vmatprep.mubr.f32.mxu0 0.0
    %248 = vmatmul.mubr.f32.gmra.mrb[0].mxu0 %v148
    %v249 = vpop.f32.mrb[0].mxu0
    %v250 = vadd.f32 0.0, %v249
    %v251 = vpop.f32.mrb[0].mxu0
    %252 = vmatprep.mubr.f32.mxu0 0.0
    %253 = vmatmul.mubr.f32.gmra.mrb[0].mxu0 %v151
    %v254 = vpop.f32.mrb[0].mxu0
    %v255 = vadd.f32 0.0, %v254
    %v256 = vpop.f32.mrb[0].mxu0
    %257 = vmatprep.mubr.f32.mxu0 0.0
    %258 = vmatmul.mubr.f32.gmra.mrb[0].mxu0 %v154
    %v259 = vpop.f32.mrb[0].mxu0
    %v260 = vadd.f32 0.0, %v259
    %v261 = vpop.f32.mrb[0].mxu0
    %262 = vmatprep.mubr.f32.mxu0 0.0
    %263 = vmatmul.mubr.f32.gmra.mrb[0].mxu0 %v157
    %v264 = vpop.f32.mrb[0].mxu0
    %v265 = vadd.f32 0.0, %v264
    %v266 = vpop.f32.mrb[0].mxu0
    %267 = vdwg.mxu0
    %v268 = vlaneseq
    %v269 = vshrl.u32 %v268, 7
    %v270 = vsub.s32 0, %v269
    %v271 = vrot.slane %v77, %v270
    %v272 = vlaneseq
    %v273 = vshrl.u32 %v272, 7
    %v274 = vsub.s32 0, %v273
    %v275 = vrot.slane %v78, %v274
    %vm276 = vcmask 130048
    %v278 = vsel %vm276, %v230, 0
    %v281 = vsel %vm276, %v235, 0
    %v284 = vsel %vm276, %v240, 0
    %v287 = vsel %vm276, %v245, 0
    %v290 = vsel %vm276, %v250, 0
    %v293 = vsel %vm276, %v255, 0
    %v296 = vsel %vm276, %v260, 0
    %v299 = vsel %vm276, %v265, 0
    %301 = vmatprep.subr.mxu0 %v58
    %302 = vmatpush1.msra.mxu0 %v57
    %303 = vmatprep.subr.mxu0 %v60
    %304 = vmatpush1.msra.mxu0 %v59
    %305 = vmatprep.subr.mxu0 0.0
    %306 = vmatpush1.msra.mxu0 0.0
    %307 = vmatprep.subr.mxu0 0.0
    %308 = vmatpush1.msra.mxu0 0.0
    %309 = vmatprep.subr.mxu0 0.0
    %310 = vmatpush1.msra.mxu0 0.0
    %311 = vmatprep.subr.mxu0 0.0
    %312 = vmatpush1.msra.mxu0 0.0
    %313 = vmatprep.subr.mxu0 0.0
    %314 = vmatpush1.msra.mxu0 0.0
    %315 = vmatprep.subr.mxu0 0.0
    %316 = vmatpush1.msra.mxu0 0.0
    %317 = vmatprep.subr.mxu0 0.0
    %318 = vmatpush1.msra.mxu0 0.0
    %319 = vmatprep.subr.mxu0 0.0
    %320 = vmatpush1.msra.mxu0 0.0
    %321 = vmatprep.subr.mxu0 0.0
    %322 = vmatpush1.msra.mxu0 0.0
    %323 = vmatprep.subr.mxu0 0.0
    %324 = vmatpush1.msra.mxu0 0.0
    %325 = vmatprep.subr.mxu0 0.0
    %326 = vmatpush1.msra.mxu0 0.0
    %327 = vmatprep.subr.mxu0 0.0
    %328 = vmatpush1.msra.mxu0 0.0
    %329 = vmatprep.subr.mxu0 0.0
    %330 = vmatpush1.msra.mxu0 0.0
    %331 = vmatprep.subr.mxu0 0.0
    %332 = vmatpush1.msra.mxu0 0.0
    %333 = vmatprep.subr.mxu0 0.0
    %334 = vmatpush1.msra.mxu0 0.0
    %335 = vmatprep.subr.mxu0 0.0
    %336 = vmatpush1.msra.mxu0 0.0
    %337 = vmatprep.subr.mxu0 0.0
    %338 = vmatpush1.msra.mxu0 0.0
    %339 = vmatprep.subr.mxu0 0.0
    %340 = vmatpush1.msra.mxu0 0.0
    %341 = vmatprep.subr.mxu0 0.0
    %342 = vmatpush1.msra.mxu0 0.0
    %343 = vmatprep.subr.mxu0 0.0
    %344 = vmatpush1.msra.mxu0 0.0
    %345 = vmatprep.subr.mxu0 0.0
    %346 = vmatpush1.msra.mxu0 0.0
    %347 = vmatprep.subr.mxu0 0.0
    %348 = vmatpush1.msra.mxu0 0.0
    %349 = vmatprep.subr.mxu0 0.0
    %350 = vmatpush1.msra.mxu0 0.0
    %351 = vmatprep.subr.mxu0 0.0
    %352 = vmatpush1.msra.mxu0 0.0
    %353 = vmatprep.subr.mxu0 0.0
    %354 = vmatpush1.msra.mxu0 0.0
    %355 = vmatprep.subr.mxu0 0.0
    %356 = vmatpush1.msra.mxu0 0.0
    %357 = vmatprep.subr.mxu0 0.0
    %358 = vmatpush1.msra.mxu0 0.0
    %359 = vmatprep.subr.mxu0 0.0
    %360 = vmatpush1.msra.mxu0 0.0
    %361 = vmatprep.subr.mxu0 0.0
    %362 = vmatpush1.msra.mxu0 0.0
    %363 = vmatprep.subr.mxu0 0.0
    %364 = vmatpush1.msra.mxu0 0.0
    %365 = vmatprep.mubr.f32.mxu0 0.0
    %366 = vmatmul.mubr.f32.gmra.mrb[0].mxu0 %v278
    %v367 = vpop.f32.mrb[0].mxu0
    %v368 = vadd.f32 %v271, %v367
    %v369 = vpop.f32.mrb[0].mxu0
    %v370 = vadd.f32 %v275, %v369
    %371 = vmatprep.mubr.f32.mxu0 0.0
    %372 = vmatmul.mubr.f32.gmra.mrb[0].mxu0 %v281
    %v373 = vpop.f32.mrb[0].mxu0
    %v374 = vadd.f32 %v271, %v373
    %v375 = vpop.f32.mrb[0].mxu0
    %v376 = vadd.f32 %v275, %v375
    %377 = vmatprep.mubr.f32.mxu0 0.0
    %378 = vmatmul.mubr.f32.gmra.mrb[0].mxu0 %v284
    %v379 = vpop.f32.mrb[0].mxu0
    %v380 = vadd.f32 %v271, %v379
    %v381 = vpop.f32.mrb[0].mxu0
    %v382 = vadd.f32 %v275, %v381
    %383 = vmatprep.mubr.f32.mxu0 0.0
    %384 = vmatmul.mubr.f32.gmra.mrb[0].mxu0 %v287
    %v385 = vpop.f32.mrb[0].mxu0
    %v386 = vadd.f32 %v271, %v385
    %v387 = vpop.f32.mrb[0].mxu0
    %v388 = vadd.f32 %v275, %v387
    %389 = vmatprep.mubr.f32.mxu0 0.0
    %390 = vmatmul.mubr.f32.gmra.mrb[0].mxu0 %v290
    %v391 = vpop.f32.mrb[0].mxu0
    %v392 = vadd.f32 %v271, %v391
    %v393 = vpop.f32.mrb[0].mxu0
    %v394 = vadd.f32 %v275, %v393
    %395 = vmatprep.mubr.f32.mxu0 0.0
    %396 = vmatmul.mubr.f32.gmra.mrb[0].mxu0 %v293
    %v397 = vpop.f32.mrb[0].mxu0
    %v398 = vadd.f32 %v271, %v397
    %v399 = vpop.f32.mrb[0].mxu0
    %v400 = vadd.f32 %v275, %v399
    %401 = vmatprep.mubr.f32.mxu0 0.0
    %402 = vmatmul.mubr.f32.gmra.mrb[0].mxu0 %v296
    %v403 = vpop.f32.mrb[0].mxu0
    %v404 = vadd.f32 %v271, %v403
    %v405 = vpop.f32.mrb[0].mxu0
    %v406 = vadd.f32 %v275, %v405
    %407 = vmatprep.mubr.f32.mxu0 0.0
    %408 = vmatmul.mubr.f32.gmra.mrb[0].mxu0 %v299
    %v409 = vpop.f32.mrb[0].mxu0
    %v410 = vadd.f32 %v271, %v409
    %v411 = vpop.f32.mrb[0].mxu0
    %v412 = vadd.f32 %v275, %v411
    %413 = vdwg.mxu0
    %414 = vst [vmem:[#allocation2] sm:$0xff] %v368
    %415 = vst [vmem:[#allocation2 + $0x8] sm:$0xff] %v370
    %416 = vst [vmem:[#allocation2 + $0x10] sm:$0xff] %v374
    %417 = vst [vmem:[#allocation2 + $0x18] sm:$0xff] %v376
    %418 = vst [vmem:[#allocation2 + $0x20] sm:$0xff] %v380
    %419 = vst [vmem:[#allocation2 + $0x28] sm:$0xff] %v382
    %420 = vst [vmem:[#allocation2 + $0x30] sm:$0xff] %v386
    %421 = vst [vmem:[#allocation2 + $0x38] sm:$0xff] %v388
    %422 = vst [vmem:[#allocation2 + $0x40] sm:$0xff] %v392
    %423 = vst [vmem:[#allocation2 + $0x48] sm:$0xff] %v394
    %424 = vst [vmem:[#allocation2 + $0x50] sm:$0xff] %v398
    %425 = vst [vmem:[#allocation2 + $0x58] sm:$0xff] %v400
    %426 = vst [vmem:[#allocation2 + $0x60] sm:$0xff] %v404
    %427 = vst [vmem:[#allocation2 + $0x68] sm:$0xff] %v406
    %428 = vst [vmem:[#allocation2 + $0x70] sm:$0xff] %v410
    %429 = vst [vmem:[#allocation2 + $0x78] sm:$0xff] %v412
    %s430 = smul.u32 0, 2
    %s431 = smul.addr %s430, 8
    %s432 = scalar_lea.vmem [#allocation2], %s431
    %v433 = vld [vmem:[%s432] sm:$0xff]
    %v434 = vld [vmem:[%s432 + $0x8] sm:$0xff]
    %s435 = smul.u32 7, 2
    %s436 = smul.addr %s435, 8
    %s437 = scalar_lea.vmem [#allocation2], %s436
    %v438 = vld [vmem:[%s437] sm:$0xff]
    %v439 = vld [vmem:[%s437 + $0x8] sm:$0xff]
    %v440 = vsel %vm56, %v433, %v438
    %v441 = vsel %vm56, %v434, %v439
    %v442 = vld [vmem:[#allocation6] sm:$0xff]
    %v443 = vld [vmem:[#allocation6 + $0x8] sm:$0xff]
    %v444 = vld [vmem:[#allocation6 + $0x10] sm:$0xff]
    %v445 = vld [vmem:[#allocation6 + $0x18] sm:$0xff]
    %v446 = vld [vmem:[#allocation6 + $0x20] sm:$0xff]
    %v447 = vld [vmem:[#allocation6 + $0x28] sm:$0xff]
    %v448 = vld [vmem:[#allocation6 + $0x30] sm:$0xff]
    %v449 = vld [vmem:[#allocation6 + $0x38] sm:$0xff]
    %v450 = vld [vmem:[#allocation6 + $0x40] sm:$0xff]
    %v451 = vld [vmem:[#allocation6 + $0x48] sm:$0xff]
    %v452 = vld [vmem:[#allocation6 + $0x50] sm:$0xff]
    %v453 = vld [vmem:[#allocation6 + $0x58] sm:$0xff]
    %v454 = vld [vmem:[#allocation6 + $0x60] sm:$0xff]
    %v455 = vld [vmem:[#allocation6 + $0x68] sm:$0xff]
    %v456 = vld [vmem:[#allocation6 + $0x70] sm:$0xff]
    %v457 = vld [vmem:[#allocation6 + $0x78] sm:$0xff]
    %v459 = vsel %vm54, 0.0, 0
    %461 = vmatprep.subr.mxu0 %v443
    %462 = vmatpush1.msra.mxu0 %v442
    %463 = vmatprep.subr.mxu0 %v445
    %464 = vmatpush1.msra.mxu0 %v444
    %465 = vmatprep.subr.mxu0 %v447
    %466 = vmatpush1.msra.mxu0 %v446
    %467 = vmatprep.subr.mxu0 %v449
    %468 = vmatpush1.msra.mxu0 %v448
    %469 = vmatprep.subr.mxu0 %v451
    %470 = vmatpush1.msra.mxu0 %v450
    %471 = vmatprep.subr.mxu0 %v453
    %472 = vmatpush1.msra.mxu0 %v452
    %473 = vmatprep.subr.mxu0 %v455
    %474 = vmatpush1.msra.mxu0 %v454
    %475 = vmatprep.subr.mxu0 %v457
    %476 = vmatpush1.msra.mxu0 %v456
    %477 = vmatprep.subr.mxu0 0.0
    %478 = vmatpush1.msra.mxu0 0.0
    %479 = vmatprep.subr.mxu0 0.0
    %480 = vmatpush1.msra.mxu0 0.0
    %481 = vmatprep.subr.mxu0 0.0
    %482 = vmatpush1.msra.mxu0 0.0
    %483 = vmatprep.subr.mxu0 0.0
    %484 = vmatpush1.msra.mxu0 0.0
    %485 = vmatprep.subr.mxu0 0.0
    %486 = vmatpush1.msra.mxu0 0.0
    %487 = vmatprep.subr.mxu0 0.0
    %488 = vmatpush1.msra.mxu0 0.0
    %489 = vmatprep.subr.mxu0 0.0
    %490 = vmatpush1.msra.mxu0 0.0
    %491 = vmatprep.subr.mxu0 0.0
    %492 = vmatpush1.msra.mxu0 0.0
    %493 = vmatprep.subr.mxu0 0.0
    %494 = vmatpush1.msra.mxu0 0.0
    %495 = vmatprep.subr.mxu0 0.0
    %496 = vmatpush1.msra.mxu0 0.0
    %497 = vmatprep.subr.mxu0 0.0
    %498 = vmatpush1.msra.mxu0 0.0
    %499 = vmatprep.subr.mxu0 0.0
    %500 = vmatpush1.msra.mxu0 0.0
    %501 = vmatprep.subr.mxu0 0.0
    %502 = vmatpush1.msra.mxu0 0.0
    %503 = vmatprep.subr.mxu0 0.0
    %504 = vmatpush1.msra.mxu0 0.0
    %505 = vmatprep.subr.mxu0 0.0
    %506 = vmatpush1.msra.mxu0 0.0
    %507 = vmatprep.subr.mxu0 0.0
    %508 = vmatpush1.msra.mxu0 0.0
    %509 = vmatprep.subr.mxu0 0.0
    %510 = vmatpush1.msra.mxu0 0.0
    %511 = vmatprep.subr.mxu0 0.0
    %512 = vmatpush1.msra.mxu0 0.0
    %513 = vmatprep.subr.mxu0 0.0
    %514 = vmatpush1.msra.mxu0 0.0
    %515 = vmatprep.subr.mxu0 0.0
    %516 = vmatpush1.msra.mxu0 0.0
    %517 = vmatprep.subr.mxu0 0.0
    %518 = vmatpush1.msra.mxu0 0.0
    %519 = vmatprep.subr.mxu0 0.0
    %520 = vmatpush1.msra.mxu0 0.0
    %521 = vmatprep.subr.mxu0 0.0
    %522 = vmatpush1.msra.mxu0 0.0
    %523 = vmatprep.subr.mxu0 0.0
    %524 = vmatpush1.msra.mxu0 0.0
    %525 = vmatprep.mubr.f32.mxu0 0.0
    %526 = vmatmul.mubr.f32.gmra.mrb[0].mxu0 %v459
    %v527 = vpop.f32.mrb[0].mxu0
    %v528 = vadd.f32 0.0, %v527
    %v529 = vpop.f32.mrb[0].mxu0
    %v530 = vadd.f32 0.0, %v529
    %531 = vdwg.mxu0
    %v532 = vadd.f32 %v440, %v528
    %v533 = vadd.f32 %v441, %v530
    %v534 = vxor.u32 %v532, 2147483648
    %v535 = vxor.u32 %v533, 2147483648
    %v536 = vmul.f32 %v534, 1.442695
    %v537 = vpow.pop %v536
    %v538 = vmul.f32 %v535, 1.442695
    %v539 = vpow.pop %v538
    %v540 = vadd.f32 %v537, 1.0
    %v541 = vadd.f32 %v539, 1.0
    %v542 = vrcp.pop %v540
    %v543 = vmul.f32 1.0, %v542
    %v544 = vrcp.pop %v541
    %v545 = vmul.f32 1.0, %v544
    %v546 = vtanh.pop %v533
    %v547 = vmul.f32 %v543, 0.0
    %v548 = vmul.f32 %v543, %v546
    %550 = vrot.lane.b32.xlu0 %v548, 64
    %v551 = vpop.permute.xlu0 %550
    %v553 = vadd.f32 %v547, %v551
    %v554 = vtanh.pop %v553
    %v555 = vmul.f32 %v545, %v554
    %v556 = vsel %vm51, 0, 7
    %557 = vset.pattern.permute.xlu0 0
    %558 = vperm.xlu0 %557, %v48
    %v559 = vpop.permute.xlu0 %558
    %vm560 = vcmp.lt.s32.totalorder %v556, %v559
    %562 = vrot.lane.b32.xlu0 %v555, 64
    %v563 = vpop.permute.xlu0 %562
    %v565 = vsel %vm560, %v563, 0.0
    %567 = vrot.lane.b32.xlu0 %v553, 64
    %v568 = vpop.permute.xlu0 %567
    %v570 = vsel %vm560, %v568, 0.0
    %vm571 = vcmask 261120
    %572 = vst.msk [vmem:[#allocation3] sm:$0xff] %vm571, %v565
    %s573 = scalar_lea.vmem [#allocation3], 56
    %vm574 = vcmask 523520
    %575 = vst.msk [vmem:[%s573] sm:$0xff] %vm574, %v565
    %s576 = smul.u32 1, 2
    %s577 = smul.addr %s576, 8
    %s578 = scalar_lea.vmem [#allocation2], %s577
    %v579 = vld [vmem:[%s578] sm:$0xff]
    %v580 = vld [vmem:[%s578 + $0x8] sm:$0xff]
    %s581 = smul.u32 6, 2
    %s582 = smul.addr %s581, 8
    %s583 = scalar_lea.vmem [#allocation2], %s582
    %v584 = vld [vmem:[%s583] sm:$0xff]
    %v585 = vld [vmem:[%s583 + $0x8] sm:$0xff]
    %v586 = vsel %vm56, %v579, %v584
    %v587 = vsel %vm56, %v580, %v585
    %v588 = vld [vmem:[#allocation6] sm:$0xff]
    %v589 = vld [vmem:[#allocation6 + $0x8] sm:$0xff]
    %v590 = vld [vmem:[#allocation6 + $0x10] sm:$0xff]
    %v591 = vld [vmem:[#allocation6 + $0x18] sm:$0xff]
    %v592 = vld [vmem:[#allocation6 + $0x20] sm:$0xff]
    %v593 = vld [vmem:[#allocation6 + $0x28] sm:$0xff]
    %v594 = vld [vmem:[#allocation6 + $0x30] sm:$0xff]
    %v595 = vld [vmem:[#allocation6 + $0x38] sm:$0xff]
    %v596 = vld [vmem:[#allocation6 + $0x40] sm:$0xff]
    %v597 = vld [vmem:[#allocation6 + $0x48] sm:$0xff]
    %v598 = vld [vmem:[#allocation6 + $0x50] sm:$0xff]
    %v599 = vld [vmem:[#allocation6 + $0x58] sm:$0xff]
    %v600 = vld [vmem:[#allocation6 + $0x60] sm:$0xff]
    %v601 = vld [vmem:[#allocation6 + $0x68] sm:$0xff]
    %v602 = vld [vmem:[#allocation6 + $0x70] sm:$0xff]
    %v603 = vld [vmem:[#allocation6 + $0x78] sm:$0xff]
    %v605 = vsel %vm54, %v565, 0
    %607 = vmatprep.subr.mxu0 %v589
    %608 = vmatpush1.msra.mxu0 %v588
    %609 = vmatprep.subr.mxu0 %v591
    %610 = vmatpush1.msra.mxu0 %v590
    %611 = vmatprep.subr.mxu0 %v593
    %612 = vmatpush1.msra.mxu0 %v592
    %613 = vmatprep.subr.mxu0 %v595
    %614 = vmatpush1.msra.mxu0 %v594
    %615 = vmatprep.subr.mxu0 %v597
    %616 = vmatpush1.msra.mxu0 %v596
    %617 = vmatprep.subr.mxu0 %v599
    %618 = vmatpush1.msra.mxu0 %v598
    %619 = vmatprep.subr.mxu0 %v601
    %620 = vmatpush1.msra.mxu0 %v600
    %621 = vmatprep.subr.mxu0 %v603
    %622 = vmatpush1.msra.mxu0 %v602
    %623 = vmatprep.subr.mxu0 0.0
    %624 = vmatpush1.msra.mxu0 0.0
    %625 = vmatprep.subr.mxu0 0.0
    %626 = vmatpush1.msra.mxu0 0.0
    %627 = vmatprep.subr.mxu0 0.0
    %628 = vmatpush1.msra.mxu0 0.0
    %629 = vmatprep.subr.mxu0 0.0
    %630 = vmatpush1.msra.mxu0 0.0
    %631 = vmatprep.subr.mxu0 0.0
    %632 = vmatpush1.msra.mxu0 0.0
    %633 = vmatprep.subr.mxu0 0.0
    %634 = vmatpush1.msra.mxu0 0.0
    %635 = vmatprep.subr.mxu0 0.0
    %636 = vmatpush1.msra.mxu0 0.0
    %637 = vmatprep.subr.mxu0 0.0
    %638 = vmatpush1.msra.mxu0 0.0
    %639 = vmatprep.subr.mxu0 0.0
    %640 = vmatpush1.msra.mxu0 0.0
    %641 = vmatprep.subr.mxu0 0.0
    %642 = vmatpush1.msra.mxu0 0.0
    %643 = vmatprep.subr.mxu0 0.0
    %644 = vmatpush1.msra.mxu0 0.0
    %645 = vmatprep.subr.mxu0 0.0
    %646 = vmatpush1.msra.mxu0 0.0
    %647 = vmatprep.subr.mxu0 0.0
    %648 = vmatpush1.msra.mxu0 0.0
    %649 = vmatprep.subr.mxu0 0.0
    %650 = vmatpush1.msra.mxu0 0.0
    %651 = vmatprep.subr.mxu0 0.0
    %652 = vmatpush1.msra.mxu0 0.0
    %653 = vmatprep.subr.mxu0 0.0
    %654 = vmatpush1.msra.mxu0 0.0
    %655 = vmatprep.subr.mxu0 0.0
    %656 = vmatpush1.msra.mxu0 0.0
    %657 = vmatprep.subr.mxu0 0.0
    %658 = vmatpush1.msra.mxu0 0.0
    %659 = vmatprep.subr.mxu0 0.0
    %660 = vmatpush1.msra.mxu0 0.0
    %661 = vmatprep.subr.mxu0 0.0
    %662 = vmatpush1.msra.mxu0 0.0
    %663 = vmatprep.subr.mxu0 0.0
    %664 = vmatpush1.msra.mxu0 0.0
    %665 = vmatprep.subr.mxu0 0.0
    %666 = vmatpush1.msra.mxu0 0.0
    %667 = vmatprep.subr.mxu0 0.0
    %668 = vmatpush1.msra.mxu0 0.0
    %669 = vmatprep.subr.mxu0 0.0
    %670 = vmatpush1.msra.mxu0 0.0
    %671 = vmatprep.mubr.f32.mxu0 0.0
    %672 = vmatmul.mubr.f32.gmra.mrb[0].mxu0 %v605
    %v673 = vpop.f32.mrb[0].mxu0
    %v674 = vadd.f32 0.0, %v673
    %v675 = vpop.f32.mrb[0].mxu0
    %v676 = vadd.f32 0.0, %v675
    %677 = vdwg.mxu0
    %v678 = vadd.f32 %v586, %v674
    %v679 = vadd.f32 %v587, %v676
    %v680 = vxor.u32 %v678, 2147483648
    %v681 = vxor.u32 %v679, 2147483648
    %v682 = vmul.f32 %v680, 1.442695
    %v683 = vpow.pop %v682
    %v684 = vmul.f32 %v681, 1.442695
    %v685 = vpow.pop %v684
    %v686 = vadd.f32 %v683, 1.0
    %v687 = vadd.f32 %v685, 1.0
    %v688 = vrcp.pop %v686
    %v689 = vmul.f32 1.0, %v688
    %v690 = vrcp.pop %v687
    %v691 = vmul.f32 1.0, %v690
    %v692 = vtanh.pop %v679
    %694 = vrot.lane.b32.xlu0 %v570, 64
    %v695 = vpop.permute.xlu0 %694
    %v697 = vmul.f32 %v689, %v695
    %v698 = vmul.f32 %v689, %v692
    %700 = vrot.lane.b32.xlu0 %v698, 64
    %v701 = vpop.permute.xlu0 %700
    %v703 = vadd.f32 %v697, %v701
    %v704 = vtanh.pop %v703
    %v705 = vmul.f32 %v691, %v704
    %v706 = vsel %vm51, 1, 6
    %vm707 = vcmp.lt.s32.totalorder %v706, %v559
    %709 = vrot.lane.b32.xlu0 %v705, 64
    %v710 = vpop.permute.xlu0 %709
    %v712 = vsel %vm707, %v710, %v565
    %714 = vrot.lane.b32.xlu0 %v703, 64
    %v715 = vpop.permute.xlu0 %714
    %v717 = vsel %vm707, %v715, %v570
    %s718 = scalar_lea.vmem [#allocation3], 8
    %719 = vst.msk [vmem:[%s718] sm:$0xff] %vm571, %v712
    %s720 = scalar_lea.vmem [#allocation3], 48
    %721 = vst.msk [vmem:[%s720] sm:$0xff] %vm574, %v712
    %s722 = smul.u32 2, 2
    %s723 = smul.addr %s722, 8
    %s724 = scalar_lea.vmem [#allocation2], %s723
    %v725 = vld [vmem:[%s724] sm:$0xff]
    %v726 = vld [vmem:[%s724 + $0x8] sm:$0xff]
    %s727 = smul.u32 5, 2
    %s728 = smul.addr %s727, 8
    %s729 = scalar_lea.vmem [#allocation2], %s728
    %v730 = vld [vmem:[%s729] sm:$0xff]
    %v731 = vld [vmem:[%s729 + $0x8] sm:$0xff]
    %v732 = vsel %vm56, %v725, %v730
    %v733 = vsel %vm56, %v726, %v731
    %v734 = vld [vmem:[#allocation6] sm:$0xff]
    %v735 = vld [vmem:[#allocation6 + $0x8] sm:$0xff]
    %v736 = vld [vmem:[#allocation6 + $0x10] sm:$0xff]
    %v737 = vld [vmem:[#allocation6 + $0x18] sm:$0xff]
    %v738 = vld [vmem:[#allocation6 + $0x20] sm:$0xff]
    %v739 = vld [vmem:[#allocation6 + $0x28] sm:$0xff]
    %v740 = vld [vmem:[#allocation6 + $0x30] sm:$0xff]
    %v741 = vld [vmem:[#allocation6 + $0x38] sm:$0xff]
    %v742 = vld [vmem:[#allocation6 + $0x40] sm:$0xff]
    %v743 = vld [vmem:[#allocation6 + $0x48] sm:$0xff]
    %v744 = vld [vmem:[#allocation6 + $0x50] sm:$0xff]
    %v745 = vld [vmem:[#allocation6 + $0x58] sm:$0xff]
    %v746 = vld [vmem:[#allocation6 + $0x60] sm:$0xff]
    %v747 = vld [vmem:[#allocation6 + $0x68] sm:$0xff]
    %v748 = vld [vmem:[#allocation6 + $0x70] sm:$0xff]
    %v749 = vld [vmem:[#allocation6 + $0x78] sm:$0xff]
    %v751 = vsel %vm54, %v712, 0
    %753 = vmatprep.subr.mxu0 %v735
    %754 = vmatpush1.msra.mxu0 %v734
    %755 = vmatprep.subr.mxu0 %v737
    %756 = vmatpush1.msra.mxu0 %v736
    %757 = vmatprep.subr.mxu0 %v739
    %758 = vmatpush1.msra.mxu0 %v738
    %759 = vmatprep.subr.mxu0 %v741
    %760 = vmatpush1.msra.mxu0 %v740
    %761 = vmatprep.subr.mxu0 %v743
    %762 = vmatpush1.msra.mxu0 %v742
    %763 = vmatprep.subr.mxu0 %v745
    %764 = vmatpush1.msra.mxu0 %v744
    %765 = vmatprep.subr.mxu0 %v747
    %766 = vmatpush1.msra.mxu0 %v746
    %767 = vmatprep.subr.mxu0 %v749
    %768 = vmatpush1.msra.mxu0 %v748
    %769 = vmatprep.subr.mxu0 0.0
    %770 = vmatpush1.msra.mxu0 0.0
    %771 = vmatprep.subr.mxu0 0.0
    %772 = vmatpush1.msra.mxu0 0.0
    %773 = vmatprep.subr.mxu0 0.0
    %774 = vmatpush1.msra.mxu0 0.0
    %775 = vmatprep.subr.mxu0 0.0
    %776 = vmatpush1.msra.mxu0 0.0
    %777 = vmatprep.subr.mxu0 0.0
    %778 = vmatpush1.msra.mxu0 0.0
    %779 = vmatprep.subr.mxu0 0.0
    %780 = vmatpush1.msra.mxu0 0.0
    %781 = vmatprep.subr.mxu0 0.0
    %782 = vmatpush1.msra.mxu0 0.0
    %783 = vmatprep.subr.mxu0 0.0
    %784 = vmatpush1.msra.mxu0 0.0
    %785 = vmatprep.subr.mxu0 0.0
    %786 = vmatpush1.msra.mxu0 0.0
    %787 = vmatprep.subr.mxu0 0.0
    %788 = vmatpush1.msra.mxu0 0.0
    %789 = vmatprep.subr.mxu0 0.0
    %790 = vmatpush1.msra.mxu0 0.0
    %791 = vmatprep.subr.mxu0 0.0
    %792 = vmatpush1.msra.mxu0 0.0
    %793 = vmatprep.subr.mxu0 0.0
    %794 = vmatpush1.msra.mxu0 0.0
    %795 = vmatprep.subr.mxu0 0.0
    %796 = vmatpush1.msra.mxu0 0.0
    %797 = vmatprep.subr.mxu0 0.0
    %798 = vmatpush1.msra.mxu0 0.0
    %799 = vmatprep.subr.mxu0 0.0
    %800 = vmatpush1.msra.mxu0 0.0
    %801 = vmatprep.subr.mxu0 0.0
    %802 = vmatpush1.msra.mxu0 0.0
    %803 = vmatprep.subr.mxu0 0.0
    %804 = vmatpush1.msra.mxu0 0.0
    %805 = vmatprep.subr.mxu0 0.0
    %806 = vmatpush1.msra.mxu0 0.0
    %807 = vmatprep.subr.mxu0 0.0
    %808 = vmatpush1.msra.mxu0 0.0
    %809 = vmatprep.subr.mxu0 0.0
    %810 = vmatpush1.msra.mxu0 0.0
    %811 = vmatprep.subr.mxu0 0.0
    %812 = vmatpush1.msra.mxu0 0.0
    %813 = vmatprep.subr.mxu0 0.0
    %814 = vmatpush1.msra.mxu0 0.0
    %815 = vmatprep.subr.mxu0 0.0
    %816 = vmatpush1.msra.mxu0 0.0
    %817 = vmatprep.mubr.f32.mxu0 0.0
    %818 = vmatmul.mubr.f32.gmra.mrb[0].mxu0 %v751
    %v819 = vpop.f32.mrb[0].mxu0
    %v820 = vadd.f32 0.0, %v819
    %v821 = vpop.f32.mrb[0].mxu0
    %v822 = vadd.f32 0.0, %v821
    %823 = vdwg.mxu0
    %v824 = vadd.f32 %v732, %v820
    %v825 = vadd.f32 %v733, %v822
    %v826 = vxor.u32 %v824, 2147483648
    %v827 = vxor.u32 %v825, 2147483648
    %v828 = vmul.f32 %v826, 1.442695
    %v829 = vpow.pop %v828
    %v830 = vmul.f32 %v827, 1.442695
    %v831 = vpow.pop %v830
    %v832 = vadd.f32 %v829, 1.0
    %v833 = vadd.f32 %v831, 1.0
    %v834 = vrcp.pop %v832
    %v835 = vmul.f32 1.0, %v834
    %v836 = vrcp.pop %v833
    %v837 = vmul.f32 1.0, %v836
    %v838 = vtanh.pop %v825
    %840 = vrot.lane.b32.xlu0 %v717, 64
    %v841 = vpop.permute.xlu0 %840
    %v843 = vmul.f32 %v835, %v841
    %v844 = vmul.f32 %v835, %v838
    %846 = vrot.lane.b32.xlu0 %v844, 64
    %v847 = vpop.permute.xlu0 %846
    %v849 = vadd.f32 %v843, %v847
    %v850 = vtanh.pop %v849
    %v851 = vmul.f32 %v837, %v850
    %v852 = vsel %vm51, 2, 5
    %vm853 = vcmp.lt.s32.totalorder %v852, %v559
    %855 = vrot.lane.b32.xlu0 %v851, 64
    %v856 = vpop.permute.xlu0 %855
    %v858 = vsel %vm853, %v856, %v712
    %860 = vrot.lane.b32.xlu0 %v849, 64
    %v861 = vpop.permute.xlu0 %860
    %v863 = vsel %vm853, %v861, %v717
    %s864 = scalar_lea.vmem [#allocation3], 16
    %865 = vst.msk [vmem:[%s864] sm:$0xff] %vm571, %v858
    %s866 = scalar_lea.vmem [#allocation3], 40
    %867 = vst.msk [vmem:[%s866] sm:$0xff] %vm574, %v858
    %s868 = smul.u32 3, 2
    %s869 = smul.addr %s868, 8
    %s870 = scalar_lea.vmem [#allocation2], %s869
    %v871 = vld [vmem:[%s870] sm:$0xff]
    %v872 = vld [vmem:[%s870 + $0x8] sm:$0xff]
    %s873 = smul.u32 4, 2
    %s874 = smul.addr %s873, 8
    %s875 = scalar_lea.vmem [#allocation2], %s874
    %v876 = vld [vmem:[%s875] sm:$0xff]
    %v877 = vld [vmem:[%s875 + $0x8] sm:$0xff]
    %v878 = vsel %vm56, %v871, %v876
    %v879 = vsel %vm56, %v872, %v877
    %v880 = vld [vmem:[#allocation6] sm:$0xff]
    %v881 = vld [vmem:[#allocation6 + $0x8] sm:$0xff]
    %v882 = vld [vmem:[#allocation6 + $0x10] sm:$0xff]
    %v883 = vld [vmem:[#allocation6 + $0x18] sm:$0xff]
    %v884 = vld [vmem:[#allocation6 + $0x20] sm:$0xff]
    %v885 = vld [vmem:[#allocation6 + $0x28] sm:$0xff]
    %v886 = vld [vmem:[#allocation6 + $0x30] sm:$0xff]
    %v887 = vld [vmem:[#allocation6 + $0x38] sm:$0xff]
    %v888 = vld [vmem:[#allocation6 + $0x40] sm:$0xff]
    %v889 = vld [vmem:[#allocation6 + $0x48] sm:$0xff]
    %v890 = vld [vmem:[#allocation6 + $0x50] sm:$0xff]
    %v891 = vld [vmem:[#allocation6 + $0x58] sm:$0xff]
    %v892 = vld [vmem:[#allocation6 + $0x60] sm:$0xff]
    %v893 = vld [vmem:[#allocation6 + $0x68] sm:$0xff]
    %v894 = vld [vmem:[#allocation6 + $0x70] sm:$0xff]
    %v895 = vld [vmem:[#allocation6 + $0x78] sm:$0xff]
    %v897 = vsel %vm54, %v858, 0
    %899 = vmatprep.subr.mxu0 %v881
    %900 = vmatpush1.msra.mxu0 %v880
    %901 = vmatprep.subr.mxu0 %v883
    %902 = vmatpush1.msra.mxu0 %v882
    %903 = vmatprep.subr.mxu0 %v885
    %904 = vmatpush1.msra.mxu0 %v884
    %905 = vmatprep.subr.mxu0 %v887
    %906 = vmatpush1.msra.mxu0 %v886
    %907 = vmatprep.subr.mxu0 %v889
    %908 = vmatpush1.msra.mxu0 %v888
    %909 = vmatprep.subr.mxu0 %v891
    %910 = vmatpush1.msra.mxu0 %v890
    %911 = vmatprep.subr.mxu0 %v893
    %912 = vmatpush1.msra.mxu0 %v892
    %913 = vmatprep.subr.mxu0 %v895
    %914 = vmatpush1.msra.mxu0 %v894
    %915 = vmatprep.subr.mxu0 0.0
    %916 = vmatpush1.msra.mxu0 0.0
    %917 = vmatprep.subr.mxu0 0.0
    %918 = vmatpush1.msra.mxu0 0.0
    %919 = vmatprep.subr.mxu0 0.0
    %920 = vmatpush1.msra.mxu0 0.0
    %921 = vmatprep.subr.mxu0 0.0
    %922 = vmatpush1.msra.mxu0 0.0
    %923 = vmatprep.subr.mxu0 0.0
    %924 = vmatpush1.msra.mxu0 0.0
    %925 = vmatprep.subr.mxu0 0.0
    %926 = vmatpush1.msra.mxu0 0.0
    %927 = vmatprep.subr.mxu0 0.0
    %928 = vmatpush1.msra.mxu0 0.0
    %929 = vmatprep.subr.mxu0 0.0
    %930 = vmatpush1.msra.mxu0 0.0
    %931 = vmatprep.subr.mxu0 0.0
    %932 = vmatpush1.msra.mxu0 0.0
    %933 = vmatprep.subr.mxu0 0.0
    %934 = vmatpush1.msra.mxu0 0.0
    %935 = vmatprep.subr.mxu0 0.0
    %936 = vmatpush1.msra.mxu0 0.0
    %937 = vmatprep.subr.mxu0 0.0
    %938 = vmatpush1.msra.mxu0 0.0
    %939 = vmatprep.subr.mxu0 0.0
    %940 = vmatpush1.msra.mxu0 0.0
    %941 = vmatprep.subr.mxu0 0.0
    %942 = vmatpush1.msra.mxu0 0.0
    %943 = vmatprep.subr.mxu0 0.0
    %944 = vmatpush1.msra.mxu0 0.0
    %945 = vmatprep.subr.mxu0 0.0
    %946 = vmatpush1.msra.mxu0 0.0
    %947 = vmatprep.subr.mxu0 0.0
    %948 = vmatpush1.msra.mxu0 0.0
    %949 = vmatprep.subr.mxu0 0.0
    %950 = vmatpush1.msra.mxu0 0.0
    %951 = vmatprep.subr.mxu0 0.0
    %952 = vmatpush1.msra.mxu0 0.0
    %953 = vmatprep.subr.mxu0 0.0
    %954 = vmatpush1.msra.mxu0 0.0
    %955 = vmatprep.subr.mxu0 0.0
    %956 = vmatpush1.msra.mxu0 0.0
    %957 = vmatprep.subr.mxu0 0.0
    %958 = vmatpush1.msra.mxu0 0.0
    %959 = vmatprep.subr.mxu0 0.0
    %960 = vmatpush1.msra.mxu0 0.0
    %961 = vmatprep.subr.mxu0 0.0
    %962 = vmatpush1.msra.mxu0 0.0
    %963 = vmatprep.mubr.f32.mxu0 0.0
    %964 = vmatmul.mubr.f32.gmra.mrb[0].mxu0 %v897
    %v965 = vpop.f32.mrb[0].mxu0
    %v966 = vadd.f32 0.0, %v965
    %v967 = vpop.f32.mrb[0].mxu0
    %v968 = vadd.f32 0.0, %v967
    %969 = vdwg.mxu0
    %v970 = vadd.f32 %v878, %v966
    %v971 = vadd.f32 %v879, %v968
    %v972 = vxor.u32 %v970, 2147483648
    %v973 = vxor.u32 %v971, 2147483648
    %v974 = vmul.f32 %v972, 1.442695
    %v975 = vpow.pop %v974
    %v976 = vmul.f32 %v973, 1.442695
    %v977 = vpow.pop %v976
    %v978 = vadd.f32 %v975, 1.0
    %v979 = vadd.f32 %v977, 1.0
    %v980 = vrcp.pop %v978
    %v981 = vmul.f32 1.0, %v980
    %v982 = vrcp.pop %v979
    %v983 = vmul.f32 1.0, %v982
    %v984 = vtanh.pop %v971
    %986 = vrot.lane.b32.xlu0 %v863, 64
    %v987 = vpop.permute.xlu0 %986
    %v989 = vmul.f32 %v981, %v987
    %v990 = vmul.f32 %v981, %v984
    %992 = vrot.lane.b32.xlu0 %v990, 64
    %v993 = vpop.permute.xlu0 %992
    %v995 = vadd.f32 %v989, %v993
    %v996 = vtanh.pop %v995
    %v997 = vmul.f32 %v983, %v996
    %v998 = vsel %vm51, 3, 4
    %vm999 = vcmp.lt.s32.totalorder %v998, %v559
    %1001 = vrot.lane.b32.xlu0 %v997, 64
    %v1002 = vpop.permute.xlu0 %1001
    %v1004 = vsel %vm999, %v1002, %v858
    %1006 = vrot.lane.b32.xlu0 %v995, 64
    %v1007 = vpop.permute.xlu0 %1006
    %v1009 = vsel %vm999, %v1007, %v863
    %s1010 = scalar_lea.vmem [#allocation3], 24
    %1011 = vst.msk [vmem:[%s1010] sm:$0xff] %vm571, %v1004
    %s1012 = scalar_lea.vmem [#allocation3], 32
    %1013 = vst.msk [vmem:[%s1012] sm:$0xff] %vm574, %v1004
    %v1014 = vld [vmem:[%s875] sm:$0xff]
    %v1015 = vld [vmem:[%s875 + $0x8] sm:$0xff]
    %v1016 = vld [vmem:[%s870] sm:$0xff]
    %v1017 = vld [vmem:[%s870 + $0x8] sm:$0xff]
    %v1018 = vsel %vm56, %v1014, %v1016
    %v1019 = vsel %vm56, %v1015, %v1017
    %v1020 = vld [vmem:[#allocation6] sm:$0xff]
    %v1021 = vld [vmem:[#allocation6 + $0x8] sm:$0xff]
    %v1022 = vld [vmem:[#allocation6 + $0x10] sm:$0xff]
    %v1023 = vld [vmem:[#allocation6 + $0x18] sm:$0xff]
    %v1024 = vld [vmem:[#allocation6 + $0x20] sm:$0xff]
    %v1025 = vld [vmem:[#allocation6 + $0x28] sm:$0xff]
    %v1026 = vld [vmem:[#allocation6 + $0x30] sm:$0xff]
    %v1027 = vld [vmem:[#allocation6 + $0x38] sm:$0xff]
    %v1028 = vld [vmem:[#allocation6 + $0x40] sm:$0xff]
    %v1029 = vld [vmem:[#allocation6 + $0x48] sm:$0xff]
    %v1030 = vld [vmem:[#allocation6 + $0x50] sm:$0xff]
    %v1031 = vld [vmem:[#allocation6 + $0x58] sm:$0xff]
    %v1032 = vld [vmem:[#allocation6 + $0x60] sm:$0xff]
    %v1033 = vld [vmem:[#allocation6 + $0x68] sm:$0xff]
    %v1034 = vld [vmem:[#allocation6 + $0x70] sm:$0xff]
    %v1035 = vld [vmem:[#allocation6 + $0x78] sm:$0xff]
    %v1037 = vsel %vm54, %v1004, 0
    %1039 = vmatprep.subr.mxu0 %v1021
    %1040 = vmatpush1.msra.mxu0 %v1020
    %1041 = vmatprep.subr.mxu0 %v1023
    %1042 = vmatpush1.msra.mxu0 %v1022
    %1043 = vmatprep.subr.mxu0 %v1025
    %1044 = vmatpush1.msra.mxu0 %v1024
    %1045 = vmatprep.subr.mxu0 %v1027
    %1046 = vmatpush1.msra.mxu0 %v1026
    %1047 = vmatprep.subr.mxu0 %v1029
    %1048 = vmatpush1.msra.mxu0 %v1028
    %1049 = vmatprep.subr.mxu0 %v1031
    %1050 = vmatpush1.msra.mxu0 %v1030
    %1051 = vmatprep.subr.mxu0 %v1033
    %1052 = vmatpush1.msra.mxu0 %v1032
    %1053 = vmatprep.subr.mxu0 %v1035
    %1054 = vmatpush1.msra.mxu0 %v1034
    %1055 = vmatprep.subr.mxu0 0.0
    %1056 = vmatpush1.msra.mxu0 0.0
    %1057 = vmatprep.subr.mxu0 0.0
    %1058 = vmatpush1.msra.mxu0 0.0
    %1059 = vmatprep.subr.mxu0 0.0
    %1060 = vmatpush1.msra.mxu0 0.0
    %1061 = vmatprep.subr.mxu0 0.0
    %1062 = vmatpush1.msra.mxu0 0.0
    %1063 = vmatprep.subr.mxu0 0.0
    %1064 = vmatpush1.msra.mxu0 0.0
    %1065 = vmatprep.subr.mxu0 0.0
    %1066 = vmatpush1.msra.mxu0 0.0
    %1067 = vmatprep.subr.mxu0 0.0
    %1068 = vmatpush1.msra.mxu0 0.0
    %1069 = vmatprep.subr.mxu0 0.0
    %1070 = vmatpush1.msra.mxu0 0.0
    %1071 = vmatprep.subr.mxu0 0.0
    %1072 = vmatpush1.msra.mxu0 0.0
    %1073 = vmatprep.subr.mxu0 0.0
    %1074 = vmatpush1.msra.mxu0 0.0
    %1075 = vmatprep.subr.mxu0 0.0
    %1076 = vmatpush1.msra.mxu0 0.0
    %1077 = vmatprep.subr.mxu0 0.0
    %1078 = vmatpush1.msra.mxu0 0.0
    %1079 = vmatprep.subr.mxu0 0.0
    %1080 = vmatpush1.msra.mxu0 0.0
    %1081 = vmatprep.subr.mxu0 0.0
    %1082 = vmatpush1.msra.mxu0 0.0
    %1083 = vmatprep.subr.mxu0 0.0
    %1084 = vmatpush1.msra.mxu0 0.0
    %1085 = vmatprep.subr.mxu0 0.0
    %1086 = vmatpush1.msra.mxu0 0.0
    %1087 = vmatprep.subr.mxu0 0.0
    %1088 = vmatpush1.msra.mxu0 0.0
    %1089 = vmatprep.subr.mxu0 0.0
    %1090 = vmatpush1.msra.mxu0 0.0
    %1091 = vmatprep.subr.mxu0 0.0
    %1092 = vmatpush1.msra.mxu0 0.0
    %1093 = vmatprep.subr.mxu0 0.0
    %1094 = vmatpush1.msra.mxu0 0.0
    %1095 = vmatprep.subr.mxu0 0.0
    %1096 = vmatpush1.msra.mxu0 0.0
    %1097 = vmatprep.subr.mxu0 0.0
    %1098 = vmatpush1.msra.mxu0 0.0
    %1099 = vmatprep.subr.mxu0 0.0
    %1100 = vmatpush1.msra.mxu0 0.0
    %1101 = vmatprep.subr.mxu0 0.0
    %1102 = vmatpush1.msra.mxu0 0.0
    %1103 = vmatprep.mubr.f32.mxu0 0.0
    %1104 = vmatmul.mubr.f32.gmra.mrb[0].mxu0 %v1037
    %v1105 = vpop.f32.mrb[0].mxu0
    %v1106 = vadd.f32 0.0, %v1105
    %v1107 = vpop.f32.mrb[0].mxu0
    %v1108 = vadd.f32 0.0, %v1107
    %1109 = vdwg.mxu0
    %v1110 = vadd.f32 %v1018, %v1106
    %v1111 = vadd.f32 %v1019, %v1108
    %v1112 = vxor.u32 %v1110, 2147483648
    %v1113 = vxor.u32 %v1111, 2147483648
    %v1114 = vmul.f32 %v1112, 1.442695
    %v1115 = vpow.pop %v1114
    %v1116 = vmul.f32 %v1113, 1.442695
    %v1117 = vpow.pop %v1116
    %v1118 = vadd.f32 %v1115, 1.0
    %v1119 = vadd.f32 %v1117, 1.0
    %v1120 = vrcp.pop %v1118
    %v1121 = vmul.f32 1.0, %v1120
    %v1122 = vrcp.pop %v1119
    %v1123 = vmul.f32 1.0, %v1122
    %v1124 = vtanh.pop %v1111
    %1126 = vrot.lane.b32.xlu0 %v1009, 64
    %v1127 = vpop.permute.xlu0 %1126
    %v1129 = vmul.f32 %v1121, %v1127
    %v1130 = vmul.f32 %v1121, %v1124
    %1132 = vrot.lane.b32.xlu0 %v1130, 64
    %v1133 = vpop.permute.xlu0 %1132
    %v1135 = vadd.f32 %v1129, %v1133
    %v1136 = vtanh.pop %v1135
    %v1137 = vmul.f32 %v1123, %v1136
    %v1138 = vsel %vm51, 4, 3
    %vm1139 = vcmp.lt.s32.totalorder %v1138, %v559
    %1141 = vrot.lane.b32.xlu0 %v1137, 64
    %v1142 = vpop.permute.xlu0 %1141
    %v1144 = vsel %vm1139, %v1142, %v1004
    %1146 = vrot.lane.b32.xlu0 %v1135, 64
    %v1147 = vpop.permute.xlu0 %1146
    %v1149 = vsel %vm1139, %v1147, %v1009
    %1150 = vst.msk [vmem:[%s1012] sm:$0xff] %vm571, %v1144
    %1151 = vst.msk [vmem:[%s1010] sm:$0xff] %vm574, %v1144
    %v1152 = vld [vmem:[%s729] sm:$0xff]
    %v1153 = vld [vmem:[%s729 + $0x8] sm:$0xff]
    %v1154 = vld [vmem:[%s724] sm:$0xff]
    %v1155 = vld [vmem:[%s724 + $0x8] sm:$0xff]
    %v1156 = vsel %vm56, %v1152, %v1154
    %v1157 = vsel %vm56, %v1153, %v1155
    %v1158 = vld [vmem:[#allocation6] sm:$0xff]
    %v1159 = vld [vmem:[#allocation6 + $0x8] sm:$0xff]
    %v1160 = vld [vmem:[#allocation6 + $0x10] sm:$0xff]
    %v1161 = vld [vmem:[#allocation6 + $0x18] sm:$0xff]
    %v1162 = vld [vmem:[#allocation6 + $0x20] sm:$0xff]
    %v1163 = vld [vmem:[#allocation6 + $0x28] sm:$0xff]
    %v1164 = vld [vmem:[#allocation6 + $0x30] sm:$0xff]
    %v1165 = vld [vmem:[#allocation6 + $0x38] sm:$0xff]
    %v1166 = vld [vmem:[#allocation6 + $0x40] sm:$0xff]
    %v1167 = vld [vmem:[#allocation6 + $0x48] sm:$0xff]
    %v1168 = vld [vmem:[#allocation6 + $0x50] sm:$0xff]
    %v1169 = vld [vmem:[#allocation6 + $0x58] sm:$0xff]
    %v1170 = vld [vmem:[#allocation6 + $0x60] sm:$0xff]
    %v1171 = vld [vmem:[#allocation6 + $0x68] sm:$0xff]
    %v1172 = vld [vmem:[#allocation6 + $0x70] sm:$0xff]
    %v1173 = vld [vmem:[#allocation6 + $0x78] sm:$0xff]
    %v1175 = vsel %vm54, %v1144, 0
    %1177 = vmatprep.subr.mxu0 %v1159
    %1178 = vmatpush1.msra.mxu0 %v1158
    %1179 = vmatprep.subr.mxu0 %v1161
    %1180 = vmatpush1.msra.mxu0 %v1160
    %1181 = vmatprep.subr.mxu0 %v1163
    %1182 = vmatpush1.msra.mxu0 %v1162
    %1183 = vmatprep.subr.mxu0 %v1165
    %1184 = vmatpush1.msra.mxu0 %v1164
    %1185 = vmatprep.subr.mxu0 %v1167
    %1186 = vmatpush1.msra.mxu0 %v1166
    %1187 = vmatprep.subr.mxu0 %v1169
    %1188 = vmatpush1.msra.mxu0 %v1168
    %1189 = vmatprep.subr.mxu0 %v1171
    %1190 = vmatpush1.msra.mxu0 %v1170
    %1191 = vmatprep.subr.mxu0 %v1173
    %1192 = vmatpush1.msra.mxu0 %v1172
    %1193 = vmatprep.subr.mxu0 0.0
    %1194 = vmatpush1.msra.mxu0 0.0
    %1195 = vmatprep.subr.mxu0 0.0
    %1196 = vmatpush1.msra.mxu0 0.0
    %1197 = vmatprep.subr.mxu0 0.0
    %1198 = vmatpush1.msra.mxu0 0.0
    %1199 = vmatprep.subr.mxu0 0.0
    %1200 = vmatpush1.msra.mxu0 0.0
    %1201 = vmatprep.subr.mxu0 0.0
    %1202 = vmatpush1.msra.mxu0 0.0
    %1203 = vmatprep.subr.mxu0 0.0
    %1204 = vmatpush1.msra.mxu0 0.0
    %1205 = vmatprep.subr.mxu0 0.0
    %1206 = vmatpush1.msra.mxu0 0.0
    %1207 = vmatprep.subr.mxu0 0.0
    %1208 = vmatpush1.msra.mxu0 0.0
    %1209 = vmatprep.subr.mxu0 0.0
    %1210 = vmatpush1.msra.mxu0 0.0
    %1211 = vmatprep.subr.mxu0 0.0
    %1212 = vmatpush1.msra.mxu0 0.0
    %1213 = vmatprep.subr.mxu0 0.0
    %1214 = vmatpush1.msra.mxu0 0.0
    %1215 = vmatprep.subr.mxu0 0.0
    %1216 = vmatpush1.msra.mxu0 0.0
    %1217 = vmatprep.subr.mxu0 0.0
    %1218 = vmatpush1.msra.mxu0 0.0
    %1219 = vmatprep.subr.mxu0 0.0
    %1220 = vmatpush1.msra.mxu0 0.0
    %1221 = vmatprep.subr.mxu0 0.0
    %1222 = vmatpush1.msra.mxu0 0.0
    %1223 = vmatprep.subr.mxu0 0.0
    %1224 = vmatpush1.msra.mxu0 0.0
    %1225 = vmatprep.subr.mxu0 0.0
    %1226 = vmatpush1.msra.mxu0 0.0
    %1227 = vmatprep.subr.mxu0 0.0
    %1228 = vmatpush1.msra.mxu0 0.0
    %1229 = vmatprep.subr.mxu0 0.0
    %1230 = vmatpush1.msra.mxu0 0.0
    %1231 = vmatprep.subr.mxu0 0.0
    %1232 = vmatpush1.msra.mxu0 0.0
    %1233 = vmatprep.subr.mxu0 0.0
    %1234 = vmatpush1.msra.mxu0 0.0
    %1235 = vmatprep.subr.mxu0 0.0
    %1236 = vmatpush1.msra.mxu0 0.0
    %1237 = vmatprep.subr.mxu0 0.0
    %1238 = vmatpush1.msra.mxu0 0.0
    %1239 = vmatprep.subr.mxu0 0.0
    %1240 = vmatpush1.msra.mxu0 0.0
    %1241 = vmatprep.mubr.f32.mxu0 0.0
    %1242 = vmatmul.mubr.f32.gmra.mrb[0].mxu0 %v1175
    %v1243 = vpop.f32.mrb[0].mxu0
    %v1244 = vadd.f32 0.0, %v1243
    %v1245 = vpop.f32.mrb[0].mxu0
    %v1246 = vadd.f32 0.0, %v1245
    %1247 = vdwg.mxu0
    %v1248 = vadd.f32 %v1156, %v1244
    %v1249 = vadd.f32 %v1157, %v1246
    %v1250 = vxor.u32 %v1248, 2147483648
    %v1251 = vxor.u32 %v1249, 2147483648
    %v1252 = vmul.f32 %v1250, 1.442695
    %v1253 = vpow.pop %v1252
    %v1254 = vmul.f32 %v1251, 1.442695
    %v1255 = vpow.pop %v1254
    %v1256 = vadd.f32 %v1253, 1.0
    %v1257 = vadd.f32 %v1255, 1.0
    %v1258 = vrcp.pop %v1256
    %v1259 = vmul.f32 1.0, %v1258
    %v1260 = vrcp.pop %v1257
    %v1261 = vmul.f32 1.0, %v1260
    %v1262 = vtanh.pop %v1249
    %1264 = vrot.lane.b32.xlu0 %v1149, 64
    %v1265 = vpop.permute.xlu0 %1264
    %v1267 = vmul.f32 %v1259, %v1265
    %v1268 = vmul.f32 %v1259, %v1262
    %1270 = vrot.lane.b32.xlu0 %v1268, 64
    %v1271 = vpop.permute.xlu0 %1270
    %v1273 = vadd.f32 %v1267, %v1271
    %v1274 = vtanh.pop %v1273
    %v1275 = vmul.f32 %v1261, %v1274
    %v1276 = vsel %vm51, 5, 2
    %vm1277 = vcmp.lt.s32.totalorder %v1276, %v559
    %1279 = vrot.lane.b32.xlu0 %v1275, 64
    %v1280 = vpop.permute.xlu0 %1279
    %v1282 = vsel %vm1277, %v1280, %v1144
    %1284 = vrot.lane.b32.xlu0 %v1273, 64
    %v1285 = vpop.permute.xlu0 %1284
    %v1287 = vsel %vm1277, %v1285, %v1149
    %1288 = vst.msk [vmem:[%s866] sm:$0xff] %vm571, %v1282
    %1289 = vst.msk [vmem:[%s864] sm:$0xff] %vm574, %v1282
    %v1290 = vld [vmem:[%s583] sm:$0xff]
    %v1291 = vld [vmem:[%s583 + $0x8] sm:$0xff]
    %v1292 = vld [vmem:[%s578] sm:$0xff]
    %v1293 = vld [vmem:[%s578 + $0x8] sm:$0xff]
    %v1294 = vsel %vm56, %v1290, %v1292
    %v1295 = vsel %vm56, %v1291, %v1293
    %v1296 = vld [vmem:[#allocation6] sm:$0xff]
    %v1297 = vld [vmem:[#allocation6 + $0x8] sm:$0xff]
    %v1298 = vld [vmem:[#allocation6 + $0x10] sm:$0xff]
    %v1299 = vld [vmem:[#allocation6 + $0x18] sm:$0xff]
    %v1300 = vld [vmem:[#allocation6 + $0x20] sm:$0xff]
    %v1301 = vld [vmem:[#allocation6 + $0x28] sm:$0xff]
    %v1302 = vld [vmem:[#allocation6 + $0x30] sm:$0xff]
    %v1303 = vld [vmem:[#allocation6 + $0x38] sm:$0xff]
    %v1304 = vld [vmem:[#allocation6 + $0x40] sm:$0xff]
    %v1305 = vld [vmem:[#allocation6 + $0x48] sm:$0xff]
    %v1306 = vld [vmem:[#allocation6 + $0x50] sm:$0xff]
    %v1307 = vld [vmem:[#allocation6 + $0x58] sm:$0xff]
    %v1308 = vld [vmem:[#allocation6 + $0x60] sm:$0xff]
    %v1309 = vld [vmem:[#allocation6 + $0x68] sm:$0xff]
    %v1310 = vld [vmem:[#allocation6 + $0x70] sm:$0xff]
    %v1311 = vld [vmem:[#allocation6 + $0x78] sm:$0xff]
    %v1313 = vsel %vm54, %v1282, 0
    %1315 = vmatprep.subr.mxu0 %v1297
    %1316 = vmatpush1.msra.mxu0 %v1296
    %1317 = vmatprep.subr.mxu0 %v1299
    %1318 = vmatpush1.msra.mxu0 %v1298
    %1319 = vmatprep.subr.mxu0 %v1301
    %1320 = vmatpush1.msra.mxu0 %v1300
    %1321 = vmatprep.subr.mxu0 %v1303
    %1322 = vmatpush1.msra.mxu0 %v1302
    %1323 = vmatprep.subr.mxu0 %v1305
    %1324 = vmatpush1.msra.mxu0 %v1304
    %1325 = vmatprep.subr.mxu0 %v1307
    %1326 = vmatpush1.msra.mxu0 %v1306
    %1327 = vmatprep.subr.mxu0 %v1309
    %1328 = vmatpush1.msra.mxu0 %v1308
    %1329 = vmatprep.subr.mxu0 %v1311
    %1330 = vmatpush1.msra.mxu0 %v1310
    %1331 = vmatprep.subr.mxu0 0.0
    %1332 = vmatpush1.msra.mxu0 0.0
    %1333 = vmatprep.subr.mxu0 0.0
    %1334 = vmatpush1.msra.mxu0 0.0
    %1335 = vmatprep.subr.mxu0 0.0
    %1336 = vmatpush1.msra.mxu0 0.0
    %1337 = vmatprep.subr.mxu0 0.0
    %1338 = vmatpush1.msra.mxu0 0.0
    %1339 = vmatprep.subr.mxu0 0.0
    %1340 = vmatpush1.msra.mxu0 0.0
    %1341 = vmatprep.subr.mxu0 0.0
    %1342 = vmatpush1.msra.mxu0 0.0
    %1343 = vmatprep.subr.mxu0 0.0
    %1344 = vmatpush1.msra.mxu0 0.0
    %1345 = vmatprep.subr.mxu0 0.0
    %1346 = vmatpush1.msra.mxu0 0.0
    %1347 = vmatprep.subr.mxu0 0.0
    %1348 = vmatpush1.msra.mxu0 0.0
    %1349 = vmatprep.subr.mxu0 0.0
    %1350 = vmatpush1.msra.mxu0 0.0
    %1351 = vmatprep.subr.mxu0 0.0
    %1352 = vmatpush1.msra.mxu0 0.0
    %1353 = vmatprep.subr.mxu0 0.0
    %1354 = vmatpush1.msra.mxu0 0.0
    %1355 = vmatprep.subr.mxu0 0.0
    %1356 = vmatpush1.msra.mxu0 0.0
    %1357 = vmatprep.subr.mxu0 0.0
    %1358 = vmatpush1.msra.mxu0 0.0
    %1359 = vmatprep.subr.mxu0 0.0
    %1360 = vmatpush1.msra.mxu0 0.0
    %1361 = vmatprep.subr.mxu0 0.0
    %1362 = vmatpush1.msra.mxu0 0.0
    %1363 = vmatprep.subr.mxu0 0.0
    %1364 = vmatpush1.msra.mxu0 0.0
    %1365 = vmatprep.subr.mxu0 0.0
    %1366 = vmatpush1.msra.mxu0 0.0
    %1367 = vmatprep.subr.mxu0 0.0
    %1368 = vmatpush1.msra.mxu0 0.0
    %1369 = vmatprep.subr.mxu0 0.0
    %1370 = vmatpush1.msra.mxu0 0.0
    %1371 = vmatprep.subr.mxu0 0.0
    %1372 = vmatpush1.msra.mxu0 0.0
    %1373 = vmatprep.subr.mxu0 0.0
    %1374 = vmatpush1.msra.mxu0 0.0
    %1375 = vmatprep.subr.mxu0 0.0
    %1376 = vmatpush1.msra.mxu0 0.0
    %1377 = vmatprep.subr.mxu0 0.0
    %1378 = vmatpush1.msra.mxu0 0.0
    %1379 = vmatprep.mubr.f32.mxu0 0.0
    %1380 = vmatmul.mubr.f32.gmra.mrb[0].mxu0 %v1313
    %v1381 = vpop.f32.mrb[0].mxu0
    %v1382 = vadd.f32 0.0, %v1381
    %v1383 = vpop.f32.mrb[0].mxu0
    %v1384 = vadd.f32 0.0, %v1383
    %1385 = vdwg.mxu0
    %v1386 = vadd.f32 %v1294, %v1382
    %v1387 = vadd.f32 %v1295, %v1384
    %v1388 = vxor.u32 %v1386, 2147483648
    %v1389 = vxor.u32 %v1387, 2147483648
    %v1390 = vmul.f32 %v1388, 1.442695
    %v1391 = vpow.pop %v1390
    %v1392 = vmul.f32 %v1389, 1.442695
    %v1393 = vpow.pop %v1392
    %v1394 = vadd.f32 %v1391, 1.0
    %v1395 = vadd.f32 %v1393, 1.0
    %v1396 = vrcp.pop %v1394
    %v1397 = vmul.f32 1.0, %v1396
    %v1398 = vrcp.pop %v1395
    %v1399 = vmul.f32 1.0, %v1398
    %v1400 = vtanh.pop %v1387
    %1402 = vrot.lane.b32.xlu0 %v1287, 64
    %v1403 = vpop.permute.xlu0 %1402
    %v1405 = vmul.f32 %v1397, %v1403
    %v1406 = vmul.f32 %v1397, %v1400
    %1408 = vrot.lane.b32.xlu0 %v1406, 64
    %v1409 = vpop.permute.xlu0 %1408
    %v1411 = vadd.f32 %v1405, %v1409
    %v1412 = vtanh.pop %v1411
    %v1413 = vmul.f32 %v1399, %v1412
    %v1414 = vsel %vm51, 6, 1
    %vm1415 = vcmp.lt.s32.totalorder %v1414, %v559
    %1417 = vrot.lane.b32.xlu0 %v1413, 64
    %v1418 = vpop.permute.xlu0 %1417
    %v1420 = vsel %vm1415, %v1418, %v1282
    %1422 = vrot.lane.b32.xlu0 %v1411, 64
    %v1423 = vpop.permute.xlu0 %1422
    %v1425 = vsel %vm1415, %v1423, %v1287
    %1426 = vst.msk [vmem:[%s720] sm:$0xff] %vm571, %v1420
    %1427 = vst.msk [vmem:[%s718] sm:$0xff] %vm574, %v1420
    %v1428 = vld [vmem:[%s437] sm:$0xff]
    %v1429 = vld [vmem:[%s437 + $0x8] sm:$0xff]
    %v1430 = vld [vmem:[%s432] sm:$0xff]
    %v1431 = vld [vmem:[%s432 + $0x8] sm:$0xff]
    %v1432 = vsel %vm56, %v1428, %v1430
    %v1433 = vsel %vm56, %v1429, %v1431
    %v1434 = vld [vmem:[#allocation6] sm:$0xff]
    %v1435 = vld [vmem:[#allocation6 + $0x8] sm:$0xff]
    %v1436 = vld [vmem:[#allocation6 + $0x10] sm:$0xff]
    %v1437 = vld [vmem:[#allocation6 + $0x18] sm:$0xff]
    %v1438 = vld [vmem:[#allocation6 + $0x20] sm:$0xff]
    %v1439 = vld [vmem:[#allocation6 + $0x28] sm:$0xff]
    %v1440 = vld [vmem:[#allocation6 + $0x30] sm:$0xff]
    %v1441 = vld [vmem:[#allocation6 + $0x38] sm:$0xff]
    %v1442 = vld [vmem:[#allocation6 + $0x40] sm:$0xff]
    %v1443 = vld [vmem:[#allocation6 + $0x48] sm:$0xff]
    %v1444 = vld [vmem:[#allocation6 + $0x50] sm:$0xff]
    %v1445 = vld [vmem:[#allocation6 + $0x58] sm:$0xff]
    %v1446 = vld [vmem:[#allocation6 + $0x60] sm:$0xff]
    %v1447 = vld [vmem:[#allocation6 + $0x68] sm:$0xff]
    %v1448 = vld [vmem:[#allocation6 + $0x70] sm:$0xff]
    %v1449 = vld [vmem:[#allocation6 + $0x78] sm:$0xff]
    %v1451 = vsel %vm54, %v1420, 0
    %1453 = vmatprep.subr.mxu0 %v1435
    %1454 = vmatpush1.msra.mxu0 %v1434
    %1455 = vmatprep.subr.mxu0 %v1437
    %1456 = vmatpush1.msra.mxu0 %v1436
    %1457 = vmatprep.subr.mxu0 %v1439
    %1458 = vmatpush1.msra.mxu0 %v1438
    %1459 = vmatprep.subr.mxu0 %v1441
    %1460 = vmatpush1.msra.mxu0 %v1440
    %1461 = vmatprep.subr.mxu0 %v1443
    %1462 = vmatpush1.msra.mxu0 %v1442
    %1463 = vmatprep.subr.mxu0 %v1445
    %1464 = vmatpush1.msra.mxu0 %v1444
    %1465 = vmatprep.subr.mxu0 %v1447
    %1466 = vmatpush1.msra.mxu0 %v1446
    %1467 = vmatprep.subr.mxu0 %v1449
    %1468 = vmatpush1.msra.mxu0 %v1448
    %1469 = vmatprep.subr.mxu0 0.0
    %1470 = vmatpush1.msra.mxu0 0.0
    %1471 = vmatprep.subr.mxu0 0.0
    %1472 = vmatpush1.msra.mxu0 0.0
    %1473 = vmatprep.subr.mxu0 0.0
    %1474 = vmatpush1.msra.mxu0 0.0
    %1475 = vmatprep.subr.mxu0 0.0
    %1476 = vmatpush1.msra.mxu0 0.0
    %1477 = vmatprep.subr.mxu0 0.0
    %1478 = vmatpush1.msra.mxu0 0.0
    %1479 = vmatprep.subr.mxu0 0.0
    %1480 = vmatpush1.msra.mxu0 0.0
    %1481 = vmatprep.subr.mxu0 0.0
    %1482 = vmatpush1.msra.mxu0 0.0
    %1483 = vmatprep.subr.mxu0 0.0
    %1484 = vmatpush1.msra.mxu0 0.0
    %1485 = vmatprep.subr.mxu0 0.0
    %1486 = vmatpush1.msra.mxu0 0.0
    %1487 = vmatprep.subr.mxu0 0.0
    %1488 = vmatpush1.msra.mxu0 0.0
    %1489 = vmatprep.subr.mxu0 0.0
    %1490 = vmatpush1.msra.mxu0 0.0
    %1491 = vmatprep.subr.mxu0 0.0
    %1492 = vmatpush1.msra.mxu0 0.0
    %1493 = vmatprep.subr.mxu0 0.0
    %1494 = vmatpush1.msra.mxu0 0.0
    %1495 = vmatprep.subr.mxu0 0.0
    %1496 = vmatpush1.msra.mxu0 0.0
    %1497 = vmatprep.subr.mxu0 0.0
    %1498 = vmatpush1.msra.mxu0 0.0
    %1499 = vmatprep.subr.mxu0 0.0
    %1500 = vmatpush1.msra.mxu0 0.0
    %1501 = vmatprep.subr.mxu0 0.0
    %1502 = vmatpush1.msra.mxu0 0.0
    %1503 = vmatprep.subr.mxu0 0.0
    %1504 = vmatpush1.msra.mxu0 0.0
    %1505 = vmatprep.subr.mxu0 0.0
    %1506 = vmatpush1.msra.mxu0 0.0
    %1507 = vmatprep.subr.mxu0 0.0
    %1508 = vmatpush1.msra.mxu0 0.0
    %1509 = vmatprep.subr.mxu0 0.0
    %1510 = vmatpush1.msra.mxu0 0.0
    %1511 = vmatprep.subr.mxu0 0.0
    %1512 = vmatpush1.msra.mxu0 0.0
    %1513 = vmatprep.subr.mxu0 0.0
    %1514 = vmatpush1.msra.mxu0 0.0
    %1515 = vmatprep.subr.mxu0 0.0
    %1516 = vmatpush1.msra.mxu0 0.0
    %1517 = vmatprep.mubr.f32.mxu0 0.0
    %1518 = vmatmul.mubr.f32.gmra.mrb[0].mxu0 %v1451
    %v1519 = vpop.f32.mrb[0].mxu0
    %v1520 = vadd.f32 0.0, %v1519
    %v1521 = vpop.f32.mrb[0].mxu0
    %v1522 = vadd.f32 0.0, %v1521
    %1523 = vdwg.mxu0
    %v1524 = vadd.f32 %v1432, %v1520
    %v1525 = vadd.f32 %v1433, %v1522
    %v1526 = vxor.u32 %v1524, 2147483648
    %v1527 = vxor.u32 %v1525, 2147483648
    %v1528 = vmul.f32 %v1526, 1.442695
    %v1529 = vpow.pop %v1528
    %v1530 = vmul.f32 %v1527, 1.442695
    %v1531 = vpow.pop %v1530
    %v1532 = vadd.f32 %v1529, 1.0
    %v1533 = vadd.f32 %v1531, 1.0
    %v1534 = vrcp.pop %v1532
    %v1535 = vmul.f32 1.0, %v1534
    %v1536 = vrcp.pop %v1533
    %v1537 = vmul.f32 1.0, %v1536
    %v1538 = vtanh.pop %v1525
    %1540 = vrot.lane.b32.xlu0 %v1425, 64
    %v1541 = vpop.permute.xlu0 %1540
    %v1543 = vmul.f32 %v1535, %v1541
    %v1544 = vmul.f32 %v1535, %v1538
    %1546 = vrot.lane.b32.xlu0 %v1544, 64
    %v1547 = vpop.permute.xlu0 %1546
    %v1549 = vadd.f32 %v1543, %v1547
    %v1550 = vtanh.pop %v1549
    %v1551 = vmul.f32 %v1537, %v1550
    %v1552 = vsel %vm51, 7, 0
    %vm1553 = vcmp.lt.s32.totalorder %v1552, %v559
    %1555 = vrot.lane.b32.xlu0 %v1551, 64
    %v1556 = vpop.permute.xlu0 %1555
    %v1558 = vsel %vm1553, %v1556, %v1420
    %1559 = vst.msk [vmem:[%s573] sm:$0xff] %vm571, %v1558
    %1560 = vst.msk [vmem:[#allocation3] sm:$0xff] %vm574, %v1558
    %v1561 = vld [vmem:[#allocation3] sm:$0xff]
    %v1562 = vld [vmem:[#allocation3 + $0x8] sm:$0xff]
    %v1563 = vld [vmem:[#allocation3 + $0x10] sm:$0xff]
    %v1564 = vld [vmem:[#allocation3 + $0x18] sm:$0xff]
    %v1565 = vld [vmem:[#allocation3 + $0x20] sm:$0xff]
    %v1566 = vld [vmem:[#allocation3 + $0x28] sm:$0xff]
    %v1567 = vld [vmem:[#allocation3 + $0x30] sm:$0xff]
    %v1568 = vld [vmem:[#allocation3 + $0x38] sm:$0xff]
    %v1569 = vlaneseq
    %v1570 = vshrl.u32 %v1569, 7
    %v1571 = vsub.s32 1, %v1570
    %v1572 = vrot.slane %v77, %v1571
    %v1573 = vlaneseq
    %v1574 = vshrl.u32 %v1573, 7
    %v1575 = vsub.s32 1, %v1574
    %v1576 = vrot.slane %v78, %v1575
    %v1578 = vsel %vm54, %v1561, 0
    %v1581 = vsel %vm54, %v1562, 0
    %v1584 = vsel %vm54, %v1563, 0
    %v1587 = vsel %vm54, %v1564, 0
    %v1590 = vsel %vm54, %v1565, 0
    %v1593 = vsel %vm54, %v1566, 0
    %v1596 = vsel %vm54, %v1567, 0
    %v1599 = vsel %vm54, %v1568, 0
    %1601 = vmatprep.subr.mxu0 %v62
    %1602 = vmatpush1.msra.mxu0 %v61
    %1603 = vmatprep.subr.mxu0 %v64
    %1604 = vmatpush1.msra.mxu0 %v63
    %1605 = vmatprep.subr.mxu0 %v66
    %1606 = vmatpush1.msra.mxu0 %v65
    %1607 = vmatprep.subr.mxu0 %v68
    %1608 = vmatpush1.msra.mxu0 %v67
    %1609 = vmatprep.subr.mxu0 %v70
    %1610 = vmatpush1.msra.mxu0 %v69
    %1611 = vmatprep.subr.mxu0 %v72
    %1612 = vmatpush1.msra.mxu0 %v71
    %1613 = vmatprep.subr.mxu0 %v74
    %1614 = vmatpush1.msra.mxu0 %v73
    %1615 = vmatprep.subr.mxu0 %v76
    %1616 = vmatpush1.msra.mxu0 %v75
    %1617 = vmatprep.subr.mxu0 0.0
    %1618 = vmatpush1.msra.mxu0 0.0
    %1619 = vmatprep.subr.mxu0 0.0
    %1620 = vmatpush1.msra.mxu0 0.0
    %1621 = vmatprep.subr.mxu0 0.0
    %1622 = vmatpush1.msra.mxu0 0.0
    %1623 = vmatprep.subr.mxu0 0.0
    %1624 = vmatpush1.msra.mxu0 0.0
    %1625 = vmatprep.subr.mxu0 0.0
    %1626 = vmatpush1.msra.mxu0 0.0
    %1627 = vmatprep.subr.mxu0 0.0
    %1628 = vmatpush1.msra.mxu0 0.0
    %1629 = vmatprep.subr.mxu0 0.0
    %1630 = vmatpush1.msra.mxu0 0.0
    %1631 = vmatprep.subr.mxu0 0.0
    %1632 = vmatpush1.msra.mxu0 0.0
    %1633 = vmatprep.subr.mxu0 0.0
    %1634 = vmatpush1.msra.mxu0 0.0
    %1635 = vmatprep.subr.mxu0 0.0
    %1636 = vmatpush1.msra.mxu0 0.0
    %1637 = vmatprep.subr.mxu0 0.0
    %1638 = vmatpush1.msra.mxu0 0.0
    %1639 = vmatprep.subr.mxu0 0.0
    %1640 = vmatpush1.msra.mxu0 0.0
    %1641 = vmatprep.subr.mxu0 0.0
    %1642 = vmatpush1.msra.mxu0 0.0
    %1643 = vmatprep.subr.mxu0 0.0
    %1644 = vmatpush1.msra.mxu0 0.0
    %1645 = vmatprep.subr.mxu0 0.0
    %1646 = vmatpush1.msra.mxu0 0.0
    %1647 = vmatprep.subr.mxu0 0.0
    %1648 = vmatpush1.msra.mxu0 0.0
    %1649 = vmatprep.subr.mxu0 0.0
    %1650 = vmatpush1.msra.mxu0 0.0
    %1651 = vmatprep.subr.mxu0 0.0
    %1652 = vmatpush1.msra.mxu0 0.0
    %1653 = vmatprep.subr.mxu0 0.0
    %1654 = vmatpush1.msra.mxu0 0.0
    %1655 = vmatprep.subr.mxu0 0.0
    %1656 = vmatpush1.msra.mxu0 0.0
    %1657 = vmatprep.subr.mxu0 0.0
    %1658 = vmatpush1.msra.mxu0 0.0
    %1659 = vmatprep.subr.mxu0 0.0
    %1660 = vmatpush1.msra.mxu0 0.0
    %1661 = vmatprep.subr.mxu0 0.0
    %1662 = vmatpush1.msra.mxu0 0.0
    %1663 = vmatprep.subr.mxu0 0.0
    %1664 = vmatpush1.msra.mxu0 0.0
    %1665 = vmatprep.mubr.f32.mxu0 0.0
    %1666 = vmatmul.mubr.f32.gmra.mrb[0].mxu0 %v1578
    %v1667 = vpop.f32.mrb[0].mxu0
    %v1668 = vadd.f32 %v1572, %v1667
    %v1669 = vpop.f32.mrb[0].mxu0
    %v1670 = vadd.f32 %v1576, %v1669
    %1671 = vmatprep.mubr.f32.mxu0 0.0
    %1672 = vmatmul.mubr.f32.gmra.mrb[0].mxu0 %v1581
    %v1673 = vpop.f32.mrb[0].mxu0
    %v1674 = vadd.f32 %v1572, %v1673
    %v1675 = vpop.f32.mrb[0].mxu0
    %v1676 = vadd.f32 %v1576, %v1675
    %1677 = vmatprep.mubr.f32.mxu0 0.0
    %1678 = vmatmul.mubr.f32.gmra.mrb[0].mxu0 %v1584
    %v1679 = vpop.f32.mrb[0].mxu0
    %v1680 = vadd.f32 %v1572, %v1679
    %v1681 = vpop.f32.mrb[0].mxu0
    %v1682 = vadd.f32 %v1576, %v1681
    %1683 = vmatprep.mubr.f32.mxu0 0.0
    %1684 = vmatmul.mubr.f32.gmra.mrb[0].mxu0 %v1587
    %v1685 = vpop.f32.mrb[0].mxu0
    %v1686 = vadd.f32 %v1572, %v1685
    %v1687 = vpop.f32.mrb[0].mxu0
    %v1688 = vadd.f32 %v1576, %v1687
    %1689 = vmatprep.mubr.f32.mxu0 0.0
    %1690 = vmatmul.mubr.f32.gmra.mrb[0].mxu0 %v1590
    %v1691 = vpop.f32.mrb[0].mxu0
    %v1692 = vadd.f32 %v1572, %v1691
    %v1693 = vpop.f32.mrb[0].mxu0
    %v1694 = vadd.f32 %v1576, %v1693
    %1695 = vmatprep.mubr.f32.mxu0 0.0
    %1696 = vmatmul.mubr.f32.gmra.mrb[0].mxu0 %v1593
    %v1697 = vpop.f32.mrb[0].mxu0
    %v1698 = vadd.f32 %v1572, %v1697
    %v1699 = vpop.f32.mrb[0].mxu0
    %v1700 = vadd.f32 %v1576, %v1699
    %1701 = vmatprep.mubr.f32.mxu0 0.0
    %1702 = vmatmul.mubr.f32.gmra.mrb[0].mxu0 %v1596
    %v1703 = vpop.f32.mrb[0].mxu0
    %v1704 = vadd.f32 %v1572, %v1703
    %v1705 = vpop.f32.mrb[0].mxu0
    %v1706 = vadd.f32 %v1576, %v1705
    %1707 = vmatprep.mubr.f32.mxu0 0.0
    %1708 = vmatmul.mubr.f32.gmra.mrb[0].mxu0 %v1599
    %v1709 = vpop.f32.mrb[0].mxu0
    %v1710 = vadd.f32 %v1572, %v1709
    %v1711 = vpop.f32.mrb[0].mxu0
    %v1712 = vadd.f32 %v1576, %v1711
    %1713 = vdwg.mxu0
    %1714 = vst [vmem:[#allocation2] sm:$0xff] %v1668
    %1715 = vst [vmem:[#allocation2 + $0x8] sm:$0xff] %v1670
    %1716 = vst [vmem:[#allocation2 + $0x10] sm:$0xff] %v1674
    %1717 = vst [vmem:[#allocation2 + $0x18] sm:$0xff] %v1676
    %1718 = vst [vmem:[#allocation2 + $0x20] sm:$0xff] %v1680
    %1719 = vst [vmem:[#allocation2 + $0x28] sm:$0xff] %v1682
    %1720 = vst [vmem:[#allocation2 + $0x30] sm:$0xff] %v1686
    %1721 = vst [vmem:[#allocation2 + $0x38] sm:$0xff] %v1688
    %1722 = vst [vmem:[#allocation2 + $0x40] sm:$0xff] %v1692
    %1723 = vst [vmem:[#allocation2 + $0x48] sm:$0xff] %v1694
    %1724 = vst [vmem:[#allocation2 + $0x50] sm:$0xff] %v1698
    %1725 = vst [vmem:[#allocation2 + $0x58] sm:$0xff] %v1700
    %1726 = vst [vmem:[#allocation2 + $0x60] sm:$0xff] %v1704
    %1727 = vst [vmem:[#allocation2 + $0x68] sm:$0xff] %v1706
    %1728 = vst [vmem:[#allocation2 + $0x70] sm:$0xff] %v1710
    %1729 = vst [vmem:[#allocation2 + $0x78] sm:$0xff] %v1712
    %v1730 = vld [vmem:[%s432] sm:$0xff]
    %v1731 = vld [vmem:[%s432 + $0x8] sm:$0xff]
    %v1732 = vld [vmem:[%s437] sm:$0xff]
    %v1733 = vld [vmem:[%s437 + $0x8] sm:$0xff]
    %v1734 = vsel %vm56, %v1730, %v1732
    %v1735 = vsel %vm56, %v1731, %v1733
    %v1736 = vld [vmem:[#allocation6 + $0x80] sm:$0xff]
    %v1737 = vld [vmem:[#allocation6 + $0x88] sm:$0xff]
    %v1738 = vld [vmem:[#allocation6 + $0x90] sm:$0xff]
    %v1739 = vld [vmem:[#allocation6 + $0x98] sm:$0xff]
    %v1740 = vld [vmem:[#allocation6 + $0xa0] sm:$0xff]
    %v1741 = vld [vmem:[#allocation6 + $0xa8] sm:$0xff]
    %v1742 = vld [vmem:[#allocation6 + $0xb0] sm:$0xff]
    %v1743 = vld [vmem:[#allocation6 + $0xb8] sm:$0xff]
    %v1744 = vld [vmem:[#allocation6 + $0xc0] sm:$0xff]
    %v1745 = vld [vmem:[#allocation6 + $0xc8] sm:$0xff]
    %v1746 = vld [vmem:[#allocation6 + $0xd0] sm:$0xff]
    %v1747 = vld [vmem:[#allocation6 + $0xd8] sm:$0xff]
    %v1748 = vld [vmem:[#allocation6 + $0xe0] sm:$0xff]
    %v1749 = vld [vmem:[#allocation6 + $0xe8] sm:$0xff]
    %v1750 = vld [vmem:[#allocation6 + $0xf0] sm:$0xff]
    %v1751 = vld [vmem:[#allocation6 + $0xf8] sm:$0xff]
    %1752 = vmatprep.subr.mxu0 %v1737
    %1753 = vmatpush1.msra.mxu0 %v1736
    %1754 = vmatprep.subr.mxu0 %v1739
    %1755 = vmatpush1.msra.mxu0 %v1738
    %1756 = vmatprep.subr.mxu0 %v1741
    %1757 = vmatpush1.msra.mxu0 %v1740
    %1758 = vmatprep.subr.mxu0 %v1743
    %1759 = vmatpush1.msra.mxu0 %v1742
    %1760 = vmatprep.subr.mxu0 %v1745
    %1761 = vmatpush1.msra.mxu0 %v1744
    %1762 = vmatprep.subr.mxu0 %v1747
    %1763 = vmatpush1.msra.mxu0 %v1746
    %1764 = vmatprep.subr.mxu0 %v1749
    %1765 = vmatpush1.msra.mxu0 %v1748
    %1766 = vmatprep.subr.mxu0 %v1751
    %1767 = vmatpush1.msra.mxu0 %v1750
    %1768 = vmatprep.subr.mxu0 0.0
    %1769 = vmatpush1.msra.mxu0 0.0
    %1770 = vmatprep.subr.mxu0 0.0
    %1771 = vmatpush1.msra.mxu0 0.0
    %1772 = vmatprep.subr.mxu0 0.0
    %1773 = vmatpush1.msra.mxu0 0.0
    %1774 = vmatprep.subr.mxu0 0.0
    %1775 = vmatpush1.msra.mxu0 0.0
    %1776 = vmatprep.subr.mxu0 0.0
    %1777 = vmatpush1.msra.mxu0 0.0
    %1778 = vmatprep.subr.mxu0 0.0
    %1779 = vmatpush1.msra.mxu0 0.0
    %1780 = vmatprep.subr.mxu0 0.0
    %1781 = vmatpush1.msra.mxu0 0.0
    %1782 = vmatprep.subr.mxu0 0.0
    %1783 = vmatpush1.msra.mxu0 0.0
    %1784 = vmatprep.subr.mxu0 0.0
    %1785 = vmatpush1.msra.mxu0 0.0
    %1786 = vmatprep.subr.mxu0 0.0
    %1787 = vmatpush1.msra.mxu0 0.0
    %1788 = vmatprep.subr.mxu0 0.0
    %1789 = vmatpush1.msra.mxu0 0.0
    %1790 = vmatprep.subr.mxu0 0.0
    %1791 = vmatpush1.msra.mxu0 0.0
    %1792 = vmatprep.subr.mxu0 0.0
    %1793 = vmatpush1.msra.mxu0 0.0
    %1794 = vmatprep.subr.mxu0 0.0
    %1795 = vmatpush1.msra.mxu0 0.0
    %1796 = vmatprep.subr.mxu0 0.0
    %1797 = vmatpush1.msra.mxu0 0.0
    %1798 = vmatprep.subr.mxu0 0.0
    %1799 = vmatpush1.msra.mxu0 0.0
    %1800 = vmatprep.subr.mxu0 0.0
    %1801 = vmatpush1.msra.mxu0 0.0
    %1802 = vmatprep.subr.mxu0 0.0
    %1803 = vmatpush1.msra.mxu0 0.0
    %1804 = vmatprep.subr.mxu0 0.0
    %1805 = vmatpush1.msra.mxu0 0.0
    %1806 = vmatprep.subr.mxu0 0.0
    %1807 = vmatpush1.msra.mxu0 0.0
    %1808 = vmatprep.subr.mxu0 0.0
    %1809 = vmatpush1.msra.mxu0 0.0
    %1810 = vmatprep.subr.mxu0 0.0
    %1811 = vmatpush1.msra.mxu0 0.0
    %1812 = vmatprep.subr.mxu0 0.0
    %1813 = vmatpush1.msra.mxu0 0.0
    %1814 = vmatprep.subr.mxu0 0.0
    %1815 = vmatpush1.msra.mxu0 0.0
    %1816 = vmatprep.mubr.f32.mxu0 0.0
    %1817 = vmatmul.mubr.f32.gmra.mrb[0].mxu0 %v459
    %v1818 = vpop.f32.mrb[0].mxu0
    %v1819 = vadd.f32 0.0, %v1818
    %v1820 = vpop.f32.mrb[0].mxu0
    %v1821 = vadd.f32 0.0, %v1820
    %1822 = vdwg.mxu0
    %v1823 = vadd.f32 %v1734, %v1819
    %v1824 = vadd.f32 %v1735, %v1821
    %v1825 = vxor.u32 %v1823, 2147483648
    %v1826 = vxor.u32 %v1824, 2147483648
    %v1827 = vmul.f32 %v1825, 1.442695
    %v1828 = vpow.pop %v1827
    %v1829 = vmul.f32 %v1826, 1.442695
    %v1830 = vpow.pop %v1829
    %v1831 = vadd.f32 %v1828, 1.0
    %v1832 = vadd.f32 %v1830, 1.0
    %v1833 = vrcp.pop %v1831
    %v1834 = vmul.f32 1.0, %v1833
    %v1835 = vrcp.pop %v1832
    %v1836 = vmul.f32 1.0, %v1835
    %v1837 = vtanh.pop %v1824
    %v1838 = vmul.f32 %v1834, 0.0
    %v1839 = vmul.f32 %v1834, %v1837
    %1841 = vrot.lane.b32.xlu0 %v1839, 64
    %v1842 = vpop.permute.xlu0 %1841
    %v1844 = vadd.f32 %v1838, %v1842
    %v1845 = vtanh.pop %v1844
    %v1846 = vmul.f32 %v1836, %v1845
    %1848 = vrot.lane.b32.xlu0 %v1846, 64
    %v1849 = vpop.permute.xlu0 %1848
    %v1851 = vsel %vm560, %v1849, 0.0
    %1853 = vrot.lane.b32.xlu0 %v1844, 64
    %v1854 = vpop.permute.xlu0 %1853
    %v1856 = vsel %vm560, %v1854, 0.0
    %v1857 = vld [vmem:[%s578] sm:$0xff]
    %v1858 = vld [vmem:[%s578 + $0x8] sm:$0xff]
    %v1859 = vld [vmem:[%s583] sm:$0xff]
    %v1860 = vld [vmem:[%s583 + $0x8] sm:$0xff]
    %v1861 = vsel %vm56, %v1857, %v1859
    %v1862 = vsel %vm56, %v1858, %v1860
    %v1864 = vsel %vm54, %v1851, 0
    %1866 = vmatprep.subr.mxu0 %v1737
    %1867 = vmatpush1.msra.mxu0 %v1736
    %1868 = vmatprep.subr.mxu0 %v1739
    %1869 = vmatpush1.msra.mxu0 %v1738
    %1870 = vmatprep.subr.mxu0 %v1741
    %1871 = vmatpush1.msra.mxu0 %v1740
    %1872 = vmatprep.subr.mxu0 %v1743
    %1873 = vmatpush1.msra.mxu0 %v1742
    %1874 = vmatprep.subr.mxu0 %v1745
    %1875 = vmatpush1.msra.mxu0 %v1744
    %1876 = vmatprep.subr.mxu0 %v1747
    %1877 = vmatpush1.msra.mxu0 %v1746
    %1878 = vmatprep.subr.mxu0 %v1749
    %1879 = vmatpush1.msra.mxu0 %v1748
    %1880 = vmatprep.subr.mxu0 %v1751
    %1881 = vmatpush1.msra.mxu0 %v1750
    %1882 = vmatprep.subr.mxu0 0.0
    %1883 = vmatpush1.msra.mxu0 0.0
    %1884 = vmatprep.subr.mxu0 0.0
    %1885 = vmatpush1.msra.mxu0 0.0
    %1886 = vmatprep.subr.mxu0 0.0
    %1887 = vmatpush1.msra.mxu0 0.0
    %1888 = vmatprep.subr.mxu0 0.0
    %1889 = vmatpush1.msra.mxu0 0.0
    %1890 = vmatprep.subr.mxu0 0.0
    %1891 = vmatpush1.msra.mxu0 0.0
    %1892 = vmatprep.subr.mxu0 0.0
    %1893 = vmatpush1.msra.mxu0 0.0
    %1894 = vmatprep.subr.mxu0 0.0
    %1895 = vmatpush1.msra.mxu0 0.0
    %1896 = vmatprep.subr.mxu0 0.0
    %1897 = vmatpush1.msra.mxu0 0.0
    %1898 = vmatprep.subr.mxu0 0.0
    %1899 = vmatpush1.msra.mxu0 0.0
    %1900 = vmatprep.subr.mxu0 0.0
    %1901 = vmatpush1.msra.mxu0 0.0
    %1902 = vmatprep.subr.mxu0 0.0
    %1903 = vmatpush1.msra.mxu0 0.0
    %1904 = vmatprep.subr.mxu0 0.0
    %1905 = vmatpush1.msra.mxu0 0.0
    %1906 = vmatprep.subr.mxu0 0.0
    %1907 = vmatpush1.msra.mxu0 0.0
    %1908 = vmatprep.subr.mxu0 0.0
    %1909 = vmatpush1.msra.mxu0 0.0
    %1910 = vmatprep.subr.mxu0 0.0
    %1911 = vmatpush1.msra.mxu0 0.0
    %1912 = vmatprep.subr.mxu0 0.0
    %1913 = vmatpush1.msra.mxu0 0.0
    %1914 = vmatprep.subr.mxu0 0.0
    %1915 = vmatpush1.msra.mxu0 0.0
    %1916 = vmatprep.subr.mxu0 0.0
    %1917 = vmatpush1.msra.mxu0 0.0
    %1918 = vmatprep.subr.mxu0 0.0
    %1919 = vmatpush1.msra.mxu0 0.0
    %1920 = vmatprep.subr.mxu0 0.0
    %1921 = vmatpush1.msra.mxu0 0.0
    %1922 = vmatprep.subr.mxu0 0.0
    %1923 = vmatpush1.msra.mxu0 0.0
    %1924 = vmatprep.subr.mxu0 0.0
    %1925 = vmatpush1.msra.mxu0 0.0
    %1926 = vmatprep.subr.mxu0 0.0
    %1927 = vmatpush1.msra.mxu0 0.0
    %1928 = vmatprep.subr.mxu0 0.0
    %1929 = vmatpush1.msra.mxu0 0.0
    %1930 = vmatprep.mubr.f32.mxu0 0.0
    %1931 = vmatmul.mubr.f32.gmra.mrb[0].mxu0 %v1864
    %v1932 = vpop.f32.mrb[0].mxu0
    %v1933 = vadd.f32 0.0, %v1932
    %v1934 = vpop.f32.mrb[0].mxu0
    %v1935 = vadd.f32 0.0, %v1934
    %1936 = vdwg.mxu0
    %v1937 = vadd.f32 %v1861, %v1933
    %v1938 = vadd.f32 %v1862, %v1935
    %v1939 = vxor.u32 %v1937, 2147483648
    %v1940 = vxor.u32 %v1938, 2147483648
    %v1941 = vmul.f32 %v1939, 1.442695
    %v1942 = vpow.pop %v1941
    %v1943 = vmul.f32 %v1940, 1.442695
    %v1944 = vpow.pop %v1943
    %v1945 = vadd.f32 %v1942, 1.0
    %v1946 = vadd.f32 %v1944, 1.0
    %v1947 = vrcp.pop %v1945
    %v1948 = vmul.f32 1.0, %v1947
    %v1949 = vrcp.pop %v1946
    %v1950 = vmul.f32 1.0, %v1949
    %v1951 = vtanh.pop %v1938
    %1953 = vrot.lane.b32.xlu0 %v1856, 64
    %v1954 = vpop.permute.xlu0 %1953
    %v1956 = vmul.f32 %v1948, %v1954
    %v1957 = vmul.f32 %v1948, %v1951
    %1959 = vrot.lane.b32.xlu0 %v1957, 64
    %v1960 = vpop.permute.xlu0 %1959
    %v1962 = vadd.f32 %v1956, %v1960
    %v1963 = vtanh.pop %v1962
    %v1964 = vmul.f32 %v1950, %v1963
    %1966 = vrot.lane.b32.xlu0 %v1964, 64
    %v1967 = vpop.permute.xlu0 %1966
    %v1969 = vsel %vm707, %v1967, %v1851
    %1971 = vrot.lane.b32.xlu0 %v1962, 64
    %v1972 = vpop.permute.xlu0 %1971
    %v1974 = vsel %vm707, %v1972, %v1856
    %v1975 = vld [vmem:[%s724] sm:$0xff]
    %v1976 = vld [vmem:[%s724 + $0x8] sm:$0xff]
    %v1977 = vld [vmem:[%s729] sm:$0xff]
    %v1978 = vld [vmem:[%s729 + $0x8] sm:$0xff]
    %v1979 = vsel %vm56, %v1975, %v1977
    %v1980 = vsel %vm56, %v1976, %v1978
    %v1982 = vsel %vm54, %v1969, 0
    %1984 = vmatprep.subr.mxu0 %v1737
    %1985 = vmatpush1.msra.mxu0 %v1736
    %1986 = vmatprep.subr.mxu0 %v1739
    %1987 = vmatpush1.msra.mxu0 %v1738
    %1988 = vmatprep.subr.mxu0 %v1741
    %1989 = vmatpush1.msra.mxu0 %v1740
    %1990 = vmatprep.subr.mxu0 %v1743
    %1991 = vmatpush1.msra.mxu0 %v1742
    %1992 = vmatprep.subr.mxu0 %v1745
    %1993 = vmatpush1.msra.mxu0 %v1744
    %1994 = vmatprep.subr.mxu0 %v1747
    %1995 = vmatpush1.msra.mxu0 %v1746
    %1996 = vmatprep.subr.mxu0 %v1749
    %1997 = vmatpush1.msra.mxu0 %v1748
    %1998 = vmatprep.subr.mxu0 %v1751
    %1999 = vmatpush1.msra.mxu0 %v1750
    %2000 = vmatprep.subr.mxu0 0.0
    %2001 = vmatpush1.msra.mxu0 0.0
    %2002 = vmatprep.subr.mxu0 0.0
    %2003 = vmatpush1.msra.mxu0 0.0
    %2004 = vmatprep.subr.mxu0 0.0
    %2005 = vmatpush1.msra.mxu0 0.0
    %2006 = vmatprep.subr.mxu0 0.0
    %2007 = vmatpush1.msra.mxu0 0.0
    %2008 = vmatprep.subr.mxu0 0.0
    %2009 = vmatpush1.msra.mxu0 0.0
    %2010 = vmatprep.subr.mxu0 0.0
    %2011 = vmatpush1.msra.mxu0 0.0
    %2012 = vmatprep.subr.mxu0 0.0
    %2013 = vmatpush1.msra.mxu0 0.0
    %2014 = vmatprep.subr.mxu0 0.0
    %2015 = vmatpush1.msra.mxu0 0.0
    %2016 = vmatprep.subr.mxu0 0.0
    %2017 = vmatpush1.msra.mxu0 0.0
    %2018 = vmatprep.subr.mxu0 0.0
    %2019 = vmatpush1.msra.mxu0 0.0
    %2020 = vmatprep.subr.mxu0 0.0
    %2021 = vmatpush1.msra.mxu0 0.0
    %2022 = vmatprep.subr.mxu0 0.0
    %2023 = vmatpush1.msra.mxu0 0.0
    %2024 = vmatprep.subr.mxu0 0.0
    %2025 = vmatpush1.msra.mxu0 0.0
    %2026 = vmatprep.subr.mxu0 0.0
    %2027 = vmatpush1.msra.mxu0 0.0
    %2028 = vmatprep.subr.mxu0 0.0
    %2029 = vmatpush1.msra.mxu0 0.0
    %2030 = vmatprep.subr.mxu0 0.0
    %2031 = vmatpush1.msra.mxu0 0.0
    %2032 = vmatprep.subr.mxu0 0.0
    %2033 = vmatpush1.msra.mxu0 0.0
    %2034 = vmatprep.subr.mxu0 0.0
    %2035 = vmatpush1.msra.mxu0 0.0
    %2036 = vmatprep.subr.mxu0 0.0
    %2037 = vmatpush1.msra.mxu0 0.0
    %2038 = vmatprep.subr.mxu0 0.0
    %2039 = vmatpush1.msra.mxu0 0.0
    %2040 = vmatprep.subr.mxu0 0.0
    %2041 = vmatpush1.msra.mxu0 0.0
    %2042 = vmatprep.subr.mxu0 0.0
    %2043 = vmatpush1.msra.mxu0 0.0
    %2044 = vmatprep.subr.mxu0 0.0
    %2045 = vmatpush1.msra.mxu0 0.0
    %2046 = vmatprep.subr.mxu0 0.0
    %2047 = vmatpush1.msra.mxu0 0.0
    %2048 = vmatprep.mubr.f32.mxu0 0.0
    %2049 = vmatmul.mubr.f32.gmra.mrb[0].mxu0 %v1982
    %v2050 = vpop.f32.mrb[0].mxu0
    %v2051 = vadd.f32 0.0, %v2050
    %v2052 = vpop.f32.mrb[0].mxu0
    %v2053 = vadd.f32 0.0, %v2052
    %2054 = vdwg.mxu0
    %v2055 = vadd.f32 %v1979, %v2051
    %v2056 = vadd.f32 %v1980, %v2053
    %v2057 = vxor.u32 %v2055, 2147483648
    %v2058 = vxor.u32 %v2056, 2147483648
    %v2059 = vmul.f32 %v2057, 1.442695
    %v2060 = vpow.pop %v2059
    %v2061 = vmul.f32 %v2058, 1.442695
    %v2062 = vpow.pop %v2061
    %v2063 = vadd.f32 %v2060, 1.0
    %v2064 = vadd.f32 %v2062, 1.0
    %v2065 = vrcp.pop %v2063
    %v2066 = vmul.f32 1.0, %v2065
    %v2067 = vrcp.pop %v2064
    %v2068 = vmul.f32 1.0, %v2067
    %v2069 = vtanh.pop %v2056
    %2071 = vrot.lane.b32.xlu0 %v1974, 64
    %v2072 = vpop.permute.xlu0 %2071
    %v2074 = vmul.f32 %v2066, %v2072
    %v2075 = vmul.f32 %v2066, %v2069
    %2077 = vrot.lane.b32.xlu0 %v2075, 64
    %v2078 = vpop.permute.xlu0 %2077
    %v2080 = vadd.f32 %v2074, %v2078
    %v2081 = vtanh.pop %v2080
    %v2082 = vmul.f32 %v2068, %v2081
    %2084 = vrot.lane.b32.xlu0 %v2082, 64
    %v2085 = vpop.permute.xlu0 %2084
    %v2087 = vsel %vm853, %v2085, %v1969
    %2089 = vrot.lane.b32.xlu0 %v2080, 64
    %v2090 = vpop.permute.xlu0 %2089
    %v2092 = vsel %vm853, %v2090, %v1974
    %v2093 = vld [vmem:[%s870] sm:$0xff]
    %v2094 = vld [vmem:[%s870 + $0x8] sm:$0xff]
    %v2095 = vld [vmem:[%s875] sm:$0xff]
    %v2096 = vld [vmem:[%s875 + $0x8] sm:$0xff]
    %v2097 = vsel %vm56, %v2093, %v2095
    %v2098 = vsel %vm56, %v2094, %v2096
    %v2100 = vsel %vm54, %v2087, 0
    %2102 = vmatprep.subr.mxu0 %v1737
    %2103 = vmatpush1.msra.mxu0 %v1736
    %2104 = vmatprep.subr.mxu0 %v1739
    %2105 = vmatpush1.msra.mxu0 %v1738
    %2106 = vmatprep.subr.mxu0 %v1741
    %2107 = vmatpush1.msra.mxu0 %v1740
    %2108 = vmatprep.subr.mxu0 %v1743
    %2109 = vmatpush1.msra.mxu0 %v1742
    %2110 = vmatprep.subr.mxu0 %v1745
    %2111 = vmatpush1.msra.mxu0 %v1744
    %2112 = vmatprep.subr.mxu0 %v1747
    %2113 = vmatpush1.msra.mxu0 %v1746
    %2114 = vmatprep.subr.mxu0 %v1749
    %2115 = vmatpush1.msra.mxu0 %v1748
    %2116 = vmatprep.subr.mxu0 %v1751
    %2117 = vmatpush1.msra.mxu0 %v1750
    %2118 = vmatprep.subr.mxu0 0.0
    %2119 = vmatpush1.msra.mxu0 0.0
    %2120 = vmatprep.subr.mxu0 0.0
    %2121 = vmatpush1.msra.mxu0 0.0
    %2122 = vmatprep.subr.mxu0 0.0
    %2123 = vmatpush1.msra.mxu0 0.0
    %2124 = vmatprep.subr.mxu0 0.0
    %2125 = vmatpush1.msra.mxu0 0.0
    %2126 = vmatprep.subr.mxu0 0.0
    %2127 = vmatpush1.msra.mxu0 0.0
    %2128 = vmatprep.subr.mxu0 0.0
    %2129 = vmatpush1.msra.mxu0 0.0
    %2130 = vmatprep.subr.mxu0 0.0
    %2131 = vmatpush1.msra.mxu0 0.0
    %2132 = vmatprep.subr.mxu0 0.0
    %2133 = vmatpush1.msra.mxu0 0.0
    %2134 = vmatprep.subr.mxu0 0.0
    %2135 = vmatpush1.msra.mxu0 0.0
    %2136 = vmatprep.subr.mxu0 0.0
    %2137 = vmatpush1.msra.mxu0 0.0
    %2138 = vmatprep.subr.mxu0 0.0
    %2139 = vmatpush1.msra.mxu0 0.0
    %2140 = vmatprep.subr.mxu0 0.0
    %2141 = vmatpush1.msra.mxu0 0.0
    %2142 = vmatprep.subr.mxu0 0.0
    %2143 = vmatpush1.msra.mxu0 0.0
    %2144 = vmatprep.subr.mxu0 0.0
    %2145 = vmatpush1.msra.mxu0 0.0
    %2146 = vmatprep.subr.mxu0 0.0
    %2147 = vmatpush1.msra.mxu0 0.0
    %2148 = vmatprep.subr.mxu0 0.0
    %2149 = vmatpush1.msra.mxu0 0.0
    %2150 = vmatprep.subr.mxu0 0.0
    %2151 = vmatpush1.msra.mxu0 0.0
    %2152 = vmatprep.subr.mxu0 0.0
    %2153 = vmatpush1.msra.mxu0 0.0
    %2154 = vmatprep.subr.mxu0 0.0
    %2155 = vmatpush1.msra.mxu0 0.0
    %2156 = vmatprep.subr.mxu0 0.0
    %2157 = vmatpush1.msra.mxu0 0.0
    %2158 = vmatprep.subr.mxu0 0.0
    %2159 = vmatpush1.msra.mxu0 0.0
    %2160 = vmatprep.subr.mxu0 0.0
    %2161 = vmatpush1.msra.mxu0 0.0
    %2162 = vmatprep.subr.mxu0 0.0
    %2163 = vmatpush1.msra.mxu0 0.0
    %2164 = vmatprep.subr.mxu0 0.0
    %2165 = vmatpush1.msra.mxu0 0.0
    %2166 = vmatprep.mubr.f32.mxu0 0.0
    %2167 = vmatmul.mubr.f32.gmra.mrb[0].mxu0 %v2100
    %v2168 = vpop.f32.mrb[0].mxu0
    %v2169 = vadd.f32 0.0, %v2168
    %v2170 = vpop.f32.mrb[0].mxu0
    %v2171 = vadd.f32 0.0, %v2170
    %2172 = vdwg.mxu0
    %v2173 = vadd.f32 %v2097, %v2169
    %v2174 = vadd.f32 %v2098, %v2171
    %v2175 = vxor.u32 %v2173, 2147483648
    %v2176 = vxor.u32 %v2174, 2147483648
    %v2177 = vmul.f32 %v2175, 1.442695
    %v2178 = vpow.pop %v2177
    %v2179 = vmul.f32 %v2176, 1.442695
    %v2180 = vpow.pop %v2179
    %v2181 = vadd.f32 %v2178, 1.0
    %v2182 = vadd.f32 %v2180, 1.0
    %v2183 = vrcp.pop %v2181
    %v2184 = vmul.f32 1.0, %v2183
    %v2185 = vrcp.pop %v2182
    %v2186 = vmul.f32 1.0, %v2185
    %v2187 = vtanh.pop %v2174
    %2189 = vrot.lane.b32.xlu0 %v2092, 64
    %v2190 = vpop.permute.xlu0 %2189
    %v2192 = vmul.f32 %v2184, %v2190
    %v2193 = vmul.f32 %v2184, %v2187
    %2195 = vrot.lane.b32.xlu0 %v2193, 64
    %v2196 = vpop.permute.xlu0 %2195
    %v2198 = vadd.f32 %v2192, %v2196
    %v2199 = vtanh.pop %v2198
    %v2200 = vmul.f32 %v2186, %v2199
    %2202 = vrot.lane.b32.xlu0 %v2200, 64
    %v2203 = vpop.permute.xlu0 %2202
    %v2205 = vsel %vm999, %v2203, %v2087
    %2207 = vrot.lane.b32.xlu0 %v2198, 64
    %v2208 = vpop.permute.xlu0 %2207
    %v2210 = vsel %vm999, %v2208, %v2092
    %v2211 = vsel %vm56, %v2095, %v2093
    %v2212 = vsel %vm56, %v2096, %v2094
    %v2214 = vsel %vm54, %v2205, 0
    %2216 = vmatprep.subr.mxu0 %v1737
    %2217 = vmatpush1.msra.mxu0 %v1736
    %2218 = vmatprep.subr.mxu0 %v1739
    %2219 = vmatpush1.msra.mxu0 %v1738
    %2220 = vmatprep.subr.mxu0 %v1741
    %2221 = vmatpush1.msra.mxu0 %v1740
    %2222 = vmatprep.subr.mxu0 %v1743
    %2223 = vmatpush1.msra.mxu0 %v1742
    %2224 = vmatprep.subr.mxu0 %v1745
    %2225 = vmatpush1.msra.mxu0 %v1744
    %2226 = vmatprep.subr.mxu0 %v1747
    %2227 = vmatpush1.msra.mxu0 %v1746
    %2228 = vmatprep.subr.mxu0 %v1749
    %2229 = vmatpush1.msra.mxu0 %v1748
    %2230 = vmatprep.subr.mxu0 %v1751
    %2231 = vmatpush1.msra.mxu0 %v1750
    %2232 = vmatprep.subr.mxu0 0.0
    %2233 = vmatpush1.msra.mxu0 0.0
    %2234 = vmatprep.subr.mxu0 0.0
    %2235 = vmatpush1.msra.mxu0 0.0
    %2236 = vmatprep.subr.mxu0 0.0
    %2237 = vmatpush1.msra.mxu0 0.0
    %2238 = vmatprep.subr.mxu0 0.0
    %2239 = vmatpush1.msra.mxu0 0.0
    %2240 = vmatprep.subr.mxu0 0.0
    %2241 = vmatpush1.msra.mxu0 0.0
    %2242 = vmatprep.subr.mxu0 0.0
    %2243 = vmatpush1.msra.mxu0 0.0
    %2244 = vmatprep.subr.mxu0 0.0
    %2245 = vmatpush1.msra.mxu0 0.0
    %2246 = vmatprep.subr.mxu0 0.0
    %2247 = vmatpush1.msra.mxu0 0.0
    %2248 = vmatprep.subr.mxu0 0.0
    %2249 = vmatpush1.msra.mxu0 0.0
    %2250 = vmatprep.subr.mxu0 0.0
    %2251 = vmatpush1.msra.mxu0 0.0
    %2252 = vmatprep.subr.mxu0 0.0
    %2253 = vmatpush1.msra.mxu0 0.0
    %2254 = vmatprep.subr.mxu0 0.0
    %2255 = vmatpush1.msra.mxu0 0.0
    %2256 = vmatprep.subr.mxu0 0.0
    %2257 = vmatpush1.msra.mxu0 0.0
    %2258 = vmatprep.subr.mxu0 0.0
    %2259 = vmatpush1.msra.mxu0 0.0
    %2260 = vmatprep.subr.mxu0 0.0
    %2261 = vmatpush1.msra.mxu0 0.0
    %2262 = vmatprep.subr.mxu0 0.0
    %2263 = vmatpush1.msra.mxu0 0.0
    %2264 = vmatprep.subr.mxu0 0.0
    %2265 = vmatpush1.msra.mxu0 0.0
    %2266 = vmatprep.subr.mxu0 0.0
    %2267 = vmatpush1.msra.mxu0 0.0
    %2268 = vmatprep.subr.mxu0 0.0
    %2269 = vmatpush1.msra.mxu0 0.0
    %2270 = vmatprep.subr.mxu0 0.0
    %2271 = vmatpush1.msra.mxu0 0.0
    %2272 = vmatprep.subr.mxu0 0.0
    %2273 = vmatpush1.msra.mxu0 0.0
    %2274 = vmatprep.subr.mxu0 0.0
    %2275 = vmatpush1.msra.mxu0 0.0
    %2276 = vmatprep.subr.mxu0 0.0
    %2277 = vmatpush1.msra.mxu0 0.0
    %2278 = vmatprep.subr.mxu0 0.0
    %2279 = vmatpush1.msra.mxu0 0.0
    %2280 = vmatprep.mubr.f32.mxu0 0.0
    %2281 = vmatmul.mubr.f32.gmra.mrb[0].mxu0 %v2214
    %v2282 = vpop.f32.mrb[0].mxu0
    %v2283 = vadd.f32 0.0, %v2282
    %v2284 = vpop.f32.mrb[0].mxu0
    %v2285 = vadd.f32 0.0, %v2284
    %2286 = vdwg.mxu0
    %v2287 = vadd.f32 %v2211, %v2283
    %v2288 = vadd.f32 %v2212, %v2285
    %v2289 = vxor.u32 %v2287, 2147483648
    %v2290 = vxor.u32 %v2288, 2147483648
    %v2291 = vmul.f32 %v2289, 1.442695
    %v2292 = vpow.pop %v2291
    %v2293 = vmul.f32 %v2290, 1.442695
    %v2294 = vpow.pop %v2293
    %v2295 = vadd.f32 %v2292, 1.0
    %v2296 = vadd.f32 %v2294, 1.0
    %v2297 = vrcp.pop %v2295
    %v2298 = vmul.f32 1.0, %v2297
    %v2299 = vrcp.pop %v2296
    %v2300 = vmul.f32 1.0, %v2299
    %v2301 = vtanh.pop %v2288
    %2303 = vrot.lane.b32.xlu0 %v2210, 64
    %v2304 = vpop.permute.xlu0 %2303
    %v2306 = vmul.f32 %v2298, %v2304
    %v2307 = vmul.f32 %v2298, %v2301
    %2309 = vrot.lane.b32.xlu0 %v2307, 64
    %v2310 = vpop.permute.xlu0 %2309
    %v2312 = vadd.f32 %v2306, %v2310
    %v2313 = vtanh.pop %v2312
    %v2314 = vmul.f32 %v2300, %v2313
    %2316 = vrot.lane.b32.xlu0 %v2314, 64
    %v2317 = vpop.permute.xlu0 %2316
    %v2319 = vsel %vm1139, %v2317, %v2205
    %2321 = vrot.lane.b32.xlu0 %v2312, 64
    %v2322 = vpop.permute.xlu0 %2321
    %v2324 = vsel %vm1139, %v2322, %v2210
    %v2325 = vsel %vm56, %v1977, %v1975
    %v2326 = vsel %vm56, %v1978, %v1976
    %v2328 = vsel %vm54, %v2319, 0
    %2330 = vmatprep.subr.mxu0 %v1737
    %2331 = vmatpush1.msra.mxu0 %v1736
    %2332 = vmatprep.subr.mxu0 %v1739
    %2333 = vmatpush1.msra.mxu0 %v1738
    %2334 = vmatprep.subr.mxu0 %v1741
    %2335 = vmatpush1.msra.mxu0 %v1740
    %2336 = vmatprep.subr.mxu0 %v1743
    %2337 = vmatpush1.msra.mxu0 %v1742
    %2338 = vmatprep.subr.mxu0 %v1745
    %2339 = vmatpush1.msra.mxu0 %v1744
    %2340 = vmatprep.subr.mxu0 %v1747
    %2341 = vmatpush1.msra.mxu0 %v1746
    %2342 = vmatprep.subr.mxu0 %v1749
    %2343 = vmatpush1.msra.mxu0 %v1748
    %2344 = vmatprep.subr.mxu0 %v1751
    %2345 = vmatpush1.msra.mxu0 %v1750
    %2346 = vmatprep.subr.mxu0 0.0
    %2347 = vmatpush1.msra.mxu0 0.0
    %2348 = vmatprep.subr.mxu0 0.0
    %2349 = vmatpush1.msra.mxu0 0.0
    %2350 = vmatprep.subr.mxu0 0.0
    %2351 = vmatpush1.msra.mxu0 0.0
    %2352 = vmatprep.subr.mxu0 0.0
    %2353 = vmatpush1.msra.mxu0 0.0
    %2354 = vmatprep.subr.mxu0 0.0
    %2355 = vmatpush1.msra.mxu0 0.0
    %2356 = vmatprep.subr.mxu0 0.0
    %2357 = vmatpush1.msra.mxu0 0.0
    %2358 = vmatprep.subr.mxu0 0.0
    %2359 = vmatpush1.msra.mxu0 0.0
    %2360 = vmatprep.subr.mxu0 0.0
    %2361 = vmatpush1.msra.mxu0 0.0
    %2362 = vmatprep.subr.mxu0 0.0
    %2363 = vmatpush1.msra.mxu0 0.0
    %2364 = vmatprep.subr.mxu0 0.0
    %2365 = vmatpush1.msra.mxu0 0.0
    %2366 = vmatprep.subr.mxu0 0.0
    %2367 = vmatpush1.msra.mxu0 0.0
    %2368 = vmatprep.subr.mxu0 0.0
    %2369 = vmatpush1.msra.mxu0 0.0
    %2370 = vmatprep.subr.mxu0 0.0
    %2371 = vmatpush1.msra.mxu0 0.0
    %2372 = vmatprep.subr.mxu0 0.0
    %2373 = vmatpush1.msra.mxu0 0.0
    %2374 = vmatprep.subr.mxu0 0.0
    %2375 = vmatpush1.msra.mxu0 0.0
    %2376 = vmatprep.subr.mxu0 0.0
    %2377 = vmatpush1.msra.mxu0 0.0
    %2378 = vmatprep.subr.mxu0 0.0
    %2379 = vmatpush1.msra.mxu0 0.0
    %2380 = vmatprep.subr.mxu0 0.0
    %2381 = vmatpush1.msra.mxu0 0.0
    %2382 = vmatprep.subr.mxu0 0.0
    %2383 = vmatpush1.msra.mxu0 0.0
    %2384 = vmatprep.subr.mxu0 0.0
    %2385 = vmatpush1.msra.mxu0 0.0
    %2386 = vmatprep.subr.mxu0 0.0
    %2387 = vmatpush1.msra.mxu0 0.0
    %2388 = vmatprep.subr.mxu0 0.0
    %2389 = vmatpush1.msra.mxu0 0.0
    %2390 = vmatprep.subr.mxu0 0.0
    %2391 = vmatpush1.msra.mxu0 0.0
    %2392 = vmatprep.subr.mxu0 0.0
    %2393 = vmatpush1.msra.mxu0 0.0
    %2394 = vmatprep.mubr.f32.mxu0 0.0
    %2395 = vmatmul.mubr.f32.gmra.mrb[0].mxu0 %v2328
    %v2396 = vpop.f32.mrb[0].mxu0
    %v2397 = vadd.f32 0.0, %v2396
    %v2398 = vpop.f32.mrb[0].mxu0
    %v2399 = vadd.f32 0.0, %v2398
    %2400 = vdwg.mxu0
    %v2401 = vadd.f32 %v2325, %v2397
    %v2402 = vadd.f32 %v2326, %v2399
    %v2403 = vxor.u32 %v2401, 2147483648
    %v2404 = vxor.u32 %v2402, 2147483648
    %v2405 = vmul.f32 %v2403, 1.442695
    %v2406 = vpow.pop %v2405
    %v2407 = vmul.f32 %v2404, 1.442695
    %v2408 = vpow.pop %v2407
    %v2409 = vadd.f32 %v2406, 1.0
    %v2410 = vadd.f32 %v2408, 1.0
    %v2411 = vrcp.pop %v2409
    %v2412 = vmul.f32 1.0, %v2411
    %v2413 = vrcp.pop %v2410
    %v2414 = vmul.f32 1.0, %v2413
    %v2415 = vtanh.pop %v2402
    %2417 = vrot.lane.b32.xlu0 %v2324, 64
    %v2418 = vpop.permute.xlu0 %2417
    %v2420 = vmul.f32 %v2412, %v2418
    %v2421 = vmul.f32 %v2412, %v2415
    %2423 = vrot.lane.b32.xlu0 %v2421, 64
    %v2424 = vpop.permute.xlu0 %2423
    %v2426 = vadd.f32 %v2420, %v2424
    %v2427 = vtanh.pop %v2426
    %v2428 = vmul.f32 %v2414, %v2427
    %2430 = vrot.lane.b32.xlu0 %v2428, 64
    %v2431 = vpop.permute.xlu0 %2430
    %v2433 = vsel %vm1277, %v2431, %v2319
    %2435 = vrot.lane.b32.xlu0 %v2426, 64
    %v2436 = vpop.permute.xlu0 %2435
    %v2438 = vsel %vm1277, %v2436, %v2324
    %v2439 = vsel %vm56, %v1859, %v1857
    %v2440 = vsel %vm56, %v1860, %v1858
    %v2442 = vsel %vm54, %v2433, 0
    %2444 = vmatprep.subr.mxu0 %v1737
    %2445 = vmatpush1.msra.mxu0 %v1736
    %2446 = vmatprep.subr.mxu0 %v1739
    %2447 = vmatpush1.msra.mxu0 %v1738
    %2448 = vmatprep.subr.mxu0 %v1741
    %2449 = vmatpush1.msra.mxu0 %v1740
    %2450 = vmatprep.subr.mxu0 %v1743
    %2451 = vmatpush1.msra.mxu0 %v1742
    %2452 = vmatprep.subr.mxu0 %v1745
    %2453 = vmatpush1.msra.mxu0 %v1744
    %2454 = vmatprep.subr.mxu0 %v1747
    %2455 = vmatpush1.msra.mxu0 %v1746
    %2456 = vmatprep.subr.mxu0 %v1749
    %2457 = vmatpush1.msra.mxu0 %v1748
    %2458 = vmatprep.subr.mxu0 %v1751
    %2459 = vmatpush1.msra.mxu0 %v1750
    %2460 = vmatprep.subr.mxu0 0.0
    %2461 = vmatpush1.msra.mxu0 0.0
    %2462 = vmatprep.subr.mxu0 0.0
    %2463 = vmatpush1.msra.mxu0 0.0
    %2464 = vmatprep.subr.mxu0 0.0
    %2465 = vmatpush1.msra.mxu0 0.0
    %2466 = vmatprep.subr.mxu0 0.0
    %2467 = vmatpush1.msra.mxu0 0.0
    %2468 = vmatprep.subr.mxu0 0.0
    %2469 = vmatpush1.msra.mxu0 0.0
    %2470 = vmatprep.subr.mxu0 0.0
    %2471 = vmatpush1.msra.mxu0 0.0
    %2472 = vmatprep.subr.mxu0 0.0
    %2473 = vmatpush1.msra.mxu0 0.0
    %2474 = vmatprep.subr.mxu0 0.0
    %2475 = vmatpush1.msra.mxu0 0.0
    %2476 = vmatprep.subr.mxu0 0.0
    %2477 = vmatpush1.msra.mxu0 0.0
    %2478 = vmatprep.subr.mxu0 0.0
    %2479 = vmatpush1.msra.mxu0 0.0
    %2480 = vmatprep.subr.mxu0 0.0
    %2481 = vmatpush1.msra.mxu0 0.0
    %2482 = vmatprep.subr.mxu0 0.0
    %2483 = vmatpush1.msra.mxu0 0.0
    %2484 = vmatprep.subr.mxu0 0.0
    %2485 = vmatpush1.msra.mxu0 0.0
    %2486 = vmatprep.subr.mxu0 0.0
    %2487 = vmatpush1.msra.mxu0 0.0
    %2488 = vmatprep.subr.mxu0 0.0
    %2489 = vmatpush1.msra.mxu0 0.0
    %2490 = vmatprep.subr.mxu0 0.0
    %2491 = vmatpush1.msra.mxu0 0.0
    %2492 = vmatprep.subr.mxu0 0.0
    %2493 = vmatpush1.msra.mxu0 0.0
    %2494 = vmatprep.subr.mxu0 0.0
    %2495 = vmatpush1.msra.mxu0 0.0
    %2496 = vmatprep.subr.mxu0 0.0
    %2497 = vmatpush1.msra.mxu0 0.0
    %2498 = vmatprep.subr.mxu0 0.0
    %2499 = vmatpush1.msra.mxu0 0.0
    %2500 = vmatprep.subr.mxu0 0.0
    %2501 = vmatpush1.msra.mxu0 0.0
    %2502 = vmatprep.subr.mxu0 0.0
    %2503 = vmatpush1.msra.mxu0 0.0
    %2504 = vmatprep.subr.mxu0 0.0
    %2505 = vmatpush1.msra.mxu0 0.0
    %2506 = vmatprep.subr.mxu0 0.0
    %2507 = vmatpush1.msra.mxu0 0.0
    %2508 = vmatprep.mubr.f32.mxu0 0.0
    %2509 = vmatmul.mubr.f32.gmra.mrb[0].mxu0 %v2442
    %v2510 = vpop.f32.mrb[0].mxu0
    %v2511 = vadd.f32 0.0, %v2510
    %v2512 = vpop.f32.mrb[0].mxu0
    %v2513 = vadd.f32 0.0, %v2512
    %2514 = vdwg.mxu0
    %v2515 = vadd.f32 %v2439, %v2511
    %v2516 = vadd.f32 %v2440, %v2513
    %v2517 = vxor.u32 %v2515, 2147483648
    %v2518 = vxor.u32 %v2516, 2147483648
    %v2519 = vmul.f32 %v2517, 1.442695
    %v2520 = vpow.pop %v2519
    %v2521 = vmul.f32 %v2518, 1.442695
    %v2522 = vpow.pop %v2521
    %v2523 = vadd.f32 %v2520, 1.0
    %v2524 = vadd.f32 %v2522, 1.0
    %v2525 = vrcp.pop %v2523
    %v2526 = vmul.f32 1.0, %v2525
    %v2527 = vrcp.pop %v2524
    %v2528 = vmul.f32 1.0, %v2527
    %v2529 = vtanh.pop %v2516
    %2531 = vrot.lane.b32.xlu0 %v2438, 64
    %v2532 = vpop.permute.xlu0 %2531
    %v2534 = vmul.f32 %v2526, %v2532
    %v2535 = vmul.f32 %v2526, %v2529
    %2537 = vrot.lane.b32.xlu0 %v2535, 64
    %v2538 = vpop.permute.xlu0 %2537
    %v2540 = vadd.f32 %v2534, %v2538
    %v2541 = vtanh.pop %v2540
    %v2542 = vmul.f32 %v2528, %v2541
    %2544 = vrot.lane.b32.xlu0 %v2542, 64
    %v2545 = vpop.permute.xlu0 %2544
    %v2547 = vsel %vm1415, %v2545, %v2433
    %2549 = vrot.lane.b32.xlu0 %v2540, 64
    %v2550 = vpop.permute.xlu0 %2549
    %v2552 = vsel %vm1415, %v2550, %v2438
    %v2553 = vsel %vm56, %v1732, %v1730
    %v2554 = vsel %vm56, %v1733, %v1731
    %v2556 = vsel %vm54, %v2547, 0
    %2558 = vmatprep.subr.mxu0 %v1737
    %2559 = vmatpush1.msra.mxu0 %v1736
    %2560 = vmatprep.subr.mxu0 %v1739
    %2561 = vmatpush1.msra.mxu0 %v1738
    %2562 = vmatprep.subr.mxu0 %v1741
    %2563 = vmatpush1.msra.mxu0 %v1740
    %2564 = vmatprep.subr.mxu0 %v1743
    %2565 = vmatpush1.msra.mxu0 %v1742
    %2566 = vmatprep.subr.mxu0 %v1745
    %2567 = vmatpush1.msra.mxu0 %v1744
    %2568 = vmatprep.subr.mxu0 %v1747
    %2569 = vmatpush1.msra.mxu0 %v1746
    %2570 = vmatprep.subr.mxu0 %v1749
    %2571 = vmatpush1.msra.mxu0 %v1748
    %2572 = vmatprep.subr.mxu0 %v1751
    %2573 = vmatpush1.msra.mxu0 %v1750
    %2574 = vmatprep.subr.mxu0 0.0
    %2575 = vmatpush1.msra.mxu0 0.0
    %2576 = vmatprep.subr.mxu0 0.0
    %2577 = vmatpush1.msra.mxu0 0.0
    %2578 = vmatprep.subr.mxu0 0.0
    %2579 = vmatpush1.msra.mxu0 0.0
    %2580 = vmatprep.subr.mxu0 0.0
    %2581 = vmatpush1.msra.mxu0 0.0
    %2582 = vmatprep.subr.mxu0 0.0
    %2583 = vmatpush1.msra.mxu0 0.0
    %2584 = vmatprep.subr.mxu0 0.0
    %2585 = vmatpush1.msra.mxu0 0.0
    %2586 = vmatprep.subr.mxu0 0.0
    %2587 = vmatpush1.msra.mxu0 0.0
    %2588 = vmatprep.subr.mxu0 0.0
    %2589 = vmatpush1.msra.mxu0 0.0
    %2590 = vmatprep.subr.mxu0 0.0
    %2591 = vmatpush1.msra.mxu0 0.0
    %2592 = vmatprep.subr.mxu0 0.0
    %2593 = vmatpush1.msra.mxu0 0.0
    %2594 = vmatprep.subr.mxu0 0.0
    %2595 = vmatpush1.msra.mxu0 0.0
    %2596 = vmatprep.subr.mxu0 0.0
    %2597 = vmatpush1.msra.mxu0 0.0
    %2598 = vmatprep.subr.mxu0 0.0
    %2599 = vmatpush1.msra.mxu0 0.0
    %2600 = vmatprep.subr.mxu0 0.0
    %2601 = vmatpush1.msra.mxu0 0.0
    %2602 = vmatprep.subr.mxu0 0.0
    %2603 = vmatpush1.msra.mxu0 0.0
    %2604 = vmatprep.subr.mxu0 0.0
    %2605 = vmatpush1.msra.mxu0 0.0
    %2606 = vmatprep.subr.mxu0 0.0
    %2607 = vmatpush1.msra.mxu0 0.0
    %2608 = vmatprep.subr.mxu0 0.0
    %2609 = vmatpush1.msra.mxu0 0.0
    %2610 = vmatprep.subr.mxu0 0.0
    %2611 = vmatpush1.msra.mxu0 0.0
    %2612 = vmatprep.subr.mxu0 0.0
    %2613 = vmatpush1.msra.mxu0 0.0
    %2614 = vmatprep.subr.mxu0 0.0
    %2615 = vmatpush1.msra.mxu0 0.0
    %2616 = vmatprep.subr.mxu0 0.0
    %2617 = vmatpush1.msra.mxu0 0.0
    %2618 = vmatprep.subr.mxu0 0.0
    %2619 = vmatpush1.msra.mxu0 0.0
    %2620 = vmatprep.subr.mxu0 0.0
    %2621 = vmatpush1.msra.mxu0 0.0
    %2622 = vmatprep.mubr.f32.mxu0 0.0
    %2623 = vmatmul.mubr.f32.gmra.mrb[0].mxu0 %v2556
    %v2624 = vpop.f32.mrb[0].mxu0
    %v2625 = vadd.f32 0.0, %v2624
    %v2626 = vpop.f32.mrb[0].mxu0
    %v2627 = vadd.f32 0.0, %v2626
    %2628 = vdwg.mxu0
    %v2629 = vadd.f32 %v2553, %v2625
    %v2630 = vadd.f32 %v2554, %v2627
    %v2631 = vxor.u32 %v2629, 2147483648
    %v2632 = vxor.u32 %v2630, 2147483648
    %v2633 = vmul.f32 %v2631, 1.442695
    %v2634 = vpow.pop %v2633
    %v2635 = vmul.f32 %v2632, 1.442695
    %v2636 = vpow.pop %v2635
    %v2637 = vadd.f32 %v2634, 1.0
    %v2638 = vadd.f32 %v2636, 1.0
    %v2639 = vrcp.pop %v2637
    %v2640 = vmul.f32 1.0, %v2639
    %v2641 = vrcp.pop %v2638
    %v2642 = vmul.f32 1.0, %v2641
    %v2643 = vtanh.pop %v2630
    %2645 = vrot.lane.b32.xlu0 %v2552, 64
    %v2646 = vpop.permute.xlu0 %2645
    %v2648 = vmul.f32 %v2640, %v2646
    %v2649 = vmul.f32 %v2640, %v2643
    %2651 = vrot.lane.b32.xlu0 %v2649, 64
    %v2652 = vpop.permute.xlu0 %2651
    %v2654 = vadd.f32 %v2648, %v2652
    %v2655 = vtanh.pop %v2654
    %v2656 = vmul.f32 %v2642, %v2655
    %2658 = vrot.lane.b32.xlu0 %v2656, 64
    %v2659 = vpop.permute.xlu0 %2658
    %v2661 = vsel %vm1553, %v2659, %v2547
    %v2662 = vlaneseq
    %v2663 = vshrl.u32 %v2662, 7
    %v2664 = vsub.s32 2, %v2663
    %v2665 = vrot.slane %v77, %v2664
    %v2666 = vmul.f32 %v2661, %v2665
    %v2667 = vsel %vm54, %v2666, 0.0
    %2668 = vadd.xlane.f32.xlu0 %v2667
    %v2669 = vpop.xlane.xlu0 %2668
    %v2670 = vadd.f32 %v2669, %v2665
    %2672 = vrot.lane.b32.xlu0 %v2670, 64
    %v2673 = vpop.permute.xlu0 %2672
    %vm2675 = vcmask 7168
    %2676 = vst.msk [vmem:[%s5] sm:$0xff] %vm2675, %v2673
    // Predicated region
    $region30: #{tpu_custom_call.1} parent=1 // pred_check
      _
    $region31: #{tpu_custom_call.1} parent=1 // pred_check_branch
      %2678 = sbr.rel (0) target = $region33
    $region32: #{tpu_custom_call.1} parent=1 // pred_region
      _
    $region33: #{tpu_custom_call.1} parent=1 // pred_fallthru
      _
    // Predicated region
    $region34: #{tpu_custom_call.1} parent=1 // pred_check
      _
    $region35: #{tpu_custom_call.1} parent=1 // pred_check_branch
      %2680 = sbr.rel (0) target = $region37
    $region36: #{tpu_custom_call.1} parent=1 // pred_region
      _
    $region37: #{tpu_custom_call.1} parent=1 // pred_fallthru
      _
    %2681 = vsyncpa [#allocation5], 1
    %2682 = vsyncpa [#allocation7], 1

</llo_original>
